<compile_context>
chip_gen: v5e
topology: v5e:2x2
jax: 0.10.0
libtpu: 0.0.40
codegen_flags: <defaults>
</compile_context>

<pallas_src>
import jax
import jax.numpy as jnp
from jax import lax
from jax.experimental import pallas as pl
from jax.experimental.pallas import tpu as pltpu

NEG_SLOPE = 0.2
BN_EPS = 1e-5


def _round_up(x, m):
    return (x + m - 1) // m * m


def _vmem_budgets():
    """Generation-aware VMEM limit / block budget / max M-tile."""
    cap = 64 * 1024 * 1024
    try:
        info = pltpu.get_tpu_info()
        cap = int(getattr(info, "vmem_capacity_bytes", cap))
    except Exception:
        pass
    if cap >= 128 * 1024 * 1024:        # v5e / v6e: 128 MiB physical VMEM
        return 96 << 20, 48 << 20, 1024
    return 48 << 20, 24 << 20, 512      # v7x-class: 64 MiB physical VMEM


VMEM_LIMIT, VMEM_BLOCK_BUDGET, TM_CAP = _vmem_budgets()


# --------------------------------------------------------------------------
# Pallas kernels
# --------------------------------------------------------------------------
def _conv_kernel_factory(fuse_act):
    """Matmul (bf16 in, f32 acc) + bias (+ fused LeakyReLU), bf16 store."""

    def kernel(x_ref, w_ref, b_ref, y_ref):
        y = jnp.dot(x_ref[...], w_ref[...], preferred_element_type=jnp.float32)
        y = y + b_ref[...]
        if fuse_act:
            y = jnp.where(y >= 0, y, NEG_SLOPE * y)
        y_ref[...] = y.astype(y_ref.dtype)

    return kernel


def _conv_stats_kernel_factory(m_actual, tm):
    """Matmul + bias, bf16 store, plus per-tile partial sum / sum-of-squares.

    Partial stats are computed from the f32 accumulator (before the bf16
    cast) and written to distinct per-tile output blocks so the grid axis
    stays fully parallel.  The padded-row mask is applied on the last tile
    only; the tiny cross-tile reduction happens in JAX afterwards.
    """

    def kernel(x_ref, w_ref, b_ref, y_ref, sum_ref, sq_ref):
        i = pl.program_id(0)
        last = pl.num_programs(0) - 1

        y = jnp.dot(x_ref[...], w_ref[...], preferred_element_type=jnp.float32)
        y = y + b_ref[...]
        y_ref[...] = y.astype(y_ref.dtype)

        @pl.when(i < last)
        def _():
            sum_ref[...] = jnp.sum(y, axis=0, keepdims=True)[None]
            sq_ref[...] = jnp.sum(y * y, axis=0, keepdims=True)[None]

        @pl.when(i == last)
        def _():
            row = i * tm + lax.broadcasted_iota(jnp.int32, y.shape, 0)
            ym = jnp.where(row < m_actual, y, 0.0)
            sum_ref[...] = jnp.sum(ym, axis=0, keepdims=True)[None]
            sq_ref[...] = jnp.sum(ym * ym, axis=0, keepdims=True)[None]

    return kernel


# --------------------------------------------------------------------------
# Layer wrappers
# --------------------------------------------------------------------------
def _extract_patches(x, ksize, stride):
    """im2col glue: (N,H,W,C) bf16 -> ((N*Ho*Wo), k*k*C), row order (dy,dx,c)."""
    N, H, W, C = x.shape
    pad = (ksize - 1) // 2
    xp = jnp.pad(x, ((0, 0), (pad, pad), (pad, pad), (0, 0)))
    Ho = (H + 2 * pad - ksize) // stride + 1
    Wo = (W + 2 * pad - ksize) // stride + 1
    cols = []
    for dy in range(ksize):
        for dx in range(ksize):
            cols.append(xp[:, dy:dy + stride * Ho:stride, dx:dx + stride * Wo:stride, :])
    patches = jnp.concatenate(cols, axis=-1)
    return patches.reshape(N * Ho * Wo, ksize * ksize * C), Ho, Wo


def _choose_tm(M, Kp, Cout):
    """Largest TM (multiple of 16, <=TM_CAP) whose blocks fit the budget.

    Weights (grid-invariant index_map) are budgeted single-buffered; x and
    the bf16 output are double-buffered.
    """
    fixed = Kp * Cout * 2 + 2 * Cout * 4            # bf16 weights (resident) + f32 bias
    per_row = 2 * Kp * 2 + 2 * Cout * 2             # bf16 x (2 bufs) + bf16 y (2 bufs)
    avail = max(VMEM_BLOCK_BUDGET - fixed, 16 * per_row)
    tm = min(TM_CAP, avail // per_row, _round_up(M, 16))
    tm = max(16, (tm // 16) * 16)
    return int(tm)


def _apply_pending_f32(x, pending):
    """Apply a deferred BN affine (+LeakyReLU) in f32; XLA fuses this into the
    consumer (next layer's im2col / head pooling)."""
    x = x.astype(jnp.float32)
    if pending is None:
        return x
    scale, shift, act = pending
    x = x * scale + shift
    if act:
        x = jnp.where(x >= 0, x, NEG_SLOPE * x)
    return x


def conv_layer(x, layer, pending):
    """Conv2d(+bias) [+ per-tile BN batch stats] [+ fused LeakyReLU].

    Returns (y_nhwc_bf16, pending_affine). For BN layers the normalization +
    activation is deferred to the next layer's input path (affine fusion).
    """
    x = _apply_pending_f32(x, pending).astype(jnp.bfloat16)
    k, stride, Cout = layer["k"], layer["stride"], layer["cout"]

    patches, Ho, Wo = _extract_patches(x, k, stride)
    N = x.shape[0]
    M, K = patches.shape
    Kp = _round_up(K, 16)                 # first conv: 27 -> 32 (zero taps)
    TM = _choose_tm(M, Kp, Cout)
    Mp = _round_up(M, TM)
    num_tiles = Mp // TM
    xpad = jnp.pad(patches, ((0, Mp - M), (0, Kp - K)))

    w2d = layer["w"].reshape(K, Cout).astype(jnp.bfloat16)
    w2d = jnp.pad(w2d, ((0, Kp - K), (0, 0)))
    b2d = layer["b"].reshape(1, Cout).astype(jnp.float32)

    cparams = pltpu.CompilerParams(dimension_semantics=("parallel",),
                                   vmem_limit_bytes=VMEM_LIMIT)

    if layer["bn"]:
        kernel = _conv_stats_kernel_factory(M, TM)
        y, psum, psq = pl.pallas_call(
            kernel,
            out_shape=(
                jax.ShapeDtypeStruct((Mp, Cout), jnp.bfloat16),
                jax.ShapeDtypeStruct((num_tiles, 1, Cout), jnp.float32),
                jax.ShapeDtypeStruct((num_tiles, 1, Cout), jnp.float32),
            ),
            grid_spec=pltpu.PrefetchScalarGridSpec(
                num_scalar_prefetch=0,
                grid=(num_tiles,),
                in_specs=[
                    pl.BlockSpec((TM, Kp), lambda i: (i, 0)),
                    pl.BlockSpec((Kp, Cout), lambda i: (0, 0)),
                    pl.BlockSpec((1, Cout), lambda i: (0, 0)),
                ],
                out_specs=[
                    pl.BlockSpec((TM, Cout), lambda i: (i, 0)),
                    pl.BlockSpec((1, 1, Cout), lambda i: (i, 0, 0)),
                    pl.BlockSpec((1, 1, Cout), lambda i: (i, 0, 0)),
                ],
            ),
            compiler_params=cparams,
        )(xpad, w2d, b2d)

        # Training-mode BatchNorm: biased batch stats over (N, H, W).
        csum = jnp.sum(psum, axis=(0, 1))
        csq = jnp.sum(psq, axis=(0, 1))
        mean = csum / M
        var = jnp.maximum(csq / M - mean * mean, 0.0)   # guard E[x^2]-E[x]^2
        scale = layer["gamma"] / jnp.sqrt(var + BN_EPS)
        shift = layer["beta"] - mean * scale
        pending_out = (scale, shift, layer["act"])
    else:
        kernel = _conv_kernel_factory(layer["act"])
        y = pl.pallas_call(
            kernel,
            out_shape=jax.ShapeDtypeStruct((Mp, Cout), jnp.bfloat16),
            grid_spec=pltpu.PrefetchScalarGridSpec(
                num_scalar_prefetch=0,
                grid=(num_tiles,),
                in_specs=[
                    pl.BlockSpec((TM, Kp), lambda i: (i, 0)),
                    pl.BlockSpec((Kp, Cout), lambda i: (0, 0)),
                    pl.BlockSpec((1, Cout), lambda i: (0, 0)),
                ],
                out_specs=pl.BlockSpec((TM, Cout), lambda i: (i, 0)),
            ),
            compiler_params=cparams,
        )(xpad, w2d, b2d)
        pending_out = None

    return y[:M].reshape(N, Ho, Wo, Cout), pending_out


def head_forward(x, head):
    """Fused classifier head: AdaptiveAvgPool2d(1) + 1x1 conv + LeakyReLU +
    1x1 conv, all in one Pallas kernel (grid over batch)."""
    N, H, W, C = x.shape
    HW = H * W
    HWp = _round_up(HW, 8)
    x3 = x.reshape(N, HW, C)
    if HWp != HW:
        x3 = jnp.pad(x3, ((0, 0), (0, HWp - HW), (0, 0)))
    inv_hw = 1.0 / float(HW)

    C2 = head["w1"].shape[1]
    w1 = head["w1"].astype(jnp.bfloat16)                  # (C, C2)
    b1 = head["b1"].reshape(1, C2).astype(jnp.float32)
    w2t = head["w2t"].astype(jnp.float32)                 # (1, C2)
    b2 = head["b2"].reshape(1, 1).astype(jnp.float32)

    def kernel(x_ref, w1_ref, b1_ref, w2_ref, b2_ref, o_ref):
        s = jnp.sum(x_ref[0], axis=0, keepdims=True) * inv_hw        # (1, C) f32
        mean8 = jnp.broadcast_to(s, (8, s.shape[1])).astype(jnp.bfloat16)
        h = jnp.dot(mean8, w1_ref[...],
                    preferred_element_type=jnp.float32) + b1_ref[...]
        h = jnp.where(h >= 0, h, NEG_SLOPE * h)
        out = jnp.sum(h * w2_ref[...], axis=-1, keepdims=True) + b2_ref[...]
        o_ref[...] = out[0:1, :][None]

    out = pl.pallas_call(
        kernel,
        out_shape=jax.ShapeDtypeStruct((N, 1, 1), jnp.float32),
        grid_spec=pltpu.PrefetchScalarGridSpec(
            num_scalar_prefetch=0,
            grid=(N,),
            in_specs=[
                pl.BlockSpec((1, HWp, C), lambda n: (n, 0, 0)),
                pl.BlockSpec((C, C2), lambda n: (0, 0)),
                pl.BlockSpec((1, C2), lambda n: (0, 0)),
                pl.BlockSpec((1, C2), lambda n: (0, 0)),
                pl.BlockSpec((1, 1), lambda n: (0, 0)),
            ],
            out_specs=pl.BlockSpec((1, 1, 1), lambda n: (n, 0, 0)),
        ),
        compiler_params=pltpu.CompilerParams(
            dimension_semantics=("parallel",),
            vmem_limit_bytes=VMEM_LIMIT),
    )(x3, w1, b1, w2t, b2)
    return out.reshape(N, 1)


# --------------------------------------------------------------------------
# Discriminator assembly (parameter init + forward)
# --------------------------------------------------------------------------
def init_discriminator(key, base_channels=64, n_blocks=3):
    def conv_spec(cin, cout, k, stride, bn, act):
        return dict(cin=cin, cout=cout, k=k, stride=stride, bn=bn, act=act)

    c = base_channels
    specs = [
        conv_spec(3, c, 3, 1, False, True),        # Conv + LeakyReLU
        conv_spec(c, c, 3, 2, True, True),         # Conv s2 + BN + LeakyReLU
    ]
    cur = c
    for _ in range(n_blocks):
        specs.append(conv_spec(cur, 2 * cur, 3, 1, True, True))
        specs.append(conv_spec(2 * cur, 2 * cur, 3, 2, True, True))
        cur *= 2

    convs = []
    for s in specs:
        key, kw, kb = jax.random.split(key, 3)
        fan_in = s["cin"] * s["k"] * s["k"]
        bound = 1.0 / (fan_in ** 0.5)
        layer = dict(s)
        # weights stored HWIO = (KH, KW, Cin, Cout)
        layer["w"] = jax.random.uniform(kw, (s["k"], s["k"], s["cin"], s["cout"]),
                                        jnp.float32, -bound, bound)
        layer["b"] = jax.random.uniform(kb, (s["cout"],), jnp.float32, -bound, bound)
        if s["bn"]:
            layer["gamma"] = jnp.ones((s["cout"],), jnp.float32)
            layer["beta"] = jnp.zeros((s["cout"],), jnp.float32)
        convs.append(layer)

    # Head: AdaptiveAvgPool2d(1) + Conv1x1(cur->2cur) + LeakyReLU + Conv1x1(2cur->1)
    key, k1, kb1, k2, kb2 = jax.random.split(key, 5)
    bnd1 = 1.0 / (cur ** 0.5)
    bnd2 = 1.0 / ((2 * cur) ** 0.5)
    head = dict(
        w1=jax.random.uniform(k1, (cur, 2 * cur), jnp.float32, -bnd1, bnd1),
        b1=jax.random.uniform(kb1, (2 * cur,), jnp.float32, -bnd1, bnd1),
        w2t=jax.random.uniform(k2, (1, 2 * cur), jnp.float32, -bnd2, bnd2),
        b2=jax.random.uniform(kb2, (1, 1), jnp.float32, -bnd2, bnd2),
    )
    return dict(convs=convs, head=head)


def discriminator_forward(params, x_nchw):
    x = jnp.transpose(x_nchw, (0, 2, 3, 1)).astype(jnp.float32)  # NCHW -> NHWC
    pending = None
    for layer in params["convs"]:
        x, pending = conv_layer(x, layer, pending)
    x = _apply_pending_f32(x, pending)       # last BN affine fused into head input
    return head_forward(x, params["head"])   # (N, 1) == Flatten


# --------------------------------------------------------------------------
# Pure-JAX reference (mirrors the kernel numerics: bf16 MXU inputs, f32
# accumulation, bf16 activation storage, deferred BN affine)
# --------------------------------------------------------------------------
def reference_forward(params, x_nchw):
    x = jnp.transpose(x_nchw, (0, 2, 3, 1)).astype(jnp.float32)
    pending = None
    for layer in params["convs"]:
        if pending is not None:
            s, t, act = pending
            x = x.astype(jnp.float32) * s + t
            if act:
                x = jnp.where(x >= 0, x, NEG_SLOPE * x)
        k, stride = layer["k"], layer["stride"]
        pad = (k - 1) // 2
        y = lax.conv_general_dilated(
            x.astype(jnp.bfloat16), layer["w"].astype(jnp.bfloat16),
            (stride, stride), [(pad, pad), (pad, pad)],
            dimension_numbers=("NHWC", "HWIO", "NHWC"),
            preferred_element_type=jnp.float32) + layer["b"]
        if layer["bn"]:
            mean = jnp.mean(y, axis=(0, 1, 2))
            var = jnp.mean(jnp.square(y - mean), axis=(0, 1, 2))
            scale = layer["gamma"] / jnp.sqrt(var + BN_EPS)
            shift = layer["beta"] - mean * scale
            pending = (scale, shift, layer["act"])
        else:
            if layer["act"]:
                y = jnp.where(y >= 0, y, NEG_SLOPE * y)
            pending = None
        x = y.astype(jnp.bfloat16)
    x = x.astype(jnp.float32)
    if pending is not None:
        s, t, act = pending
        x = x * s + t
        if act:
            x = jnp.where(x >= 0, x, NEG_SLOPE * x)
    head = params["head"]
    mean = jnp.mean(x, axis=(1, 2))                                     # (N, C)
    h = jnp.dot(mean.astype(jnp.bfloat16), head["w1"].astype(jnp.bfloat16),
                preferred_element_type=jnp.float32) + head["b1"]
    h = jnp.where(h >= 0, h, NEG_SLOPE * h)
    out = jnp.sum(h * head["w2t"], axis=-1, keepdims=True) + head["b2"]
    return out


# --------------------------------------------------------------------------
if __name__ == "__main__":
    key = jax.random.PRNGKey(0)
    pkey, xkey = jax.random.split(key)

    # Small deterministic setup: base_channels=16, n_blocks=3, input 2x3x16x16.
    params = init_discriminator(pkey, base_channels=16, n_blocks=3)
    x = jax.random.normal(xkey, (2, 3, 16, 16), jnp.float32)  # NCHW like PyTorch

    fwd = jax.jit(lambda inp: discriminator_forward(params, inp))
    out = jax.block_until_ready(fwd(x))
    assert out.shape == (2, 1), out.shape

    ref = jax.block_until_ready(reference_forward(params, x))
    assert jnp.allclose(out, ref, rtol=1e-2, atol=1e-2), (out, ref)

    print("KERNEL_OK")
</pallas_src>

<mosaic_0001>
module attributes {stable_mosaic.version = 11 : i64} {
  func.func @kernel(%arg0: i32, %arg1: memref<512x32xbf16, #tpu.memory_space<vmem>>, %arg2: memref<32x16xbf16, #tpu.memory_space<vmem>>, %arg3: memref<1x16xf32, #tpu.memory_space<vmem>>, %arg4: memref<512x16xbf16, #tpu.memory_space<vmem>>) attributes {dimension_semantics = [#tpu.dimension_semantics<parallel>], iteration_bounds = array<i64: 1>, scalar_prefetch = 0 : i64, scratch_operands = 0 : i64, tpu.core_type = #tpu.core_type<tc>, window_params = [{transform_indices = @transform_0, window_bounds = array<i64: 512, 32>}, {pipeline_mode = #tpu.pipeline_mode<synchronous>, transform_indices = @transform_1, window_bounds = array<i64: 32, 16>}, {pipeline_mode = #tpu.pipeline_mode<synchronous>, transform_indices = @transform_2, window_bounds = array<i64: 1, 16>}, {transform_indices = @transform_3, window_bounds = array<i64: 512, 16>}]} {
    %c0 = arith.constant 0 : index
    %c0_0 = arith.constant 0 : index
    %0 = vector.load %arg1[%c0, %c0_0] : memref<512x32xbf16, #tpu.memory_space<vmem>>, vector<512x32xbf16>
    %c0_1 = arith.constant 0 : index
    %c0_2 = arith.constant 0 : index
    %1 = vector.load %arg2[%c0_1, %c0_2] : memref<32x16xbf16, #tpu.memory_space<vmem>>, vector<32x16xbf16>
    %cst = arith.constant dense<0.000000e+00> : vector<512x16xf32>
    %2 = tpu.matmul %0, %1, %cst {dimension_numbers = #tpu.dot_dimension_numbers<[1], [0], [0], [1], [0, 0, 1, 1], [], []>} : vector<512x32xbf16>, vector<32x16xbf16>, vector<512x16xf32> -> vector<512x16xf32>
    %c0_3 = arith.constant 0 : index
    %c0_4 = arith.constant 0 : index
    %3 = vector.load %arg3[%c0_3, %c0_4] : memref<1x16xf32, #tpu.memory_space<vmem>>, vector<1x16xf32>
    %4 = vector.broadcast %3 : vector<1x16xf32> to vector<512x16xf32>
    %5 = arith.addf %2, %4 : vector<512x16xf32>
    %cst_5 = arith.constant 0.000000e+00 : f32
    %6 = vector.broadcast %cst_5 : f32 to vector<512x16xf32>
    %7 = arith.cmpf oge, %5, %6 : vector<512x16xf32>
    %cst_6 = arith.constant 2.000000e-01 : f32
    %8 = vector.broadcast %cst_6 : f32 to vector<512x16xf32>
    %9 = arith.mulf %8, %5 : vector<512x16xf32>
    %10 = arith.select %7, %5, %9 : vector<512x16xi1>, vector<512x16xf32>
    %11 = arith.truncf %10 : vector<512x16xf32> to vector<512x16xbf16>
    %c0_7 = arith.constant 0 : index
    %c0_8 = arith.constant 0 : index
    %12 = vector.load %arg4[%c0_7, %c0_8] : memref<512x16xbf16, #tpu.memory_space<vmem>>, vector<512x16xbf16>
    tpu.vector_store %arg4[%c0_7, %c0_8], %11 {strides = array<i32>} : memref<512x16xbf16, #tpu.memory_space<vmem>>, vector<512x16xbf16>,
    return
  }
  func.func @transform_0(%arg0: i32) -> (i32, i32) {
    %c0_i32 = arith.constant 0 : i32
    %c0_i32_0 = arith.constant 0 : i32
    return %arg0, %c0_i32 : i32, i32
  }
  func.func @transform_1(%arg0: i32) -> (i32, i32) {
    %c0_i32 = arith.constant 0 : i32
    %c0_i32_0 = arith.constant 0 : i32
    %c0_i32_1 = arith.constant 0 : i32
    return %c0_i32, %c0_i32_0 : i32, i32
  }
  func.func @transform_2(%arg0: i32) -> (i32, i32) {
    %c0_i32 = arith.constant 0 : i32
    %c0_i32_0 = arith.constant 0 : i32
    %c0_i32_1 = arith.constant 0 : i32
    return %c0_i32, %c0_i32_0 : i32, i32
  }
  func.func @transform_3(%arg0: i32) -> (i32, i32) {
    %c0_i32 = arith.constant 0 : i32
    %c0_i32_0 = arith.constant 0 : i32
    return %arg0, %c0_i32 : i32, i32
  }
}

module attributes {stable_mosaic.version = 11 : i64} {
  func.func @kernel(%arg0: i32, %arg1: memref<128x144xbf16, #tpu.memory_space<vmem>>, %arg2: memref<144x16xbf16, #tpu.memory_space<vmem>>, %arg3: memref<1x16xf32, #tpu.memory_space<vmem>>, %arg4: memref<128x16xbf16, #tpu.memory_space<vmem>>, %arg5: memref<1x1x16xf32, #tpu.memory_space<vmem>>, %arg6: memref<1x1x16xf32, #tpu.memory_space<vmem>>) attributes {dimension_semantics = [#tpu.dimension_semantics<parallel>], iteration_bounds = array<i64: 1>, scalar_prefetch = 0 : i64, scratch_operands = 0 : i64, tpu.core_type = #tpu.core_type<tc>, window_params = [{transform_indices = @transform_0, window_bounds = array<i64: 128, 144>}, {pipeline_mode = #tpu.pipeline_mode<synchronous>, transform_indices = @transform_1, window_bounds = array<i64: 144, 16>}, {pipeline_mode = #tpu.pipeline_mode<synchronous>, transform_indices = @transform_2, window_bounds = array<i64: 1, 16>}, {transform_indices = @transform_3, window_bounds = array<i64: 128, 16>}, {transform_indices = @transform_4, window_bounds = array<i64: 1, 1, 16>}, {transform_indices = @transform_5, window_bounds = array<i64: 1, 1, 16>}]} {
    %c0 = arith.constant 0 : index
    %c0_0 = arith.constant 0 : index
    %0 = vector.load %arg1[%c0, %c0_0] : memref<128x144xbf16, #tpu.memory_space<vmem>>, vector<128x144xbf16>
    %c0_1 = arith.constant 0 : index
    %c0_2 = arith.constant 0 : index
    %1 = vector.load %arg2[%c0_1, %c0_2] : memref<144x16xbf16, #tpu.memory_space<vmem>>, vector<144x16xbf16>
    %cst = arith.constant dense<0.000000e+00> : vector<128x16xf32>
    %2 = tpu.matmul %0, %1, %cst {dimension_numbers = #tpu.dot_dimension_numbers<[1], [0], [0], [1], [0, 0, 1, 1], [], []>} : vector<128x144xbf16>, vector<144x16xbf16>, vector<128x16xf32> -> vector<128x16xf32>
    %c0_3 = arith.constant 0 : index
    %c0_4 = arith.constant 0 : index
    %3 = vector.load %arg3[%c0_3, %c0_4] : memref<1x16xf32, #tpu.memory_space<vmem>>, vector<1x16xf32>
    %4 = vector.broadcast %3 : vector<1x16xf32> to vector<128x16xf32>
    %5 = arith.addf %2, %4 : vector<128x16xf32>
    %6 = arith.truncf %5 : vector<128x16xf32> to vector<128x16xbf16>
    %c0_5 = arith.constant 0 : index
    %c0_6 = arith.constant 0 : index
    %7 = vector.load %arg4[%c0_5, %c0_6] : memref<128x16xbf16, #tpu.memory_space<vmem>>, vector<128x16xbf16>
    tpu.vector_store %arg4[%c0_5, %c0_6], %6 {strides = array<i32>} : memref<128x16xbf16, #tpu.memory_space<vmem>>, vector<128x16xbf16>,
    %c0_i32 = arith.constant 0 : i32
    %8 = arith.cmpi slt, %arg0, %c0_i32 : i32
    %9 = arith.extui %8 : i1 to i32
    %c0_i32_7 = arith.constant 0 : i32
    %10 = arith.cmpi ne, %9, %c0_i32_7 : i32
    scf.if %10 {
      %cst_10 = arith.constant dense<0.000000e+00> : vector<16xf32>
      %14 = vector.multi_reduction <add>, %5, %cst_10 [0] : vector<128x16xf32> to vector<16xf32>
      %15 = vector.shape_cast %14 : vector<16xf32> to vector<1x16xf32>
      %16 = vector.shape_cast %15 : vector<1x16xf32> to vector<1x1x16xf32>
      %c0_11 = arith.constant 0 : index
      %c0_12 = arith.constant 0 : index
      %c0_13 = arith.constant 0 : index
      %17 = vector.load %arg5[%c0_11, %c0_12, %c0_13] : memref<1x1x16xf32, #tpu.memory_space<vmem>>, vector<1x1x16xf32>
      tpu.vector_store %arg5[%c0_11, %c0_12, %c0_13], %16 {strides = array<i32>} : memref<1x1x16xf32, #tpu.memory_space<vmem>>, vector<1x1x16xf32>,
      %18 = arith.mulf %5, %5 : vector<128x16xf32>
      %cst_14 = arith.constant dense<0.000000e+00> : vector<16xf32>
      %19 = vector.multi_reduction <add>, %18, %cst_14 [0] : vector<128x16xf32> to vector<16xf32>
      %20 = vector.shape_cast %19 : vector<16xf32> to vector<1x16xf32>
      %21 = vector.shape_cast %20 : vector<1x16xf32> to vector<1x1x16xf32>
      %c0_15 = arith.constant 0 : index
      %c0_16 = arith.constant 0 : index
      %c0_17 = arith.constant 0 : index
      %22 = vector.load %arg6[%c0_15, %c0_16, %c0_17] : memref<1x1x16xf32, #tpu.memory_space<vmem>>, vector<1x1x16xf32>
      tpu.vector_store %arg6[%c0_15, %c0_16, %c0_17], %21 {strides = array<i32>} : memref<1x1x16xf32, #tpu.memory_space<vmem>>, vector<1x1x16xf32>,
    } else {
    }
    %c0_i32_8 = arith.constant 0 : i32
    %11 = arith.cmpi eq, %arg0, %c0_i32_8 : i32
    %12 = arith.extui %11 : i1 to i32
    %c0_i32_9 = arith.constant 0 : i32
    %13 = arith.cmpi ne, %12, %c0_i32_9 : i32
    scf.if %13 {
      %c128_i32 = arith.constant 128 : i32
      %14 = arith.muli %arg0, %c128_i32 : i32
      %15 = tpu.iota {dimensions = array<i32: 0>} : vector<128x16xi32>
      %16 = vector.broadcast %14 : i32 to vector<128x16xi32>
      %17 = arith.addi %16, %15 : vector<128x16xi32>
      %c128_i32_10 = arith.constant 128 : i32
      %18 = vector.broadcast %c128_i32_10 : i32 to vector<128x16xi32>
      %19 = arith.cmpi slt, %17, %18 : vector<128x16xi32>
      %cst_11 = arith.constant 0.000000e+00 : f32
      %20 = vector.broadcast %cst_11 : f32 to vector<128x16xf32>
      %21 = arith.select %19, %5, %20 : vector<128x16xi1>, vector<128x16xf32>
      %cst_12 = arith.constant dense<0.000000e+00> : vector<16xf32>
      %22 = vector.multi_reduction <add>, %21, %cst_12 [0] : vector<128x16xf32> to vector<16xf32>
      %23 = vector.shape_cast %22 : vector<16xf32> to vector<1x16xf32>
      %24 = vector.shape_cast %23 : vector<1x16xf32> to vector<1x1x16xf32>
      %c0_13 = arith.constant 0 : index
      %c0_14 = arith.constant 0 : index
      %c0_15 = arith.constant 0 : index
      %25 = vector.load %arg5[%c0_13, %c0_14, %c0_15] : memref<1x1x16xf32, #tpu.memory_space<vmem>>, vector<1x1x16xf32>
      tpu.vector_store %arg5[%c0_13, %c0_14, %c0_15], %24 {strides = array<i32>} : memref<1x1x16xf32, #tpu.memory_space<vmem>>, vector<1x1x16xf32>,
      %26 = arith.mulf %21, %21 : vector<128x16xf32>
      %cst_16 = arith.constant dense<0.000000e+00> : vector<16xf32>
      %27 = vector.multi_reduction <add>, %26, %cst_16 [0] : vector<128x16xf32> to vector<16xf32>
      %28 = vector.shape_cast %27 : vector<16xf32> to vector<1x16xf32>
      %29 = vector.shape_cast %28 : vector<1x16xf32> to vector<1x1x16xf32>
      %c0_17 = arith.constant 0 : index
      %c0_18 = arith.constant 0 : index
      %c0_19 = arith.constant 0 : index
      %30 = vector.load %arg6[%c0_17, %c0_18, %c0_19] : memref<1x1x16xf32, #tpu.memory_space<vmem>>, vector<1x1x16xf32>
      tpu.vector_store %arg6[%c0_17, %c0_18, %c0_19], %29 {strides = array<i32>} : memref<1x1x16xf32, #tpu.memory_space<vmem>>, vector<1x1x16xf32>,
    } else {
    }
    return
  }
  func.func @transform_0(%arg0: i32) -> (i32, i32) {
    %c0_i32 = arith.constant 0 : i32
    %c0_i32_0 = arith.constant 0 : i32
    return %arg0, %c0_i32 : i32, i32
  }
  func.func @transform_1(%arg0: i32) -> (i32, i32) {
    %c0_i32 = arith.constant 0 : i32
    %c0_i32_0 = arith.constant 0 : i32
    %c0_i32_1 = arith.constant 0 : i32
    return %c0_i32, %c0_i32_0 : i32, i32
  }
  func.func @transform_2(%arg0: i32) -> (i32, i32) {
    %c0_i32 = arith.constant 0 : i32
    %c0_i32_0 = arith.constant 0 : i32
    %c0_i32_1 = arith.constant 0 : i32
    return %c0_i32, %c0_i32_0 : i32, i32
  }
  func.func @transform_3(%arg0: i32) -> (i32, i32) {
    %c0_i32 = arith.constant 0 : i32
    %c0_i32_0 = arith.constant 0 : i32
    return %arg0, %c0_i32 : i32, i32
  }
  func.func @transform_4(%arg0: i32) -> (i32, i32, i32) {
    %c0_i32 = arith.constant 0 : i32
    %c0_i32_0 = arith.constant 0 : i32
    %c0_i32_1 = arith.constant 0 : i32
    return %arg0, %c0_i32, %c0_i32_0 : i32, i32, i32
  }
  func.func @transform_5(%arg0: i32) -> (i32, i32, i32) {
    %c0_i32 = arith.constant 0 : i32
    %c0_i32_0 = arith.constant 0 : i32
    %c0_i32_1 = arith.constant 0 : i32
    return %arg0, %c0_i32, %c0_i32_0 : i32, i32, i32
  }
}

module attributes {stable_mosaic.version = 11 : i64} {
  func.func @kernel(%arg0: i32, %arg1: memref<128x144xbf16, #tpu.memory_space<vmem>>, %arg2: memref<144x32xbf16, #tpu.memory_space<vmem>>, %arg3: memref<1x32xf32, #tpu.memory_space<vmem>>, %arg4: memref<128x32xbf16, #tpu.memory_space<vmem>>, %arg5: memref<1x1x32xf32, #tpu.memory_space<vmem>>, %arg6: memref<1x1x32xf32, #tpu.memory_space<vmem>>) attributes {dimension_semantics = [#tpu.dimension_semantics<parallel>], iteration_bounds = array<i64: 1>, scalar_prefetch = 0 : i64, scratch_operands = 0 : i64, tpu.core_type = #tpu.core_type<tc>, window_params = [{transform_indices = @transform_0, window_bounds = array<i64: 128, 144>}, {pipeline_mode = #tpu.pipeline_mode<synchronous>, transform_indices = @transform_1, window_bounds = array<i64: 144, 32>}, {pipeline_mode = #tpu.pipeline_mode<synchronous>, transform_indices = @transform_2, window_bounds = array<i64: 1, 32>}, {transform_indices = @transform_3, window_bounds = array<i64: 128, 32>}, {transform_indices = @transform_4, window_bounds = array<i64: 1, 1, 32>}, {transform_indices = @transform_5, window_bounds = array<i64: 1, 1, 32>}]} {
    %c0 = arith.constant 0 : index
    %c0_0 = arith.constant 0 : index
    %0 = vector.load %arg1[%c0, %c0_0] : memref<128x144xbf16, #tpu.memory_space<vmem>>, vector<128x144xbf16>
    %c0_1 = arith.constant 0 : index
    %c0_2 = arith.constant 0 : index
    %1 = vector.load %arg2[%c0_1, %c0_2] : memref<144x32xbf16, #tpu.memory_space<vmem>>, vector<144x32xbf16>
    %cst = arith.constant dense<0.000000e+00> : vector<128x32xf32>
    %2 = tpu.matmul %0, %1, %cst {dimension_numbers = #tpu.dot_dimension_numbers<[1], [0], [0], [1], [0, 0, 1, 1], [], []>} : vector<128x144xbf16>, vector<144x32xbf16>, vector<128x32xf32> -> vector<128x32xf32>
    %c0_3 = arith.constant 0 : index
    %c0_4 = arith.constant 0 : index
    %3 = vector.load %arg3[%c0_3, %c0_4] : memref<1x32xf32, #tpu.memory_space<vmem>>, vector<1x32xf32>
    %4 = vector.broadcast %3 : vector<1x32xf32> to vector<128x32xf32>
    %5 = arith.addf %2, %4 : vector<128x32xf32>
    %6 = arith.truncf %5 : vector<128x32xf32> to vector<128x32xbf16>
    %c0_5 = arith.constant 0 : index
    %c0_6 = arith.constant 0 : index
    %7 = vector.load %arg4[%c0_5, %c0_6] : memref<128x32xbf16, #tpu.memory_space<vmem>>, vector<128x32xbf16>
    tpu.vector_store %arg4[%c0_5, %c0_6], %6 {strides = array<i32>} : memref<128x32xbf16, #tpu.memory_space<vmem>>, vector<128x32xbf16>,
    %c0_i32 = arith.constant 0 : i32
    %8 = arith.cmpi slt, %arg0, %c0_i32 : i32
    %9 = arith.extui %8 : i1 to i32
    %c0_i32_7 = arith.constant 0 : i32
    %10 = arith.cmpi ne, %9, %c0_i32_7 : i32
    scf.if %10 {
      %cst_10 = arith.constant dense<0.000000e+00> : vector<32xf32>
      %14 = vector.multi_reduction <add>, %5, %cst_10 [0] : vector<128x32xf32> to vector<32xf32>
      %15 = vector.shape_cast %14 : vector<32xf32> to vector<1x32xf32>
      %16 = vector.shape_cast %15 : vector<1x32xf32> to vector<1x1x32xf32>
      %c0_11 = arith.constant 0 : index
      %c0_12 = arith.constant 0 : index
      %c0_13 = arith.constant 0 : index
      %17 = vector.load %arg5[%c0_11, %c0_12, %c0_13] : memref<1x1x32xf32, #tpu.memory_space<vmem>>, vector<1x1x32xf32>
      tpu.vector_store %arg5[%c0_11, %c0_12, %c0_13], %16 {strides = array<i32>} : memref<1x1x32xf32, #tpu.memory_space<vmem>>, vector<1x1x32xf32>,
      %18 = arith.mulf %5, %5 : vector<128x32xf32>
      %cst_14 = arith.constant dense<0.000000e+00> : vector<32xf32>
      %19 = vector.multi_reduction <add>, %18, %cst_14 [0] : vector<128x32xf32> to vector<32xf32>
      %20 = vector.shape_cast %19 : vector<32xf32> to vector<1x32xf32>
      %21 = vector.shape_cast %20 : vector<1x32xf32> to vector<1x1x32xf32>
      %c0_15 = arith.constant 0 : index
      %c0_16 = arith.constant 0 : index
      %c0_17 = arith.constant 0 : index
      %22 = vector.load %arg6[%c0_15, %c0_16, %c0_17] : memref<1x1x32xf32, #tpu.memory_space<vmem>>, vector<1x1x32xf32>
      tpu.vector_store %arg6[%c0_15, %c0_16, %c0_17], %21 {strides = array<i32>} : memref<1x1x32xf32, #tpu.memory_space<vmem>>, vector<1x1x32xf32>,
    } else {
    }
    %c0_i32_8 = arith.constant 0 : i32
    %11 = arith.cmpi eq, %arg0, %c0_i32_8 : i32
    %12 = arith.extui %11 : i1 to i32
    %c0_i32_9 = arith.constant 0 : i32
    %13 = arith.cmpi ne, %12, %c0_i32_9 : i32
    scf.if %13 {
      %c128_i32 = arith.constant 128 : i32
      %14 = arith.muli %arg0, %c128_i32 : i32
      %15 = tpu.iota {dimensions = array<i32: 0>} : vector<128x32xi32>
      %16 = vector.broadcast %14 : i32 to vector<128x32xi32>
      %17 = arith.addi %16, %15 : vector<128x32xi32>
      %c128_i32_10 = arith.constant 128 : i32
      %18 = vector.broadcast %c128_i32_10 : i32 to vector<128x32xi32>
      %19 = arith.cmpi slt, %17, %18 : vector<128x32xi32>
      %cst_11 = arith.constant 0.000000e+00 : f32
      %20 = vector.broadcast %cst_11 : f32 to vector<128x32xf32>
      %21 = arith.select %19, %5, %20 : vector<128x32xi1>, vector<128x32xf32>
      %cst_12 = arith.constant dense<0.000000e+00> : vector<32xf32>
      %22 = vector.multi_reduction <add>, %21, %cst_12 [0] : vector<128x32xf32> to vector<32xf32>
      %23 = vector.shape_cast %22 : vector<32xf32> to vector<1x32xf32>
      %24 = vector.shape_cast %23 : vector<1x32xf32> to vector<1x1x32xf32>
      %c0_13 = arith.constant 0 : index
      %c0_14 = arith.constant 0 : index
      %c0_15 = arith.constant 0 : index
      %25 = vector.load %arg5[%c0_13, %c0_14, %c0_15] : memref<1x1x32xf32, #tpu.memory_space<vmem>>, vector<1x1x32xf32>
      tpu.vector_store %arg5[%c0_13, %c0_14, %c0_15], %24 {strides = array<i32>} : memref<1x1x32xf32, #tpu.memory_space<vmem>>, vector<1x1x32xf32>,
      %26 = arith.mulf %21, %21 : vector<128x32xf32>
      %cst_16 = arith.constant dense<0.000000e+00> : vector<32xf32>
      %27 = vector.multi_reduction <add>, %26, %cst_16 [0] : vector<128x32xf32> to vector<32xf32>
      %28 = vector.shape_cast %27 : vector<32xf32> to vector<1x32xf32>
      %29 = vector.shape_cast %28 : vector<1x32xf32> to vector<1x1x32xf32>
      %c0_17 = arith.constant 0 : index
      %c0_18 = arith.constant 0 : index
      %c0_19 = arith.constant 0 : index
      %30 = vector.load %arg6[%c0_17, %c0_18, %c0_19] : memref<1x1x32xf32, #tpu.memory_space<vmem>>, vector<1x1x32xf32>
      tpu.vector_store %arg6[%c0_17, %c0_18, %c0_19], %29 {strides = array<i32>} : memref<1x1x32xf32, #tpu.memory_space<vmem>>, vector<1x1x32xf32>,
    } else {
    }
    return
  }
  func.func @transform_0(%arg0: i32) -> (i32, i32) {
    %c0_i32 = arith.constant 0 : i32
    %c0_i32_0 = arith.constant 0 : i32
    return %arg0, %c0_i32 : i32, i32
  }
  func.func @transform_1(%arg0: i32) -> (i32, i32) {
    %c0_i32 = arith.constant 0 : i32
    %c0_i32_0 = arith.constant 0 : i32
    %c0_i32_1 = arith.constant 0 : i32
    return %c0_i32, %c0_i32_0 : i32, i32
  }
  func.func @transform_2(%arg0: i32) -> (i32, i32) {
    %c0_i32 = arith.constant 0 : i32
    %c0_i32_0 = arith.constant 0 : i32
    %c0_i32_1 = arith.constant 0 : i32
    return %c0_i32, %c0_i32_0 : i32, i32
  }
  func.func @transform_3(%arg0: i32) -> (i32, i32) {
    %c0_i32 = arith.constant 0 : i32
    %c0_i32_0 = arith.constant 0 : i32
    return %arg0, %c0_i32 : i32, i32
  }
  func.func @transform_4(%arg0: i32) -> (i32, i32, i32) {
    %c0_i32 = arith.constant 0 : i32
    %c0_i32_0 = arith.constant 0 : i32
    %c0_i32_1 = arith.constant 0 : i32
    return %arg0, %c0_i32, %c0_i32_0 : i32, i32, i32
  }
  func.func @transform_5(%arg0: i32) -> (i32, i32, i32) {
    %c0_i32 = arith.constant 0 : i32
    %c0_i32_0 = arith.constant 0 : i32
    %c0_i32_1 = arith.constant 0 : i32
    return %arg0, %c0_i32, %c0_i32_0 : i32, i32, i32
  }
}

module attributes {stable_mosaic.version = 11 : i64} {
  func.func @kernel(%arg0: i32, %arg1: memref<32x288xbf16, #tpu.memory_space<vmem>>, %arg2: memref<288x32xbf16, #tpu.memory_space<vmem>>, %arg3: memref<1x32xf32, #tpu.memory_space<vmem>>, %arg4: memref<32x32xbf16, #tpu.memory_space<vmem>>, %arg5: memref<1x1x32xf32, #tpu.memory_space<vmem>>, %arg6: memref<1x1x32xf32, #tpu.memory_space<vmem>>) attributes {dimension_semantics = [#tpu.dimension_semantics<parallel>], iteration_bounds = array<i64: 1>, scalar_prefetch = 0 : i64, scratch_operands = 0 : i64, tpu.core_type = #tpu.core_type<tc>, window_params = [{transform_indices = @transform_0, window_bounds = array<i64: 32, 288>}, {pipeline_mode = #tpu.pipeline_mode<synchronous>, transform_indices = @transform_1, window_bounds = array<i64: 288, 32>}, {pipeline_mode = #tpu.pipeline_mode<synchronous>, transform_indices = @transform_2, window_bounds = array<i64: 1, 32>}, {transform_indices = @transform_3, window_bounds = array<i64: 32, 32>}, {transform_indices = @transform_4, window_bounds = array<i64: 1, 1, 32>}, {transform_indices = @transform_5, window_bounds = array<i64: 1, 1, 32>}]} {
    %c0 = arith.constant 0 : index
    %c0_0 = arith.constant 0 : index
    %0 = vector.load %arg1[%c0, %c0_0] : memref<32x288xbf16, #tpu.memory_space<vmem>>, vector<32x288xbf16>
    %c0_1 = arith.constant 0 : index
    %c0_2 = arith.constant 0 : index
    %1 = vector.load %arg2[%c0_1, %c0_2] : memref<288x32xbf16, #tpu.memory_space<vmem>>, vector<288x32xbf16>
    %cst = arith.constant dense<0.000000e+00> : vector<32x32xf32>
    %2 = tpu.matmul %0, %1, %cst {dimension_numbers = #tpu.dot_dimension_numbers<[1], [0], [0], [1], [0, 0, 1, 1], [], []>} : vector<32x288xbf16>, vector<288x32xbf16>, vector<32x32xf32> -> vector<32x32xf32>
    %c0_3 = arith.constant 0 : index
    %c0_4 = arith.constant 0 : index
    %3 = vector.load %arg3[%c0_3, %c0_4] : memref<1x32xf32, #tpu.memory_space<vmem>>, vector<1x32xf32>
    %4 = vector.broadcast %3 : vector<1x32xf32> to vector<32x32xf32>
    %5 = arith.addf %2, %4 : vector<32x32xf32>
    %6 = arith.truncf %5 : vector<32x32xf32> to vector<32x32xbf16>
    %c0_5 = arith.constant 0 : index
    %c0_6 = arith.constant 0 : index
    %7 = vector.load %arg4[%c0_5, %c0_6] : memref<32x32xbf16, #tpu.memory_space<vmem>>, vector<32x32xbf16>
    tpu.vector_store %arg4[%c0_5, %c0_6], %6 {strides = array<i32>} : memref<32x32xbf16, #tpu.memory_space<vmem>>, vector<32x32xbf16>,
    %c0_i32 = arith.constant 0 : i32
    %8 = arith.cmpi slt, %arg0, %c0_i32 : i32
    %9 = arith.extui %8 : i1 to i32
    %c0_i32_7 = arith.constant 0 : i32
    %10 = arith.cmpi ne, %9, %c0_i32_7 : i32
    scf.if %10 {
      %cst_10 = arith.constant dense<0.000000e+00> : vector<32xf32>
      %14 = vector.multi_reduction <add>, %5, %cst_10 [0] : vector<32x32xf32> to vector<32xf32>
      %15 = vector.shape_cast %14 : vector<32xf32> to vector<1x32xf32>
      %16 = vector.shape_cast %15 : vector<1x32xf32> to vector<1x1x32xf32>
      %c0_11 = arith.constant 0 : index
      %c0_12 = arith.constant 0 : index
      %c0_13 = arith.constant 0 : index
      %17 = vector.load %arg5[%c0_11, %c0_12, %c0_13] : memref<1x1x32xf32, #tpu.memory_space<vmem>>, vector<1x1x32xf32>
      tpu.vector_store %arg5[%c0_11, %c0_12, %c0_13], %16 {strides = array<i32>} : memref<1x1x32xf32, #tpu.memory_space<vmem>>, vector<1x1x32xf32>,
      %18 = arith.mulf %5, %5 : vector<32x32xf32>
      %cst_14 = arith.constant dense<0.000000e+00> : vector<32xf32>
      %19 = vector.multi_reduction <add>, %18, %cst_14 [0] : vector<32x32xf32> to vector<32xf32>
      %20 = vector.shape_cast %19 : vector<32xf32> to vector<1x32xf32>
      %21 = vector.shape_cast %20 : vector<1x32xf32> to vector<1x1x32xf32>
      %c0_15 = arith.constant 0 : index
      %c0_16 = arith.constant 0 : index
      %c0_17 = arith.constant 0 : index
      %22 = vector.load %arg6[%c0_15, %c0_16, %c0_17] : memref<1x1x32xf32, #tpu.memory_space<vmem>>, vector<1x1x32xf32>
      tpu.vector_store %arg6[%c0_15, %c0_16, %c0_17], %21 {strides = array<i32>} : memref<1x1x32xf32, #tpu.memory_space<vmem>>, vector<1x1x32xf32>,
    } else {
    }
    %c0_i32_8 = arith.constant 0 : i32
    %11 = arith.cmpi eq, %arg0, %c0_i32_8 : i32
    %12 = arith.extui %11 : i1 to i32
    %c0_i32_9 = arith.constant 0 : i32
    %13 = arith.cmpi ne, %12, %c0_i32_9 : i32
    scf.if %13 {
      %c32_i32 = arith.constant 32 : i32
      %14 = arith.muli %arg0, %c32_i32 : i32
      %15 = tpu.iota {dimensions = array<i32: 0>} : vector<32x32xi32>
      %16 = vector.broadcast %14 : i32 to vector<32x32xi32>
      %17 = arith.addi %16, %15 : vector<32x32xi32>
      %c32_i32_10 = arith.constant 32 : i32
      %18 = vector.broadcast %c32_i32_10 : i32 to vector<32x32xi32>
      %19 = arith.cmpi slt, %17, %18 : vector<32x32xi32>
      %cst_11 = arith.constant 0.000000e+00 : f32
      %20 = vector.broadcast %cst_11 : f32 to vector<32x32xf32>
      %21 = arith.select %19, %5, %20 : vector<32x32xi1>, vector<32x32xf32>
      %cst_12 = arith.constant dense<0.000000e+00> : vector<32xf32>
      %22 = vector.multi_reduction <add>, %21, %cst_12 [0] : vector<32x32xf32> to vector<32xf32>
      %23 = vector.shape_cast %22 : vector<32xf32> to vector<1x32xf32>
      %24 = vector.shape_cast %23 : vector<1x32xf32> to vector<1x1x32xf32>
      %c0_13 = arith.constant 0 : index
      %c0_14 = arith.constant 0 : index
      %c0_15 = arith.constant 0 : index
      %25 = vector.load %arg5[%c0_13, %c0_14, %c0_15] : memref<1x1x32xf32, #tpu.memory_space<vmem>>, vector<1x1x32xf32>
      tpu.vector_store %arg5[%c0_13, %c0_14, %c0_15], %24 {strides = array<i32>} : memref<1x1x32xf32, #tpu.memory_space<vmem>>, vector<1x1x32xf32>,
      %26 = arith.mulf %21, %21 : vector<32x32xf32>
      %cst_16 = arith.constant dense<0.000000e+00> : vector<32xf32>
      %27 = vector.multi_reduction <add>, %26, %cst_16 [0] : vector<32x32xf32> to vector<32xf32>
      %28 = vector.shape_cast %27 : vector<32xf32> to vector<1x32xf32>
      %29 = vector.shape_cast %28 : vector<1x32xf32> to vector<1x1x32xf32>
      %c0_17 = arith.constant 0 : index
      %c0_18 = arith.constant 0 : index
      %c0_19 = arith.constant 0 : index
      %30 = vector.load %arg6[%c0_17, %c0_18, %c0_19] : memref<1x1x32xf32, #tpu.memory_space<vmem>>, vector<1x1x32xf32>
      tpu.vector_store %arg6[%c0_17, %c0_18, %c0_19], %29 {strides = array<i32>} : memref<1x1x32xf32, #tpu.memory_space<vmem>>, vector<1x1x32xf32>,
    } else {
    }
    return
  }
  func.func @transform_0(%arg0: i32) -> (i32, i32) {
    %c0_i32 = arith.constant 0 : i32
    %c0_i32_0 = arith.constant 0 : i32
    return %arg0, %c0_i32 : i32, i32
  }
  func.func @transform_1(%arg0: i32) -> (i32, i32) {
    %c0_i32 = arith.constant 0 : i32
    %c0_i32_0 = arith.constant 0 : i32
    %c0_i32_1 = arith.constant 0 : i32
    return %c0_i32, %c0_i32_0 : i32, i32
  }
  func.func @transform_2(%arg0: i32) -> (i32, i32) {
    %c0_i32 = arith.constant 0 : i32
    %c0_i32_0 = arith.constant 0 : i32
    %c0_i32_1 = arith.constant 0 : i32
    return %c0_i32, %c0_i32_0 : i32, i32
  }
  func.func @transform_3(%arg0: i32) -> (i32, i32) {
    %c0_i32 = arith.constant 0 : i32
    %c0_i32_0 = arith.constant 0 : i32
    return %arg0, %c0_i32 : i32, i32
  }
  func.func @transform_4(%arg0: i32) -> (i32, i32, i32) {
    %c0_i32 = arith.constant 0 : i32
    %c0_i32_0 = arith.constant 0 : i32
    %c0_i32_1 = arith.constant 0 : i32
    return %arg0, %c0_i32, %c0_i32_0 : i32, i32, i32
  }
  func.func @transform_5(%arg0: i32) -> (i32, i32, i32) {
    %c0_i32 = arith.constant 0 : i32
    %c0_i32_0 = arith.constant 0 : i32
    %c0_i32_1 = arith.constant 0 : i32
    return %arg0, %c0_i32, %c0_i32_0 : i32, i32, i32
  }
}

module attributes {stable_mosaic.version = 11 : i64} {
  func.func @kernel(%arg0: i32, %arg1: memref<32x288xbf16, #tpu.memory_space<vmem>>, %arg2: memref<288x64xbf16, #tpu.memory_space<vmem>>, %arg3: memref<1x64xf32, #tpu.memory_space<vmem>>, %arg4: memref<32x64xbf16, #tpu.memory_space<vmem>>, %arg5: memref<1x1x64xf32, #tpu.memory_space<vmem>>, %arg6: memref<1x1x64xf32, #tpu.memory_space<vmem>>) attributes {dimension_semantics = [#tpu.dimension_semantics<parallel>], iteration_bounds = array<i64: 1>, scalar_prefetch = 0 : i64, scratch_operands = 0 : i64, tpu.core_type = #tpu.core_type<tc>, window_params = [{transform_indices = @transform_0, window_bounds = array<i64: 32, 288>}, {pipeline_mode = #tpu.pipeline_mode<synchronous>, transform_indices = @transform_1, window_bounds = array<i64: 288, 64>}, {pipeline_mode = #tpu.pipeline_mode<synchronous>, transform_indices = @transform_2, window_bounds = array<i64: 1, 64>}, {transform_indices = @transform_3, window_bounds = array<i64: 32, 64>}, {transform_indices = @transform_4, window_bounds = array<i64: 1, 1, 64>}, {transform_indices = @transform_5, window_bounds = array<i64: 1, 1, 64>}]} {
    %c0 = arith.constant 0 : index
    %c0_0 = arith.constant 0 : index
    %0 = vector.load %arg1[%c0, %c0_0] : memref<32x288xbf16, #tpu.memory_space<vmem>>, vector<32x288xbf16>
    %c0_1 = arith.constant 0 : index
    %c0_2 = arith.constant 0 : index
    %1 = vector.load %arg2[%c0_1, %c0_2] : memref<288x64xbf16, #tpu.memory_space<vmem>>, vector<288x64xbf16>
    %cst = arith.constant dense<0.000000e+00> : vector<32x64xf32>
    %2 = tpu.matmul %0, %1, %cst {dimension_numbers = #tpu.dot_dimension_numbers<[1], [0], [0], [1], [0, 0, 1, 1], [], []>} : vector<32x288xbf16>, vector<288x64xbf16>, vector<32x64xf32> -> vector<32x64xf32>
    %c0_3 = arith.constant 0 : index
    %c0_4 = arith.constant 0 : index
    %3 = vector.load %arg3[%c0_3, %c0_4] : memref<1x64xf32, #tpu.memory_space<vmem>>, vector<1x64xf32>
    %4 = vector.broadcast %3 : vector<1x64xf32> to vector<32x64xf32>
    %5 = arith.addf %2, %4 : vector<32x64xf32>
    %6 = arith.truncf %5 : vector<32x64xf32> to vector<32x64xbf16>
    %c0_5 = arith.constant 0 : index
    %c0_6 = arith.constant 0 : index
    %7 = vector.load %arg4[%c0_5, %c0_6] : memref<32x64xbf16, #tpu.memory_space<vmem>>, vector<32x64xbf16>
    tpu.vector_store %arg4[%c0_5, %c0_6], %6 {strides = array<i32>} : memref<32x64xbf16, #tpu.memory_space<vmem>>, vector<32x64xbf16>,
    %c0_i32 = arith.constant 0 : i32
    %8 = arith.cmpi slt, %arg0, %c0_i32 : i32
    %9 = arith.extui %8 : i1 to i32
    %c0_i32_7 = arith.constant 0 : i32
    %10 = arith.cmpi ne, %9, %c0_i32_7 : i32
    scf.if %10 {
      %cst_10 = arith.constant dense<0.000000e+00> : vector<64xf32>
      %14 = vector.multi_reduction <add>, %5, %cst_10 [0] : vector<32x64xf32> to vector<64xf32>
      %15 = vector.shape_cast %14 : vector<64xf32> to vector<1x64xf32>
      %16 = vector.shape_cast %15 : vector<1x64xf32> to vector<1x1x64xf32>
      %c0_11 = arith.constant 0 : index
      %c0_12 = arith.constant 0 : index
      %c0_13 = arith.constant 0 : index
      %17 = vector.load %arg5[%c0_11, %c0_12, %c0_13] : memref<1x1x64xf32, #tpu.memory_space<vmem>>, vector<1x1x64xf32>
      tpu.vector_store %arg5[%c0_11, %c0_12, %c0_13], %16 {strides = array<i32>} : memref<1x1x64xf32, #tpu.memory_space<vmem>>, vector<1x1x64xf32>,
      %18 = arith.mulf %5, %5 : vector<32x64xf32>
      %cst_14 = arith.constant dense<0.000000e+00> : vector<64xf32>
      %19 = vector.multi_reduction <add>, %18, %cst_14 [0] : vector<32x64xf32> to vector<64xf32>
      %20 = vector.shape_cast %19 : vector<64xf32> to vector<1x64xf32>
      %21 = vector.shape_cast %20 : vector<1x64xf32> to vector<1x1x64xf32>
      %c0_15 = arith.constant 0 : index
      %c0_16 = arith.constant 0 : index
      %c0_17 = arith.constant 0 : index
      %22 = vector.load %arg6[%c0_15, %c0_16, %c0_17] : memref<1x1x64xf32, #tpu.memory_space<vmem>>, vector<1x1x64xf32>
      tpu.vector_store %arg6[%c0_15, %c0_16, %c0_17], %21 {strides = array<i32>} : memref<1x1x64xf32, #tpu.memory_space<vmem>>, vector<1x1x64xf32>,
    } else {
    }
    %c0_i32_8 = arith.constant 0 : i32
    %11 = arith.cmpi eq, %arg0, %c0_i32_8 : i32
    %12 = arith.extui %11 : i1 to i32
    %c0_i32_9 = arith.constant 0 : i32
    %13 = arith.cmpi ne, %12, %c0_i32_9 : i32
    scf.if %13 {
      %c32_i32 = arith.constant 32 : i32
      %14 = arith.muli %arg0, %c32_i32 : i32
      %15 = tpu.iota {dimensions = array<i32: 0>} : vector<32x64xi32>
      %16 = vector.broadcast %14 : i32 to vector<32x64xi32>
      %17 = arith.addi %16, %15 : vector<32x64xi32>
      %c32_i32_10 = arith.constant 32 : i32
      %18 = vector.broadcast %c32_i32_10 : i32 to vector<32x64xi32>
      %19 = arith.cmpi slt, %17, %18 : vector<32x64xi32>
      %cst_11 = arith.constant 0.000000e+00 : f32
      %20 = vector.broadcast %cst_11 : f32 to vector<32x64xf32>
      %21 = arith.select %19, %5, %20 : vector<32x64xi1>, vector<32x64xf32>
      %cst_12 = arith.constant dense<0.000000e+00> : vector<64xf32>
      %22 = vector.multi_reduction <add>, %21, %cst_12 [0] : vector<32x64xf32> to vector<64xf32>
      %23 = vector.shape_cast %22 : vector<64xf32> to vector<1x64xf32>
      %24 = vector.shape_cast %23 : vector<1x64xf32> to vector<1x1x64xf32>
      %c0_13 = arith.constant 0 : index
      %c0_14 = arith.constant 0 : index
      %c0_15 = arith.constant 0 : index
      %25 = vector.load %arg5[%c0_13, %c0_14, %c0_15] : memref<1x1x64xf32, #tpu.memory_space<vmem>>, vector<1x1x64xf32>
      tpu.vector_store %arg5[%c0_13, %c0_14, %c0_15], %24 {strides = array<i32>} : memref<1x1x64xf32, #tpu.memory_space<vmem>>, vector<1x1x64xf32>,
      %26 = arith.mulf %21, %21 : vector<32x64xf32>
      %cst_16 = arith.constant dense<0.000000e+00> : vector<64xf32>
      %27 = vector.multi_reduction <add>, %26, %cst_16 [0] : vector<32x64xf32> to vector<64xf32>
      %28 = vector.shape_cast %27 : vector<64xf32> to vector<1x64xf32>
      %29 = vector.shape_cast %28 : vector<1x64xf32> to vector<1x1x64xf32>
      %c0_17 = arith.constant 0 : index
      %c0_18 = arith.constant 0 : index
      %c0_19 = arith.constant 0 : index
      %30 = vector.load %arg6[%c0_17, %c0_18, %c0_19] : memref<1x1x64xf32, #tpu.memory_space<vmem>>, vector<1x1x64xf32>
      tpu.vector_store %arg6[%c0_17, %c0_18, %c0_19], %29 {strides = array<i32>} : memref<1x1x64xf32, #tpu.memory_space<vmem>>, vector<1x1x64xf32>,
    } else {
    }
    return
  }
  func.func @transform_0(%arg0: i32) -> (i32, i32) {
    %c0_i32 = arith.constant 0 : i32
    %c0_i32_0 = arith.constant 0 : i32
    return %arg0, %c0_i32 : i32, i32
  }
  func.func @transform_1(%arg0: i32) -> (i32, i32) {
    %c0_i32 = arith.constant 0 : i32
    %c0_i32_0 = arith.constant 0 : i32
    %c0_i32_1 = arith.constant 0 : i32
    return %c0_i32, %c0_i32_0 : i32, i32
  }
  func.func @transform_2(%arg0: i32) -> (i32, i32) {
    %c0_i32 = arith.constant 0 : i32
    %c0_i32_0 = arith.constant 0 : i32
    %c0_i32_1 = arith.constant 0 : i32
    return %c0_i32, %c0_i32_0 : i32, i32
  }
  func.func @transform_3(%arg0: i32) -> (i32, i32) {
    %c0_i32 = arith.constant 0 : i32
    %c0_i32_0 = arith.constant 0 : i32
    return %arg0, %c0_i32 : i32, i32
  }
  func.func @transform_4(%arg0: i32) -> (i32, i32, i32) {
    %c0_i32 = arith.constant 0 : i32
    %c0_i32_0 = arith.constant 0 : i32
    %c0_i32_1 = arith.constant 0 : i32
    return %arg0, %c0_i32, %c0_i32_0 : i32, i32, i32
  }
  func.func @transform_5(%arg0: i32) -> (i32, i32, i32) {
    %c0_i32 = arith.constant 0 : i32
    %c0_i32_0 = arith.constant 0 : i32
    %c0_i32_1 = arith.constant 0 : i32
    return %arg0, %c0_i32, %c0_i32_0 : i32, i32, i32
  }
}

module attributes {stable_mosaic.version = 11 : i64} {
  func.func @kernel(%arg0: i32, %arg1: memref<16x576xbf16, #tpu.memory_space<vmem>>, %arg2: memref<576x64xbf16, #tpu.memory_space<vmem>>, %arg3: memref<1x64xf32, #tpu.memory_space<vmem>>, %arg4: memref<16x64xbf16, #tpu.memory_space<vmem>>, %arg5: memref<1x1x64xf32, #tpu.memory_space<vmem>>, %arg6: memref<1x1x64xf32, #tpu.memory_space<vmem>>) attributes {dimension_semantics = [#tpu.dimension_semantics<parallel>], iteration_bounds = array<i64: 1>, scalar_prefetch = 0 : i64, scratch_operands = 0 : i64, tpu.core_type = #tpu.core_type<tc>, window_params = [{transform_indices = @transform_0, window_bounds = array<i64: 16, 576>}, {pipeline_mode = #tpu.pipeline_mode<synchronous>, transform_indices = @transform_1, window_bounds = array<i64: 576, 64>}, {pipeline_mode = #tpu.pipeline_mode<synchronous>, transform_indices = @transform_2, window_bounds = array<i64: 1, 64>}, {transform_indices = @transform_3, window_bounds = array<i64: 16, 64>}, {transform_indices = @transform_4, window_bounds = array<i64: 1, 1, 64>}, {transform_indices = @transform_5, window_bounds = array<i64: 1, 1, 64>}]} {
    %c0 = arith.constant 0 : index
    %c0_0 = arith.constant 0 : index
    %0 = vector.load %arg1[%c0, %c0_0] : memref<16x576xbf16, #tpu.memory_space<vmem>>, vector<16x576xbf16>
    %c0_1 = arith.constant 0 : index
    %c0_2 = arith.constant 0 : index
    %1 = vector.load %arg2[%c0_1, %c0_2] : memref<576x64xbf16, #tpu.memory_space<vmem>>, vector<576x64xbf16>
    %cst = arith.constant dense<0.000000e+00> : vector<16x64xf32>
    %2 = tpu.matmul %0, %1, %cst {dimension_numbers = #tpu.dot_dimension_numbers<[1], [0], [0], [1], [0, 0, 1, 1], [], []>} : vector<16x576xbf16>, vector<576x64xbf16>, vector<16x64xf32> -> vector<16x64xf32>
    %c0_3 = arith.constant 0 : index
    %c0_4 = arith.constant 0 : index
    %3 = vector.load %arg3[%c0_3, %c0_4] : memref<1x64xf32, #tpu.memory_space<vmem>>, vector<1x64xf32>
    %4 = vector.broadcast %3 : vector<1x64xf32> to vector<16x64xf32>
    %5 = arith.addf %2, %4 : vector<16x64xf32>
    %6 = arith.truncf %5 : vector<16x64xf32> to vector<16x64xbf16>
    %c0_5 = arith.constant 0 : index
    %c0_6 = arith.constant 0 : index
    %7 = vector.load %arg4[%c0_5, %c0_6] : memref<16x64xbf16, #tpu.memory_space<vmem>>, vector<16x64xbf16>
    tpu.vector_store %arg4[%c0_5, %c0_6], %6 {strides = array<i32>} : memref<16x64xbf16, #tpu.memory_space<vmem>>, vector<16x64xbf16>,
    %c0_i32 = arith.constant 0 : i32
    %8 = arith.cmpi slt, %arg0, %c0_i32 : i32
    %9 = arith.extui %8 : i1 to i32
    %c0_i32_7 = arith.constant 0 : i32
    %10 = arith.cmpi ne, %9, %c0_i32_7 : i32
    scf.if %10 {
      %cst_10 = arith.constant dense<0.000000e+00> : vector<64xf32>
      %14 = vector.multi_reduction <add>, %5, %cst_10 [0] : vector<16x64xf32> to vector<64xf32>
      %15 = vector.shape_cast %14 : vector<64xf32> to vector<1x64xf32>
      %16 = vector.shape_cast %15 : vector<1x64xf32> to vector<1x1x64xf32>
      %c0_11 = arith.constant 0 : index
      %c0_12 = arith.constant 0 : index
      %c0_13 = arith.constant 0 : index
      %17 = vector.load %arg5[%c0_11, %c0_12, %c0_13] : memref<1x1x64xf32, #tpu.memory_space<vmem>>, vector<1x1x64xf32>
      tpu.vector_store %arg5[%c0_11, %c0_12, %c0_13], %16 {strides = array<i32>} : memref<1x1x64xf32, #tpu.memory_space<vmem>>, vector<1x1x64xf32>,
      %18 = arith.mulf %5, %5 : vector<16x64xf32>
      %cst_14 = arith.constant dense<0.000000e+00> : vector<64xf32>
      %19 = vector.multi_reduction <add>, %18, %cst_14 [0] : vector<16x64xf32> to vector<64xf32>
      %20 = vector.shape_cast %19 : vector<64xf32> to vector<1x64xf32>
      %21 = vector.shape_cast %20 : vector<1x64xf32> to vector<1x1x64xf32>
      %c0_15 = arith.constant 0 : index
      %c0_16 = arith.constant 0 : index
      %c0_17 = arith.constant 0 : index
      %22 = vector.load %arg6[%c0_15, %c0_16, %c0_17] : memref<1x1x64xf32, #tpu.memory_space<vmem>>, vector<1x1x64xf32>
      tpu.vector_store %arg6[%c0_15, %c0_16, %c0_17], %21 {strides = array<i32>} : memref<1x1x64xf32, #tpu.memory_space<vmem>>, vector<1x1x64xf32>,
    } else {
    }
    %c0_i32_8 = arith.constant 0 : i32
    %11 = arith.cmpi eq, %arg0, %c0_i32_8 : i32
    %12 = arith.extui %11 : i1 to i32
    %c0_i32_9 = arith.constant 0 : i32
    %13 = arith.cmpi ne, %12, %c0_i32_9 : i32
    scf.if %13 {
      %c16_i32 = arith.constant 16 : i32
      %14 = arith.muli %arg0, %c16_i32 : i32
      %15 = tpu.iota {dimensions = array<i32: 0>} : vector<16x64xi32>
      %16 = vector.broadcast %14 : i32 to vector<16x64xi32>
      %17 = arith.addi %16, %15 : vector<16x64xi32>
      %c8_i32 = arith.constant 8 : i32
      %18 = vector.broadcast %c8_i32 : i32 to vector<16x64xi32>
      %19 = arith.cmpi slt, %17, %18 : vector<16x64xi32>
      %cst_10 = arith.constant 0.000000e+00 : f32
      %20 = vector.broadcast %cst_10 : f32 to vector<16x64xf32>
      %21 = arith.select %19, %5, %20 : vector<16x64xi1>, vector<16x64xf32>
      %cst_11 = arith.constant dense<0.000000e+00> : vector<64xf32>
      %22 = vector.multi_reduction <add>, %21, %cst_11 [0] : vector<16x64xf32> to vector<64xf32>
      %23 = vector.shape_cast %22 : vector<64xf32> to vector<1x64xf32>
      %24 = vector.shape_cast %23 : vector<1x64xf32> to vector<1x1x64xf32>
      %c0_12 = arith.constant 0 : index
      %c0_13 = arith.constant 0 : index
      %c0_14 = arith.constant 0 : index
      %25 = vector.load %arg5[%c0_12, %c0_13, %c0_14] : memref<1x1x64xf32, #tpu.memory_space<vmem>>, vector<1x1x64xf32>
      tpu.vector_store %arg5[%c0_12, %c0_13, %c0_14], %24 {strides = array<i32>} : memref<1x1x64xf32, #tpu.memory_space<vmem>>, vector<1x1x64xf32>,
      %26 = arith.mulf %21, %21 : vector<16x64xf32>
      %cst_15 = arith.constant dense<0.000000e+00> : vector<64xf32>
      %27 = vector.multi_reduction <add>, %26, %cst_15 [0] : vector<16x64xf32> to vector<64xf32>
      %28 = vector.shape_cast %27 : vector<64xf32> to vector<1x64xf32>
      %29 = vector.shape_cast %28 : vector<1x64xf32> to vector<1x1x64xf32>
      %c0_16 = arith.constant 0 : index
      %c0_17 = arith.constant 0 : index
      %c0_18 = arith.constant 0 : index
      %30 = vector.load %arg6[%c0_16, %c0_17, %c0_18] : memref<1x1x64xf32, #tpu.memory_space<vmem>>, vector<1x1x64xf32>
      tpu.vector_store %arg6[%c0_16, %c0_17, %c0_18], %29 {strides = array<i32>} : memref<1x1x64xf32, #tpu.memory_space<vmem>>, vector<1x1x64xf32>,
    } else {
    }
    return
  }
  func.func @transform_0(%arg0: i32) -> (i32, i32) {
    %c0_i32 = arith.constant 0 : i32
    %c0_i32_0 = arith.constant 0 : i32
    return %arg0, %c0_i32 : i32, i32
  }
  func.func @transform_1(%arg0: i32) -> (i32, i32) {
    %c0_i32 = arith.constant 0 : i32
    %c0_i32_0 = arith.constant 0 : i32
    %c0_i32_1 = arith.constant 0 : i32
    return %c0_i32, %c0_i32_0 : i32, i32
  }
  func.func @transform_2(%arg0: i32) -> (i32, i32) {
    %c0_i32 = arith.constant 0 : i32
    %c0_i32_0 = arith.constant 0 : i32
    %c0_i32_1 = arith.constant 0 : i32
    return %c0_i32, %c0_i32_0 : i32, i32
  }
  func.func @transform_3(%arg0: i32) -> (i32, i32) {
    %c0_i32 = arith.constant 0 : i32
    %c0_i32_0 = arith.constant 0 : i32
    return %arg0, %c0_i32 : i32, i32
  }
  func.func @transform_4(%arg0: i32) -> (i32, i32, i32) {
    %c0_i32 = arith.constant 0 : i32
    %c0_i32_0 = arith.constant 0 : i32
    %c0_i32_1 = arith.constant 0 : i32
    return %arg0, %c0_i32, %c0_i32_0 : i32, i32, i32
  }
  func.func @transform_5(%arg0: i32) -> (i32, i32, i32) {
    %c0_i32 = arith.constant 0 : i32
    %c0_i32_0 = arith.constant 0 : i32
    %c0_i32_1 = arith.constant 0 : i32
    return %arg0, %c0_i32, %c0_i32_0 : i32, i32, i32
  }
}

module attributes {stable_mosaic.version = 11 : i64} {
  func.func @kernel(%arg0: i32, %arg1: memref<16x576xbf16, #tpu.memory_space<vmem>>, %arg2: memref<576x128xbf16, #tpu.memory_space<vmem>>, %arg3: memref<1x128xf32, #tpu.memory_space<vmem>>, %arg4: memref<16x128xbf16, #tpu.memory_space<vmem>>, %arg5: memref<1x1x128xf32, #tpu.memory_space<vmem>>, %arg6: memref<1x1x128xf32, #tpu.memory_space<vmem>>) attributes {dimension_semantics = [#tpu.dimension_semantics<parallel>], iteration_bounds = array<i64: 1>, scalar_prefetch = 0 : i64, scratch_operands = 0 : i64, tpu.core_type = #tpu.core_type<tc>, window_params = [{transform_indices = @transform_0, window_bounds = array<i64: 16, 576>}, {pipeline_mode = #tpu.pipeline_mode<synchronous>, transform_indices = @transform_1, window_bounds = array<i64: 576, 128>}, {pipeline_mode = #tpu.pipeline_mode<synchronous>, transform_indices = @transform_2, window_bounds = array<i64: 1, 128>}, {transform_indices = @transform_3, window_bounds = array<i64: 16, 128>}, {transform_indices = @transform_4, window_bounds = array<i64: 1, 1, 128>}, {transform_indices = @transform_5, window_bounds = array<i64: 1, 1, 128>}]} {
    %c0 = arith.constant 0 : index
    %c0_0 = arith.constant 0 : index
    %0 = vector.load %arg1[%c0, %c0_0] : memref<16x576xbf16, #tpu.memory_space<vmem>>, vector<16x576xbf16>
    %c0_1 = arith.constant 0 : index
    %c0_2 = arith.constant 0 : index
    %1 = vector.load %arg2[%c0_1, %c0_2] : memref<576x128xbf16, #tpu.memory_space<vmem>>, vector<576x128xbf16>
    %cst = arith.constant dense<0.000000e+00> : vector<16x128xf32>
    %2 = tpu.matmul %0, %1, %cst {dimension_numbers = #tpu.dot_dimension_numbers<[1], [0], [0], [1], [0, 0, 1, 1], [], []>} : vector<16x576xbf16>, vector<576x128xbf16>, vector<16x128xf32> -> vector<16x128xf32>
    %c0_3 = arith.constant 0 : index
    %c0_4 = arith.constant 0 : index
    %3 = vector.load %arg3[%c0_3, %c0_4] : memref<1x128xf32, #tpu.memory_space<vmem>>, vector<1x128xf32>
    %4 = vector.broadcast %3 : vector<1x128xf32> to vector<16x128xf32>
    %5 = arith.addf %2, %4 : vector<16x128xf32>
    %6 = arith.truncf %5 : vector<16x128xf32> to vector<16x128xbf16>
    %c0_5 = arith.constant 0 : index
    %c0_6 = arith.constant 0 : index
    %7 = vector.load %arg4[%c0_5, %c0_6] : memref<16x128xbf16, #tpu.memory_space<vmem>>, vector<16x128xbf16>
    tpu.vector_store %arg4[%c0_5, %c0_6], %6 {strides = array<i32>} : memref<16x128xbf16, #tpu.memory_space<vmem>>, vector<16x128xbf16>,
    %c0_i32 = arith.constant 0 : i32
    %8 = arith.cmpi slt, %arg0, %c0_i32 : i32
    %9 = arith.extui %8 : i1 to i32
    %c0_i32_7 = arith.constant 0 : i32
    %10 = arith.cmpi ne, %9, %c0_i32_7 : i32
    scf.if %10 {
      %cst_10 = arith.constant dense<0.000000e+00> : vector<128xf32>
      %14 = vector.multi_reduction <add>, %5, %cst_10 [0] : vector<16x128xf32> to vector<128xf32>
      %15 = vector.shape_cast %14 : vector<128xf32> to vector<1x128xf32>
      %16 = vector.shape_cast %15 : vector<1x128xf32> to vector<1x1x128xf32>
      %c0_11 = arith.constant 0 : index
      %c0_12 = arith.constant 0 : index
      %c0_13 = arith.constant 0 : index
      %17 = vector.load %arg5[%c0_11, %c0_12, %c0_13] : memref<1x1x128xf32, #tpu.memory_space<vmem>>, vector<1x1x128xf32>
      tpu.vector_store %arg5[%c0_11, %c0_12, %c0_13], %16 {strides = array<i32>} : memref<1x1x128xf32, #tpu.memory_space<vmem>>, vector<1x1x128xf32>,
      %18 = arith.mulf %5, %5 : vector<16x128xf32>
      %cst_14 = arith.constant dense<0.000000e+00> : vector<128xf32>
      %19 = vector.multi_reduction <add>, %18, %cst_14 [0] : vector<16x128xf32> to vector<128xf32>
      %20 = vector.shape_cast %19 : vector<128xf32> to vector<1x128xf32>
      %21 = vector.shape_cast %20 : vector<1x128xf32> to vector<1x1x128xf32>
      %c0_15 = arith.constant 0 : index
      %c0_16 = arith.constant 0 : index
      %c0_17 = arith.constant 0 : index
      %22 = vector.load %arg6[%c0_15, %c0_16, %c0_17] : memref<1x1x128xf32, #tpu.memory_space<vmem>>, vector<1x1x128xf32>
      tpu.vector_store %arg6[%c0_15, %c0_16, %c0_17], %21 {strides = array<i32>} : memref<1x1x128xf32, #tpu.memory_space<vmem>>, vector<1x1x128xf32>,
    } else {
    }
    %c0_i32_8 = arith.constant 0 : i32
    %11 = arith.cmpi eq, %arg0, %c0_i32_8 : i32
    %12 = arith.extui %11 : i1 to i32
    %c0_i32_9 = arith.constant 0 : i32
    %13 = arith.cmpi ne, %12, %c0_i32_9 : i32
    scf.if %13 {
      %c16_i32 = arith.constant 16 : i32
      %14 = arith.muli %arg0, %c16_i32 : i32
      %15 = tpu.iota {dimensions = array<i32: 0>} : vector<16x128xi32>
      %16 = vector.broadcast %14 : i32 to vector<16x128xi32>
      %17 = arith.addi %16, %15 : vector<16x128xi32>
      %c8_i32 = arith.constant 8 : i32
      %18 = vector.broadcast %c8_i32 : i32 to vector<16x128xi32>
      %19 = arith.cmpi slt, %17, %18 : vector<16x128xi32>
      %cst_10 = arith.constant 0.000000e+00 : f32
      %20 = vector.broadcast %cst_10 : f32 to vector<16x128xf32>
      %21 = arith.select %19, %5, %20 : vector<16x128xi1>, vector<16x128xf32>
      %cst_11 = arith.constant dense<0.000000e+00> : vector<128xf32>
      %22 = vector.multi_reduction <add>, %21, %cst_11 [0] : vector<16x128xf32> to vector<128xf32>
      %23 = vector.shape_cast %22 : vector<128xf32> to vector<1x128xf32>
      %24 = vector.shape_cast %23 : vector<1x128xf32> to vector<1x1x128xf32>
      %c0_12 = arith.constant 0 : index
      %c0_13 = arith.constant 0 : index
      %c0_14 = arith.constant 0 : index
      %25 = vector.load %arg5[%c0_12, %c0_13, %c0_14] : memref<1x1x128xf32, #tpu.memory_space<vmem>>, vector<1x1x128xf32>
      tpu.vector_store %arg5[%c0_12, %c0_13, %c0_14], %24 {strides = array<i32>} : memref<1x1x128xf32, #tpu.memory_space<vmem>>, vector<1x1x128xf32>,
      %26 = arith.mulf %21, %21 : vector<16x128xf32>
      %cst_15 = arith.constant dense<0.000000e+00> : vector<128xf32>
      %27 = vector.multi_reduction <add>, %26, %cst_15 [0] : vector<16x128xf32> to vector<128xf32>
      %28 = vector.shape_cast %27 : vector<128xf32> to vector<1x128xf32>
      %29 = vector.shape_cast %28 : vector<1x128xf32> to vector<1x1x128xf32>
      %c0_16 = arith.constant 0 : index
      %c0_17 = arith.constant 0 : index
      %c0_18 = arith.constant 0 : index
      %30 = vector.load %arg6[%c0_16, %c0_17, %c0_18] : memref<1x1x128xf32, #tpu.memory_space<vmem>>, vector<1x1x128xf32>
      tpu.vector_store %arg6[%c0_16, %c0_17, %c0_18], %29 {strides = array<i32>} : memref<1x1x128xf32, #tpu.memory_space<vmem>>, vector<1x1x128xf32>,
    } else {
    }
    return
  }
  func.func @transform_0(%arg0: i32) -> (i32, i32) {
    %c0_i32 = arith.constant 0 : i32
    %c0_i32_0 = arith.constant 0 : i32
    return %arg0, %c0_i32 : i32, i32
  }
  func.func @transform_1(%arg0: i32) -> (i32, i32) {
    %c0_i32 = arith.constant 0 : i32
    %c0_i32_0 = arith.constant 0 : i32
    %c0_i32_1 = arith.constant 0 : i32
    return %c0_i32, %c0_i32_0 : i32, i32
  }
  func.func @transform_2(%arg0: i32) -> (i32, i32) {
    %c0_i32 = arith.constant 0 : i32
    %c0_i32_0 = arith.constant 0 : i32
    %c0_i32_1 = arith.constant 0 : i32
    return %c0_i32, %c0_i32_0 : i32, i32
  }
  func.func @transform_3(%arg0: i32) -> (i32, i32) {
    %c0_i32 = arith.constant 0 : i32
    %c0_i32_0 = arith.constant 0 : i32
    return %arg0, %c0_i32 : i32, i32
  }
  func.func @transform_4(%arg0: i32) -> (i32, i32, i32) {
    %c0_i32 = arith.constant 0 : i32
    %c0_i32_0 = arith.constant 0 : i32
    %c0_i32_1 = arith.constant 0 : i32
    return %arg0, %c0_i32, %c0_i32_0 : i32, i32, i32
  }
  func.func @transform_5(%arg0: i32) -> (i32, i32, i32) {
    %c0_i32 = arith.constant 0 : i32
    %c0_i32_0 = arith.constant 0 : i32
    %c0_i32_1 = arith.constant 0 : i32
    return %arg0, %c0_i32, %c0_i32_0 : i32, i32, i32
  }
}

module attributes {stable_mosaic.version = 11 : i64} {
  func.func @kernel(%arg0: i32, %arg1: memref<16x1152xbf16, #tpu.memory_space<vmem>>, %arg2: memref<1152x128xbf16, #tpu.memory_space<vmem>>, %arg3: memref<1x128xf32, #tpu.memory_space<vmem>>, %arg4: memref<16x128xbf16, #tpu.memory_space<vmem>>, %arg5: memref<1x1x128xf32, #tpu.memory_space<vmem>>, %arg6: memref<1x1x128xf32, #tpu.memory_space<vmem>>) attributes {dimension_semantics = [#tpu.dimension_semantics<parallel>], iteration_bounds = array<i64: 1>, scalar_prefetch = 0 : i64, scratch_operands = 0 : i64, tpu.core_type = #tpu.core_type<tc>, window_params = [{transform_indices = @transform_0, window_bounds = array<i64: 16, 1152>}, {pipeline_mode = #tpu.pipeline_mode<synchronous>, transform_indices = @transform_1, window_bounds = array<i64: 1152, 128>}, {pipeline_mode = #tpu.pipeline_mode<synchronous>, transform_indices = @transform_2, window_bounds = array<i64: 1, 128>}, {transform_indices = @transform_3, window_bounds = array<i64: 16, 128>}, {transform_indices = @transform_4, window_bounds = array<i64: 1, 1, 128>}, {transform_indices = @transform_5, window_bounds = array<i64: 1, 1, 128>}]} {
    %c0 = arith.constant 0 : index
    %c0_0 = arith.constant 0 : index
    %0 = vector.load %arg1[%c0, %c0_0] : memref<16x1152xbf16, #tpu.memory_space<vmem>>, vector<16x1152xbf16>
    %c0_1 = arith.constant 0 : index
    %c0_2 = arith.constant 0 : index
    %1 = vector.load %arg2[%c0_1, %c0_2] : memref<1152x128xbf16, #tpu.memory_space<vmem>>, vector<1152x128xbf16>
    %cst = arith.constant dense<0.000000e+00> : vector<16x128xf32>
    %2 = tpu.matmul %0, %1, %cst {dimension_numbers = #tpu.dot_dimension_numbers<[1], [0], [0], [1], [0, 0, 1, 1], [], []>} : vector<16x1152xbf16>, vector<1152x128xbf16>, vector<16x128xf32> -> vector<16x128xf32>
    %c0_3 = arith.constant 0 : index
    %c0_4 = arith.constant 0 : index
    %3 = vector.load %arg3[%c0_3, %c0_4] : memref<1x128xf32, #tpu.memory_space<vmem>>, vector<1x128xf32>
    %4 = vector.broadcast %3 : vector<1x128xf32> to vector<16x128xf32>
    %5 = arith.addf %2, %4 : vector<16x128xf32>
    %6 = arith.truncf %5 : vector<16x128xf32> to vector<16x128xbf16>
    %c0_5 = arith.constant 0 : index
    %c0_6 = arith.constant 0 : index
    %7 = vector.load %arg4[%c0_5, %c0_6] : memref<16x128xbf16, #tpu.memory_space<vmem>>, vector<16x128xbf16>
    tpu.vector_store %arg4[%c0_5, %c0_6], %6 {strides = array<i32>} : memref<16x128xbf16, #tpu.memory_space<vmem>>, vector<16x128xbf16>,
    %c0_i32 = arith.constant 0 : i32
    %8 = arith.cmpi slt, %arg0, %c0_i32 : i32
    %9 = arith.extui %8 : i1 to i32
    %c0_i32_7 = arith.constant 0 : i32
    %10 = arith.cmpi ne, %9, %c0_i32_7 : i32
    scf.if %10 {
      %cst_10 = arith.constant dense<0.000000e+00> : vector<128xf32>
      %14 = vector.multi_reduction <add>, %5, %cst_10 [0] : vector<16x128xf32> to vector<128xf32>
      %15 = vector.shape_cast %14 : vector<128xf32> to vector<1x128xf32>
      %16 = vector.shape_cast %15 : vector<1x128xf32> to vector<1x1x128xf32>
      %c0_11 = arith.constant 0 : index
      %c0_12 = arith.constant 0 : index
      %c0_13 = arith.constant 0 : index
      %17 = vector.load %arg5[%c0_11, %c0_12, %c0_13] : memref<1x1x128xf32, #tpu.memory_space<vmem>>, vector<1x1x128xf32>
      tpu.vector_store %arg5[%c0_11, %c0_12, %c0_13], %16 {strides = array<i32>} : memref<1x1x128xf32, #tpu.memory_space<vmem>>, vector<1x1x128xf32>,
      %18 = arith.mulf %5, %5 : vector<16x128xf32>
      %cst_14 = arith.constant dense<0.000000e+00> : vector<128xf32>
      %19 = vector.multi_reduction <add>, %18, %cst_14 [0] : vector<16x128xf32> to vector<128xf32>
      %20 = vector.shape_cast %19 : vector<128xf32> to vector<1x128xf32>
      %21 = vector.shape_cast %20 : vector<1x128xf32> to vector<1x1x128xf32>
      %c0_15 = arith.constant 0 : index
      %c0_16 = arith.constant 0 : index
      %c0_17 = arith.constant 0 : index
      %22 = vector.load %arg6[%c0_15, %c0_16, %c0_17] : memref<1x1x128xf32, #tpu.memory_space<vmem>>, vector<1x1x128xf32>
      tpu.vector_store %arg6[%c0_15, %c0_16, %c0_17], %21 {strides = array<i32>} : memref<1x1x128xf32, #tpu.memory_space<vmem>>, vector<1x1x128xf32>,
    } else {
    }
    %c0_i32_8 = arith.constant 0 : i32
    %11 = arith.cmpi eq, %arg0, %c0_i32_8 : i32
    %12 = arith.extui %11 : i1 to i32
    %c0_i32_9 = arith.constant 0 : i32
    %13 = arith.cmpi ne, %12, %c0_i32_9 : i32
    scf.if %13 {
      %c16_i32 = arith.constant 16 : i32
      %14 = arith.muli %arg0, %c16_i32 : i32
      %15 = tpu.iota {dimensions = array<i32: 0>} : vector<16x128xi32>
      %16 = vector.broadcast %14 : i32 to vector<16x128xi32>
      %17 = arith.addi %16, %15 : vector<16x128xi32>
      %c2_i32 = arith.constant 2 : i32
      %18 = vector.broadcast %c2_i32 : i32 to vector<16x128xi32>
      %19 = arith.cmpi slt, %17, %18 : vector<16x128xi32>
      %cst_10 = arith.constant 0.000000e+00 : f32
      %20 = vector.broadcast %cst_10 : f32 to vector<16x128xf32>
      %21 = arith.select %19, %5, %20 : vector<16x128xi1>, vector<16x128xf32>
      %cst_11 = arith.constant dense<0.000000e+00> : vector<128xf32>
      %22 = vector.multi_reduction <add>, %21, %cst_11 [0] : vector<16x128xf32> to vector<128xf32>
      %23 = vector.shape_cast %22 : vector<128xf32> to vector<1x128xf32>
      %24 = vector.shape_cast %23 : vector<1x128xf32> to vector<1x1x128xf32>
      %c0_12 = arith.constant 0 : index
      %c0_13 = arith.constant 0 : index
      %c0_14 = arith.constant 0 : index
      %25 = vector.load %arg5[%c0_12, %c0_13, %c0_14] : memref<1x1x128xf32, #tpu.memory_space<vmem>>, vector<1x1x128xf32>
      tpu.vector_store %arg5[%c0_12, %c0_13, %c0_14], %24 {strides = array<i32>} : memref<1x1x128xf32, #tpu.memory_space<vmem>>, vector<1x1x128xf32>,
      %26 = arith.mulf %21, %21 : vector<16x128xf32>
      %cst_15 = arith.constant dense<0.000000e+00> : vector<128xf32>
      %27 = vector.multi_reduction <add>, %26, %cst_15 [0] : vector<16x128xf32> to vector<128xf32>
      %28 = vector.shape_cast %27 : vector<128xf32> to vector<1x128xf32>
      %29 = vector.shape_cast %28 : vector<1x128xf32> to vector<1x1x128xf32>
      %c0_16 = arith.constant 0 : index
      %c0_17 = arith.constant 0 : index
      %c0_18 = arith.constant 0 : index
      %30 = vector.load %arg6[%c0_16, %c0_17, %c0_18] : memref<1x1x128xf32, #tpu.memory_space<vmem>>, vector<1x1x128xf32>
      tpu.vector_store %arg6[%c0_16, %c0_17, %c0_18], %29 {strides = array<i32>} : memref<1x1x128xf32, #tpu.memory_space<vmem>>, vector<1x1x128xf32>,
    } else {
    }
    return
  }
  func.func @transform_0(%arg0: i32) -> (i32, i32) {
    %c0_i32 = arith.constant 0 : i32
    %c0_i32_0 = arith.constant 0 : i32
    return %arg0, %c0_i32 : i32, i32
  }
  func.func @transform_1(%arg0: i32) -> (i32, i32) {
    %c0_i32 = arith.constant 0 : i32
    %c0_i32_0 = arith.constant 0 : i32
    %c0_i32_1 = arith.constant 0 : i32
    return %c0_i32, %c0_i32_0 : i32, i32
  }
  func.func @transform_2(%arg0: i32) -> (i32, i32) {
    %c0_i32 = arith.constant 0 : i32
    %c0_i32_0 = arith.constant 0 : i32
    %c0_i32_1 = arith.constant 0 : i32
    return %c0_i32, %c0_i32_0 : i32, i32
  }
  func.func @transform_3(%arg0: i32) -> (i32, i32) {
    %c0_i32 = arith.constant 0 : i32
    %c0_i32_0 = arith.constant 0 : i32
    return %arg0, %c0_i32 : i32, i32
  }
  func.func @transform_4(%arg0: i32) -> (i32, i32, i32) {
    %c0_i32 = arith.constant 0 : i32
    %c0_i32_0 = arith.constant 0 : i32
    %c0_i32_1 = arith.constant 0 : i32
    return %arg0, %c0_i32, %c0_i32_0 : i32, i32, i32
  }
  func.func @transform_5(%arg0: i32) -> (i32, i32, i32) {
    %c0_i32 = arith.constant 0 : i32
    %c0_i32_0 = arith.constant 0 : i32
    %c0_i32_1 = arith.constant 0 : i32
    return %arg0, %c0_i32, %c0_i32_0 : i32, i32, i32
  }
}

module attributes {stable_mosaic.version = 11 : i64} {
  func.func @kernel(%arg0: i32, %arg1: memref<1x8x128xf32, #tpu.memory_space<vmem>>, %arg2: memref<128x256xbf16, #tpu.memory_space<vmem>>, %arg3: memref<1x256xf32, #tpu.memory_space<vmem>>, %arg4: memref<1x256xf32, #tpu.memory_space<vmem>>, %arg5: memref<1x1xf32, #tpu.memory_space<vmem>>, %arg6: memref<1x1x1xf32, #tpu.memory_space<vmem>>) attributes {dimension_semantics = [#tpu.dimension_semantics<parallel>], iteration_bounds = array<i64: 2>, scalar_prefetch = 0 : i64, scratch_operands = 0 : i64, tpu.core_type = #tpu.core_type<tc>, window_params = [{transform_indices = @transform_0, window_bounds = array<i64: 1, 8, 128>}, {pipeline_mode = #tpu.pipeline_mode<synchronous>, transform_indices = @transform_1, window_bounds = array<i64: 128, 256>}, {pipeline_mode = #tpu.pipeline_mode<synchronous>, transform_indices = @transform_2, window_bounds = array<i64: 1, 256>}, {pipeline_mode = #tpu.pipeline_mode<synchronous>, transform_indices = @transform_3, window_bounds = array<i64: 1, 256>}, {pipeline_mode = #tpu.pipeline_mode<synchronous>, transform_indices = @transform_4, window_bounds = array<i64: 1, 1>}, {transform_indices = @transform_5, window_bounds = array<i64: 1, 1, 1>}]} {
    %c0 = arith.constant 0 : index
    %c0_0 = arith.constant 0 : index
    %c0_1 = arith.constant 0 : index
    %0 = vector.load %arg1[%c0, %c0_0, %c0_1] : memref<1x8x128xf32, #tpu.memory_space<vmem>>, vector<1x8x128xf32>
    %1 = vector.shape_cast %0 : vector<1x8x128xf32> to vector<8x128xf32>
    %cst = arith.constant dense<0.000000e+00> : vector<128xf32>
    %2 = vector.multi_reduction <add>, %1, %cst [0] : vector<8x128xf32> to vector<128xf32>
    %3 = vector.shape_cast %2 : vector<128xf32> to vector<1x128xf32>
    %cst_2 = arith.constant 1.000000e+00 : f32
    %4 = vector.broadcast %cst_2 : f32 to vector<1x128xf32>
    %5 = arith.mulf %3, %4 : vector<1x128xf32>
    %6 = vector.shape_cast %5 : vector<1x128xf32> to vector<1x128xf32>
    %7 = vector.broadcast %6 : vector<1x128xf32> to vector<8x128xf32>
    %8 = arith.truncf %7 : vector<8x128xf32> to vector<8x128xbf16>
    %c0_3 = arith.constant 0 : index
    %c0_4 = arith.constant 0 : index
    %9 = vector.load %arg2[%c0_3, %c0_4] : memref<128x256xbf16, #tpu.memory_space<vmem>>, vector<128x256xbf16>
    %cst_5 = arith.constant dense<0.000000e+00> : vector<8x256xf32>
    %10 = tpu.matmul %8, %9, %cst_5 {dimension_numbers = #tpu.dot_dimension_numbers<[1], [0], [0], [1], [0, 0, 1, 1], [], []>} : vector<8x128xbf16>, vector<128x256xbf16>, vector<8x256xf32> -> vector<8x256xf32>
    %c0_6 = arith.constant 0 : index
    %c0_7 = arith.constant 0 : index
    %11 = vector.load %arg3[%c0_6, %c0_7] : memref<1x256xf32, #tpu.memory_space<vmem>>, vector<1x256xf32>
    %12 = vector.broadcast %11 : vector<1x256xf32> to vector<8x256xf32>
    %13 = arith.addf %10, %12 : vector<8x256xf32>
    %cst_8 = arith.constant 0.000000e+00 : f32
    %14 = vector.broadcast %cst_8 : f32 to vector<8x256xf32>
    %15 = arith.cmpf oge, %13, %14 : vector<8x256xf32>
    %cst_9 = arith.constant 2.000000e-01 : f32
    %16 = vector.broadcast %cst_9 : f32 to vector<8x256xf32>
    %17 = arith.mulf %16, %13 : vector<8x256xf32>
    %18 = arith.select %15, %13, %17 : vector<8x256xi1>, vector<8x256xf32>
    %c0_10 = arith.constant 0 : index
    %c0_11 = arith.constant 0 : index
    %19 = vector.load %arg4[%c0_10, %c0_11] : memref<1x256xf32, #tpu.memory_space<vmem>>, vector<1x256xf32>
    %20 = vector.broadcast %19 : vector<1x256xf32> to vector<8x256xf32>
    %21 = arith.mulf %18, %20 : vector<8x256xf32>
    %cst_12 = arith.constant dense<0.000000e+00> : vector<8xf32>
    %22 = vector.multi_reduction <add>, %21, %cst_12 [1] : vector<8x256xf32> to vector<8xf32>
    %23 = vector.shape_cast %22 : vector<8xf32> to vector<8x1xf32>
    %c0_13 = arith.constant 0 : index
    %c0_14 = arith.constant 0 : index
    %24 = vector.load %arg5[%c0_13, %c0_14] : memref<1x1xf32, #tpu.memory_space<vmem>>, vector<1x1xf32>
    %25 = vector.broadcast %24 : vector<1x1xf32> to vector<8x1xf32>
    %26 = arith.addf %23, %25 : vector<8x1xf32>
    %27 = vector.extract_strided_slice %26 {offsets = [0, 0], sizes = [1, 1], strides = [1, 1]} : vector<8x1xf32> to vector<1x1xf32>
    %28 = vector.shape_cast %27 : vector<1x1xf32> to vector<1x1x1xf32>
    %c0_15 = arith.constant 0 : index
    %c0_16 = arith.constant 0 : index
    %c0_17 = arith.constant 0 : index
    %29 = vector.load %arg6[%c0_15, %c0_16, %c0_17] : memref<1x1x1xf32, #tpu.memory_space<vmem>>, vector<1x1x1xf32>
    tpu.vector_store %arg6[%c0_15, %c0_16, %c0_17], %28 {strides = array<i32>} : memref<1x1x1xf32, #tpu.memory_space<vmem>>, vector<1x1x1xf32>,
    return
  }
  func.func @transform_0(%arg0: i32) -> (i32, i32, i32) {
    %c0_i32 = arith.constant 0 : i32
    %c0_i32_0 = arith.constant 0 : i32
    %c0_i32_1 = arith.constant 0 : i32
    return %arg0, %c0_i32, %c0_i32_0 : i32, i32, i32
  }
  func.func @transform_1(%arg0: i32) -> (i32, i32) {
    %c0_i32 = arith.constant 0 : i32
    %c0_i32_0 = arith.constant 0 : i32
    %c0_i32_1 = arith.constant 0 : i32
    return %c0_i32, %c0_i32_0 : i32, i32
  }
  func.func @transform_2(%arg0: i32) -> (i32, i32) {
    %c0_i32 = arith.constant 0 : i32
    %c0_i32_0 = arith.constant 0 : i32
    %c0_i32_1 = arith.constant 0 : i32
    return %c0_i32, %c0_i32_0 : i32, i32
  }
  func.func @transform_3(%arg0: i32) -> (i32, i32) {
    %c0_i32 = arith.constant 0 : i32
    %c0_i32_0 = arith.constant 0 : i32
    %c0_i32_1 = arith.constant 0 : i32
    return %c0_i32, %c0_i32_0 : i32, i32
  }
  func.func @transform_4(%arg0: i32) -> (i32, i32) {
    %c0_i32 = arith.constant 0 : i32
    %c0_i32_0 = arith.constant 0 : i32
    %c0_i32_1 = arith.constant 0 : i32
    return %c0_i32, %c0_i32_0 : i32, i32
  }
  func.func @transform_5(%arg0: i32) -> (i32, i32, i32) {
    %c0_i32 = arith.constant 0 : i32
    %c0_i32_0 = arith.constant 0 : i32
    %c0_i32_1 = arith.constant 0 : i32
    return %arg0, %c0_i32, %c0_i32_0 : i32, i32, i32
  }
}

</mosaic_0001>

<llo_original>
// kernel: _lambda_.9
$region0: #{_lambda_.9}
  #allocation0 [shape = 'u32[]', space=smem, size = 0x4, offset = 0x4, fixed_abs, tag = 'smem constant byte address 0x4 - core index']
  #allocation1 [shape = 'u32[72,128]{1,0:T(1,128)}', space=vmem, size = 0x9000, scoped, tag = 'internal scratch']
  %s0 = inlined_call_operand.vmem [shape: bf16[512,32], index: 0, kind: input, shape index: {}]
  %s1 = inlined_call_operand.vmem [shape: bf16[32,16], index: 1, kind: input, shape index: {}]
  %s2 = inlined_call_operand.vmem [shape: f32[1,16], index: 2, kind: input, shape index: {}]
  %s3 = inlined_call_operand.vmem [shape: bf16[512,16], index: 3, kind: output, shape index: {}]
  %s4 = sld [smem:[#allocation0]]
  $region22: #{_lambda_.9} parent=0
    _
  %s6 = ssub.s32 1, %s4
  %s7 = scalar_select 0, %s6, %s4
  // Predicated region
  $region2: #{_lambda_.9} parent=0 // pred_check
    _
  $region3: #{_lambda_.9} parent=0 // pred_check_branch
    %9 = sbr.rel (0) target = $region5
  $region4: #{_lambda_.9} parent=0 // pred_region
    _
  $region5: #{_lambda_.9} parent=0 // pred_fallthru
    _
  // Predicated region
  $region6: #{_lambda_.9} parent=0 // pred_check
    _
  $region7: #{_lambda_.9} parent=0 // pred_check_branch
    %11 = sbr.rel (0) target = $region9
  $region8: #{_lambda_.9} parent=0 // pred_region
    _
  $region9: #{_lambda_.9} parent=0 // pred_fallthru
    _
  // Predicated region
  $region10: #{_lambda_.9} parent=0 // pred_check
    _
  $region11: #{_lambda_.9} parent=0 // pred_check_branch
    %13 = sbr.rel (0) target = $region13
  $region12: #{_lambda_.9} parent=0 // pred_region
    _
  $region13: #{_lambda_.9} parent=0 // pred_fallthru
    _
  %v15 = vld [vmem:[%s0] sm:$0xf]
  %v16 = vld [vmem:[%s0 + $0x4] sm:$0xf]
  %v17 = vld [vmem:[%s0 + $0x8] sm:$0xf]
  %v18 = vld [vmem:[%s0 + $0xc] sm:$0xf]
  %v19 = vld [vmem:[%s0 + $0x10] sm:$0xf]
  %v20 = vld [vmem:[%s0 + $0x14] sm:$0xf]
  %v21 = vld [vmem:[%s0 + $0x18] sm:$0xf]
  %v22 = vld [vmem:[%s0 + $0x1c] sm:$0xf]
  %v23 = vld [vmem:[%s0 + $0x20] sm:$0xf]
  %v24 = vld [vmem:[%s0 + $0x24] sm:$0xf]
  %v25 = vld [vmem:[%s0 + $0x28] sm:$0xf]
  %v26 = vld [vmem:[%s0 + $0x2c] sm:$0xf]
  %v27 = vld [vmem:[%s0 + $0x30] sm:$0xf]
  %v28 = vld [vmem:[%s0 + $0x34] sm:$0xf]
  %v29 = vld [vmem:[%s0 + $0x38] sm:$0xf]
  %v30 = vld [vmem:[%s0 + $0x3c] sm:$0xf]
  %v31 = vld [vmem:[%s0 + $0x40] sm:$0xf]
  %v32 = vld [vmem:[%s0 + $0x44] sm:$0xf]
  %v33 = vld [vmem:[%s0 + $0x48] sm:$0xf]
  %v34 = vld [vmem:[%s0 + $0x4c] sm:$0xf]
  %v35 = vld [vmem:[%s0 + $0x50] sm:$0xf]
  %v36 = vld [vmem:[%s0 + $0x54] sm:$0xf]
  %v37 = vld [vmem:[%s0 + $0x58] sm:$0xf]
  %v38 = vld [vmem:[%s0 + $0x5c] sm:$0xf]
  %v39 = vld [vmem:[%s0 + $0x60] sm:$0xf]
  %v40 = vld [vmem:[%s0 + $0x64] sm:$0xf]
  %v41 = vld [vmem:[%s0 + $0x68] sm:$0xf]
  %v42 = vld [vmem:[%s0 + $0x6c] sm:$0xf]
  %v43 = vld [vmem:[%s0 + $0x70] sm:$0xf]
  %v44 = vld [vmem:[%s0 + $0x74] sm:$0xf]
  %v45 = vld [vmem:[%s0 + $0x78] sm:$0xf]
  %v46 = vld [vmem:[%s0 + $0x7c] sm:$0xf]
  %v47 = vld [vmem:[%s0 + $0x80] sm:$0xf]
  %v48 = vld [vmem:[%s0 + $0x84] sm:$0xf]
  %v49 = vld [vmem:[%s0 + $0x88] sm:$0xf]
  %v50 = vld [vmem:[%s0 + $0x8c] sm:$0xf]
  %v51 = vld [vmem:[%s0 + $0x90] sm:$0xf]
  %v52 = vld [vmem:[%s0 + $0x94] sm:$0xf]
  %v53 = vld [vmem:[%s0 + $0x98] sm:$0xf]
  %v54 = vld [vmem:[%s0 + $0x9c] sm:$0xf]
  %v55 = vld [vmem:[%s0 + $0xa0] sm:$0xf]
  %v56 = vld [vmem:[%s0 + $0xa4] sm:$0xf]
  %v57 = vld [vmem:[%s0 + $0xa8] sm:$0xf]
  %v58 = vld [vmem:[%s0 + $0xac] sm:$0xf]
  %v59 = vld [vmem:[%s0 + $0xb0] sm:$0xf]
  %v60 = vld [vmem:[%s0 + $0xb4] sm:$0xf]
  %v61 = vld [vmem:[%s0 + $0xb8] sm:$0xf]
  %v62 = vld [vmem:[%s0 + $0xbc] sm:$0xf]
  %v63 = vld [vmem:[%s0 + $0xc0] sm:$0xf]
  %v64 = vld [vmem:[%s0 + $0xc4] sm:$0xf]
  %v65 = vld [vmem:[%s0 + $0xc8] sm:$0xf]
  %v66 = vld [vmem:[%s0 + $0xcc] sm:$0xf]
  %v67 = vld [vmem:[%s0 + $0xd0] sm:$0xf]
  %v68 = vld [vmem:[%s0 + $0xd4] sm:$0xf]
  %v69 = vld [vmem:[%s0 + $0xd8] sm:$0xf]
  %v70 = vld [vmem:[%s0 + $0xdc] sm:$0xf]
  %v71 = vld [vmem:[%s0 + $0xe0] sm:$0xf]
  %v72 = vld [vmem:[%s0 + $0xe4] sm:$0xf]
  %v73 = vld [vmem:[%s0 + $0xe8] sm:$0xf]
  %v74 = vld [vmem:[%s0 + $0xec] sm:$0xf]
  %v75 = vld [vmem:[%s0 + $0xf0] sm:$0xf]
  %v76 = vld [vmem:[%s0 + $0xf4] sm:$0xf]
  %v77 = vld [vmem:[%s0 + $0xf8] sm:$0xf]
  %v78 = vld [vmem:[%s0 + $0xfc] sm:$0xf]
  %v79 = vld [vmem:[%s1] sm:$0xf]
  %v80 = vld [vmem:[%s1 + $0x4] sm:$0xf]
  %v81 = vld [vmem:[%s1 + $0x8] sm:$0xf]
  %v82 = vld [vmem:[%s1 + $0xc] sm:$0xf]
  %v83 = vld [vmem:[%s2] sm:$0x1]
  %v85 = vperm.slane %v83, 0
  %v151 = vunpack.c.l.b16 %v15
  %v152 = vunpack.c.l.b16 %v16
  %v153 = vunpack.c.l.b16 %v17
  %v154 = vunpack.c.l.b16 %v18
  %v155 = vunpack.c.l.b16 %v19
  %v156 = vunpack.c.l.b16 %v20
  %v157 = vunpack.c.l.b16 %v21
  %v158 = vunpack.c.l.b16 %v22
  %v159 = vunpack.c.l.b16 %v23
  %v160 = vunpack.c.l.b16 %v24
  %v161 = vunpack.c.l.b16 %v25
  %v162 = vunpack.c.l.b16 %v26
  %v163 = vunpack.c.l.b16 %v27
  %v164 = vunpack.c.l.b16 %v28
  %v165 = vunpack.c.l.b16 %v29
  %v166 = vunpack.c.l.b16 %v30
  %v167 = vunpack.c.l.b16 %v31
  %v168 = vunpack.c.l.b16 %v32
  %v169 = vunpack.c.l.b16 %v33
  %v170 = vunpack.c.l.b16 %v34
  %v171 = vunpack.c.l.b16 %v35
  %v172 = vunpack.c.l.b16 %v36
  %v173 = vunpack.c.l.b16 %v37
  %v174 = vunpack.c.l.b16 %v38
  %v175 = vunpack.c.l.b16 %v39
  %v176 = vunpack.c.l.b16 %v40
  %v177 = vunpack.c.l.b16 %v41
  %v178 = vunpack.c.l.b16 %v42
  %v179 = vunpack.c.l.b16 %v43
  %v180 = vunpack.c.l.b16 %v44
  %v181 = vunpack.c.l.b16 %v45
  %v182 = vunpack.c.l.b16 %v46
  %v183 = vunpack.c.l.b16 %v47
  %v184 = vunpack.c.l.b16 %v48
  %v185 = vunpack.c.l.b16 %v49
  %v186 = vunpack.c.l.b16 %v50
  %v187 = vunpack.c.l.b16 %v51
  %v188 = vunpack.c.l.b16 %v52
  %v189 = vunpack.c.l.b16 %v53
  %v190 = vunpack.c.l.b16 %v54
  %v191 = vunpack.c.l.b16 %v55
  %v192 = vunpack.c.l.b16 %v56
  %v193 = vunpack.c.l.b16 %v57
  %v194 = vunpack.c.l.b16 %v58
  %v195 = vunpack.c.l.b16 %v59
  %v196 = vunpack.c.l.b16 %v60
  %v197 = vunpack.c.l.b16 %v61
  %v198 = vunpack.c.l.b16 %v62
  %v199 = vunpack.c.l.b16 %v63
  %v200 = vunpack.c.l.b16 %v64
  %v201 = vunpack.c.l.b16 %v65
  %v202 = vunpack.c.l.b16 %v66
  %v203 = vunpack.c.l.b16 %v67
  %v204 = vunpack.c.l.b16 %v68
  %v205 = vunpack.c.l.b16 %v69
  %v206 = vunpack.c.l.b16 %v70
  %v207 = vunpack.c.l.b16 %v71
  %v208 = vunpack.c.l.b16 %v72
  %v209 = vunpack.c.l.b16 %v73
  %v210 = vunpack.c.l.b16 %v74
  %v211 = vunpack.c.l.b16 %v75
  %v212 = vunpack.c.l.b16 %v76
  %v213 = vunpack.c.l.b16 %v77
  %v214 = vunpack.c.l.b16 %v78
  %v215 = vpack.c.b16 %v152, %v151
  %v216 = vpack.c.b16 %v154, %v153
  %v217 = vpack.c.b16 %v156, %v155
  %v218 = vpack.c.b16 %v158, %v157
  %v219 = vpack.c.b16 %v160, %v159
  %v220 = vpack.c.b16 %v162, %v161
  %v221 = vpack.c.b16 %v164, %v163
  %v222 = vpack.c.b16 %v166, %v165
  %v223 = vpack.c.b16 %v168, %v167
  %v224 = vpack.c.b16 %v170, %v169
  %v225 = vpack.c.b16 %v172, %v171
  %v226 = vpack.c.b16 %v174, %v173
  %v227 = vpack.c.b16 %v176, %v175
  %v228 = vpack.c.b16 %v178, %v177
  %v229 = vpack.c.b16 %v180, %v179
  %v230 = vpack.c.b16 %v182, %v181
  %v231 = vpack.c.b16 %v184, %v183
  %v232 = vpack.c.b16 %v186, %v185
  %v233 = vpack.c.b16 %v188, %v187
  %v234 = vpack.c.b16 %v190, %v189
  %v235 = vpack.c.b16 %v192, %v191
  %v236 = vpack.c.b16 %v194, %v193
  %v237 = vpack.c.b16 %v196, %v195
  %v238 = vpack.c.b16 %v198, %v197
  %v239 = vpack.c.b16 %v200, %v199
  %v240 = vpack.c.b16 %v202, %v201
  %v241 = vpack.c.b16 %v204, %v203
  %v242 = vpack.c.b16 %v206, %v205
  %v243 = vpack.c.b16 %v208, %v207
  %v244 = vpack.c.b16 %v210, %v209
  %v245 = vpack.c.b16 %v212, %v211
  %v246 = vpack.c.b16 %v214, %v213
  %v251 = vunpack.c.l.b16 %v79
  %v252 = vunpack.c.l.b16 %v80
  %v253 = vunpack.c.l.b16 %v81
  %v254 = vunpack.c.l.b16 %v82
  %v255 = vpack.c.b16 %v252, %v251
  %v256 = vpack.c.b16 %v254, %v253
  %vm259 = vcmask 261120
  %v261 = vsel %vm259, %v215, 0
  %v264 = vsel %vm259, %v216, 0
  %v267 = vsel %vm259, %v217, 0
  %v270 = vsel %vm259, %v218, 0
  %v273 = vsel %vm259, %v219, 0
  %v276 = vsel %vm259, %v220, 0
  %v279 = vsel %vm259, %v221, 0
  %v282 = vsel %vm259, %v222, 0
  %v285 = vsel %vm259, %v223, 0
  %v288 = vsel %vm259, %v224, 0
  %v291 = vsel %vm259, %v225, 0
  %v294 = vsel %vm259, %v226, 0
  %v297 = vsel %vm259, %v227, 0
  %v300 = vsel %vm259, %v228, 0
  %v303 = vsel %vm259, %v229, 0
  %v306 = vsel %vm259, %v230, 0
  %v309 = vsel %vm259, %v231, 0
  %v312 = vsel %vm259, %v232, 0
  %v315 = vsel %vm259, %v233, 0
  %v318 = vsel %vm259, %v234, 0
  %v321 = vsel %vm259, %v235, 0
  %v324 = vsel %vm259, %v236, 0
  %v327 = vsel %vm259, %v237, 0
  %v330 = vsel %vm259, %v238, 0
  %v333 = vsel %vm259, %v239, 0
  %v336 = vsel %vm259, %v240, 0
  %v339 = vsel %vm259, %v241, 0
  %v342 = vsel %vm259, %v242, 0
  %v345 = vsel %vm259, %v243, 0
  %v348 = vsel %vm259, %v244, 0
  %v351 = vsel %vm259, %v245, 0
  %v354 = vsel %vm259, %v246, 0
  %356 = vmatpush.bf16.msra.mxu0 0
  %357 = vmatpush.bf16.msra.mxu0 0
  %358 = vmatpush.bf16.msra.mxu0 0
  %359 = vmatpush.bf16.msra.mxu0 0
  %360 = vmatpush.bf16.msra.mxu0 0
  %361 = vmatpush.bf16.msra.mxu0 0
  %362 = vmatpush.bf16.msra.mxu0 %v256
  %363 = vmatpush.bf16.msra.mxu0 %v255
  %364 = vmatmul.bf16.gmra.mxu0 %v261
  %v365 = vpop.f32.mrf.mxu0
  %v366 = vadd.f32 %v85, %v365
  %v367 = vpop.f32.mrf.mxu0
  %v368 = vadd.f32 %v85, %v367
  %369 = vmatmul.bf16.gmra.mxu0 %v264
  %v370 = vpop.f32.mrf.mxu0
  %v371 = vadd.f32 %v85, %v370
  %v372 = vpop.f32.mrf.mxu0
  %v373 = vadd.f32 %v85, %v372
  %374 = vmatmul.bf16.gmra.mxu0 %v267
  %v375 = vpop.f32.mrf.mxu0
  %v376 = vadd.f32 %v85, %v375
  %v377 = vpop.f32.mrf.mxu0
  %v378 = vadd.f32 %v85, %v377
  %379 = vmatmul.bf16.gmra.mxu0 %v270
  %v380 = vpop.f32.mrf.mxu0
  %v381 = vadd.f32 %v85, %v380
  %v382 = vpop.f32.mrf.mxu0
  %v383 = vadd.f32 %v85, %v382
  %384 = vmatmul.bf16.gmra.mxu0 %v273
  %v385 = vpop.f32.mrf.mxu0
  %v386 = vadd.f32 %v85, %v385
  %v387 = vpop.f32.mrf.mxu0
  %v388 = vadd.f32 %v85, %v387
  %389 = vmatmul.bf16.gmra.mxu0 %v276
  %v390 = vpop.f32.mrf.mxu0
  %v391 = vadd.f32 %v85, %v390
  %v392 = vpop.f32.mrf.mxu0
  %v393 = vadd.f32 %v85, %v392
  %394 = vmatmul.bf16.gmra.mxu0 %v279
  %v395 = vpop.f32.mrf.mxu0
  %v396 = vadd.f32 %v85, %v395
  %v397 = vpop.f32.mrf.mxu0
  %v398 = vadd.f32 %v85, %v397
  %399 = vmatmul.bf16.gmra.mxu0 %v282
  %v400 = vpop.f32.mrf.mxu0
  %v401 = vadd.f32 %v85, %v400
  %v402 = vpop.f32.mrf.mxu0
  %v403 = vadd.f32 %v85, %v402
  %404 = vmatmul.bf16.gmra.mxu0 %v285
  %v405 = vpop.f32.mrf.mxu0
  %v406 = vadd.f32 %v85, %v405
  %v407 = vpop.f32.mrf.mxu0
  %v408 = vadd.f32 %v85, %v407
  %409 = vmatmul.bf16.gmra.mxu0 %v288
  %v410 = vpop.f32.mrf.mxu0
  %v411 = vadd.f32 %v85, %v410
  %v412 = vpop.f32.mrf.mxu0
  %v413 = vadd.f32 %v85, %v412
  %414 = vmatmul.bf16.gmra.mxu0 %v291
  %v415 = vpop.f32.mrf.mxu0
  %v416 = vadd.f32 %v85, %v415
  %v417 = vpop.f32.mrf.mxu0
  %v418 = vadd.f32 %v85, %v417
  %419 = vmatmul.bf16.gmra.mxu0 %v294
  %v420 = vpop.f32.mrf.mxu0
  %v421 = vadd.f32 %v85, %v420
  %v422 = vpop.f32.mrf.mxu0
  %v423 = vadd.f32 %v85, %v422
  %424 = vmatmul.bf16.gmra.mxu0 %v297
  %v425 = vpop.f32.mrf.mxu0
  %v426 = vadd.f32 %v85, %v425
  %v427 = vpop.f32.mrf.mxu0
  %v428 = vadd.f32 %v85, %v427
  %429 = vmatmul.bf16.gmra.mxu0 %v300
  %v430 = vpop.f32.mrf.mxu0
  %v431 = vadd.f32 %v85, %v430
  %v432 = vpop.f32.mrf.mxu0
  %v433 = vadd.f32 %v85, %v432
  %434 = vmatmul.bf16.gmra.mxu0 %v303
  %v435 = vpop.f32.mrf.mxu0
  %v436 = vadd.f32 %v85, %v435
  %v437 = vpop.f32.mrf.mxu0
  %v438 = vadd.f32 %v85, %v437
  %439 = vmatmul.bf16.gmra.mxu0 %v306
  %v440 = vpop.f32.mrf.mxu0
  %v441 = vadd.f32 %v85, %v440
  %v442 = vpop.f32.mrf.mxu0
  %v443 = vadd.f32 %v85, %v442
  %444 = vmatmul.bf16.gmra.mxu0 %v309
  %v445 = vpop.f32.mrf.mxu0
  %v446 = vadd.f32 %v85, %v445
  %v447 = vpop.f32.mrf.mxu0
  %v448 = vadd.f32 %v85, %v447
  %449 = vmatmul.bf16.gmra.mxu0 %v312
  %v450 = vpop.f32.mrf.mxu0
  %v451 = vadd.f32 %v85, %v450
  %v452 = vpop.f32.mrf.mxu0
  %v453 = vadd.f32 %v85, %v452
  %454 = vmatmul.bf16.gmra.mxu0 %v315
  %v455 = vpop.f32.mrf.mxu0
  %v456 = vadd.f32 %v85, %v455
  %v457 = vpop.f32.mrf.mxu0
  %v458 = vadd.f32 %v85, %v457
  %459 = vmatmul.bf16.gmra.mxu0 %v318
  %v460 = vpop.f32.mrf.mxu0
  %v461 = vadd.f32 %v85, %v460
  %v462 = vpop.f32.mrf.mxu0
  %v463 = vadd.f32 %v85, %v462
  %464 = vmatmul.bf16.gmra.mxu0 %v321
  %v465 = vpop.f32.mrf.mxu0
  %v466 = vadd.f32 %v85, %v465
  %v467 = vpop.f32.mrf.mxu0
  %v468 = vadd.f32 %v85, %v467
  %469 = vmatmul.bf16.gmra.mxu0 %v324
  %v470 = vpop.f32.mrf.mxu0
  %v471 = vadd.f32 %v85, %v470
  %v472 = vpop.f32.mrf.mxu0
  %v473 = vadd.f32 %v85, %v472
  %474 = vmatmul.bf16.gmra.mxu0 %v327
  %v475 = vpop.f32.mrf.mxu0
  %v476 = vadd.f32 %v85, %v475
  %v477 = vpop.f32.mrf.mxu0
  %v478 = vadd.f32 %v85, %v477
  %479 = vmatmul.bf16.gmra.mxu0 %v330
  %v480 = vpop.f32.mrf.mxu0
  %v481 = vadd.f32 %v85, %v480
  %v482 = vpop.f32.mrf.mxu0
  %v483 = vadd.f32 %v85, %v482
  %484 = vmatmul.bf16.gmra.mxu0 %v333
  %v485 = vpop.f32.mrf.mxu0
  %v486 = vadd.f32 %v85, %v485
  %v487 = vpop.f32.mrf.mxu0
  %v488 = vadd.f32 %v85, %v487
  %489 = vmatmul.bf16.gmra.mxu0 %v336
  %v490 = vpop.f32.mrf.mxu0
  %v491 = vadd.f32 %v85, %v490
  %v492 = vpop.f32.mrf.mxu0
  %v493 = vadd.f32 %v85, %v492
  %494 = vmatmul.bf16.gmra.mxu0 %v339
  %v495 = vpop.f32.mrf.mxu0
  %v496 = vadd.f32 %v85, %v495
  %v497 = vpop.f32.mrf.mxu0
  %v498 = vadd.f32 %v85, %v497
  %499 = vmatmul.bf16.gmra.mxu0 %v342
  %v500 = vpop.f32.mrf.mxu0
  %v501 = vadd.f32 %v85, %v500
  %v502 = vpop.f32.mrf.mxu0
  %v503 = vadd.f32 %v85, %v502
  %504 = vmatmul.bf16.gmra.mxu0 %v345
  %v505 = vpop.f32.mrf.mxu0
  %v506 = vadd.f32 %v85, %v505
  %v507 = vpop.f32.mrf.mxu0
  %v508 = vadd.f32 %v85, %v507
  %509 = vmatmul.bf16.gmra.mxu0 %v348
  %v510 = vpop.f32.mrf.mxu0
  %v511 = vadd.f32 %v85, %v510
  %v512 = vpop.f32.mrf.mxu0
  %v513 = vadd.f32 %v85, %v512
  %514 = vmatmul.bf16.gmra.mxu0 %v351
  %v515 = vpop.f32.mrf.mxu0
  %v516 = vadd.f32 %v85, %v515
  %v517 = vpop.f32.mrf.mxu0
  %v518 = vadd.f32 %v85, %v517
  %519 = vmatmul.bf16.gmra.mxu0 %v354
  %v520 = vpop.f32.mrf.mxu0
  %v521 = vadd.f32 %v85, %v520
  %v522 = vpop.f32.mrf.mxu0
  %v523 = vadd.f32 %v85, %v522
  %524 = vdwg.mxu0
  %vm525 = vcmp.ge.f32.partialorder %v366, 0.0
  %vm526 = vcmp.ge.f32.partialorder %v368, 0.0
  %vm527 = vcmp.ge.f32.partialorder %v371, 0.0
  %vm528 = vcmp.ge.f32.partialorder %v373, 0.0
  %vm529 = vcmp.ge.f32.partialorder %v376, 0.0
  %vm530 = vcmp.ge.f32.partialorder %v378, 0.0
  %vm531 = vcmp.ge.f32.partialorder %v381, 0.0
  %vm532 = vcmp.ge.f32.partialorder %v383, 0.0
  %vm533 = vcmp.ge.f32.partialorder %v386, 0.0
  %vm534 = vcmp.ge.f32.partialorder %v388, 0.0
  %vm535 = vcmp.ge.f32.partialorder %v391, 0.0
  %vm536 = vcmp.ge.f32.partialorder %v393, 0.0
  %vm537 = vcmp.ge.f32.partialorder %v396, 0.0
  %vm538 = vcmp.ge.f32.partialorder %v398, 0.0
  %vm539 = vcmp.ge.f32.partialorder %v401, 0.0
  %vm540 = vcmp.ge.f32.partialorder %v403, 0.0
  %vm541 = vcmp.ge.f32.partialorder %v406, 0.0
  %vm542 = vcmp.ge.f32.partialorder %v408, 0.0
  %vm543 = vcmp.ge.f32.partialorder %v411, 0.0
  %vm544 = vcmp.ge.f32.partialorder %v413, 0.0
  %vm545 = vcmp.ge.f32.partialorder %v416, 0.0
  %vm546 = vcmp.ge.f32.partialorder %v418, 0.0
  %vm547 = vcmp.ge.f32.partialorder %v421, 0.0
  %vm548 = vcmp.ge.f32.partialorder %v423, 0.0
  %vm549 = vcmp.ge.f32.partialorder %v426, 0.0
  %vm550 = vcmp.ge.f32.partialorder %v428, 0.0
  %vm551 = vcmp.ge.f32.partialorder %v431, 0.0
  %vm552 = vcmp.ge.f32.partialorder %v433, 0.0
  %vm553 = vcmp.ge.f32.partialorder %v436, 0.0
  %vm554 = vcmp.ge.f32.partialorder %v438, 0.0
  %vm555 = vcmp.ge.f32.partialorder %v441, 0.0
  %vm556 = vcmp.ge.f32.partialorder %v443, 0.0
  %vm557 = vcmp.ge.f32.partialorder %v446, 0.0
  %vm558 = vcmp.ge.f32.partialorder %v448, 0.0
  %vm559 = vcmp.ge.f32.partialorder %v451, 0.0
  %vm560 = vcmp.ge.f32.partialorder %v453, 0.0
  %vm561 = vcmp.ge.f32.partialorder %v456, 0.0
  %vm562 = vcmp.ge.f32.partialorder %v458, 0.0
  %vm563 = vcmp.ge.f32.partialorder %v461, 0.0
  %vm564 = vcmp.ge.f32.partialorder %v463, 0.0
  %vm565 = vcmp.ge.f32.partialorder %v466, 0.0
  %vm566 = vcmp.ge.f32.partialorder %v468, 0.0
  %vm567 = vcmp.ge.f32.partialorder %v471, 0.0
  %vm568 = vcmp.ge.f32.partialorder %v473, 0.0
  %vm569 = vcmp.ge.f32.partialorder %v476, 0.0
  %vm570 = vcmp.ge.f32.partialorder %v478, 0.0
  %vm571 = vcmp.ge.f32.partialorder %v481, 0.0
  %vm572 = vcmp.ge.f32.partialorder %v483, 0.0
  %vm573 = vcmp.ge.f32.partialorder %v486, 0.0
  %vm574 = vcmp.ge.f32.partialorder %v488, 0.0
  %vm575 = vcmp.ge.f32.partialorder %v491, 0.0
  %vm576 = vcmp.ge.f32.partialorder %v493, 0.0
  %vm577 = vcmp.ge.f32.partialorder %v496, 0.0
  %vm578 = vcmp.ge.f32.partialorder %v498, 0.0
  %vm579 = vcmp.ge.f32.partialorder %v501, 0.0
  %vm580 = vcmp.ge.f32.partialorder %v503, 0.0
  %vm581 = vcmp.ge.f32.partialorder %v506, 0.0
  %vm582 = vcmp.ge.f32.partialorder %v508, 0.0
  %vm583 = vcmp.ge.f32.partialorder %v511, 0.0
  %vm584 = vcmp.ge.f32.partialorder %v513, 0.0
  %vm585 = vcmp.ge.f32.partialorder %v516, 0.0
  %vm586 = vcmp.ge.f32.partialorder %v518, 0.0
  %vm587 = vcmp.ge.f32.partialorder %v521, 0.0
  %vm588 = vcmp.ge.f32.partialorder %v523, 0.0
  %v589 = vmul.f32 %v366, 0.2
  %v590 = vmul.f32 %v368, 0.2
  %v591 = vmul.f32 %v371, 0.2
  %v592 = vmul.f32 %v373, 0.2
  %v593 = vmul.f32 %v376, 0.2
  %v594 = vmul.f32 %v378, 0.2
  %v595 = vmul.f32 %v381, 0.2
  %v596 = vmul.f32 %v383, 0.2
  %v597 = vmul.f32 %v386, 0.2
  %v598 = vmul.f32 %v388, 0.2
  %v599 = vmul.f32 %v391, 0.2
  %v600 = vmul.f32 %v393, 0.2
  %v601 = vmul.f32 %v396, 0.2
  %v602 = vmul.f32 %v398, 0.2
  %v603 = vmul.f32 %v401, 0.2
  %v604 = vmul.f32 %v403, 0.2
  %v605 = vmul.f32 %v406, 0.2
  %v606 = vmul.f32 %v408, 0.2
  %v607 = vmul.f32 %v411, 0.2
  %v608 = vmul.f32 %v413, 0.2
  %v609 = vmul.f32 %v416, 0.2
  %v610 = vmul.f32 %v418, 0.2
  %v611 = vmul.f32 %v421, 0.2
  %v612 = vmul.f32 %v423, 0.2
  %v613 = vmul.f32 %v426, 0.2
  %v614 = vmul.f32 %v428, 0.2
  %v615 = vmul.f32 %v431, 0.2
  %v616 = vmul.f32 %v433, 0.2
  %v617 = vmul.f32 %v436, 0.2
  %v618 = vmul.f32 %v438, 0.2
  %v619 = vmul.f32 %v441, 0.2
  %v620 = vmul.f32 %v443, 0.2
  %v621 = vmul.f32 %v446, 0.2
  %v622 = vmul.f32 %v448, 0.2
  %v623 = vmul.f32 %v451, 0.2
  %v624 = vmul.f32 %v453, 0.2
  %v625 = vmul.f32 %v456, 0.2
  %v626 = vmul.f32 %v458, 0.2
  %v627 = vmul.f32 %v461, 0.2
  %v628 = vmul.f32 %v463, 0.2
  %v629 = vmul.f32 %v466, 0.2
  %v630 = vmul.f32 %v468, 0.2
  %v631 = vmul.f32 %v471, 0.2
  %v632 = vmul.f32 %v473, 0.2
  %v633 = vmul.f32 %v476, 0.2
  %v634 = vmul.f32 %v478, 0.2
  %v635 = vmul.f32 %v481, 0.2
  %v636 = vmul.f32 %v483, 0.2
  %v637 = vmul.f32 %v486, 0.2
  %v638 = vmul.f32 %v488, 0.2
  %v639 = vmul.f32 %v491, 0.2
  %v640 = vmul.f32 %v493, 0.2
  %v641 = vmul.f32 %v496, 0.2
  %v642 = vmul.f32 %v498, 0.2
  %v643 = vmul.f32 %v501, 0.2
  %v644 = vmul.f32 %v503, 0.2
  %v645 = vmul.f32 %v506, 0.2
  %v646 = vmul.f32 %v508, 0.2
  %v647 = vmul.f32 %v511, 0.2
  %v648 = vmul.f32 %v513, 0.2
  %v649 = vmul.f32 %v516, 0.2
  %v650 = vmul.f32 %v518, 0.2
  %v651 = vmul.f32 %v521, 0.2
  %v652 = vmul.f32 %v523, 0.2
  %v653 = vsel %vm525, %v366, %v589
  %v654 = vsel %vm526, %v368, %v590
  %v655 = vsel %vm527, %v371, %v591
  %v656 = vsel %vm528, %v373, %v592
  %v657 = vsel %vm529, %v376, %v593
  %v658 = vsel %vm530, %v378, %v594
  %v659 = vsel %vm531, %v381, %v595
  %v660 = vsel %vm532, %v383, %v596
  %v661 = vsel %vm533, %v386, %v597
  %v662 = vsel %vm534, %v388, %v598
  %v663 = vsel %vm535, %v391, %v599
  %v664 = vsel %vm536, %v393, %v600
  %v665 = vsel %vm537, %v396, %v601
  %v666 = vsel %vm538, %v398, %v602
  %v667 = vsel %vm539, %v401, %v603
  %v668 = vsel %vm540, %v403, %v604
  %v669 = vsel %vm541, %v406, %v605
  %v670 = vsel %vm542, %v408, %v606
  %v671 = vsel %vm543, %v411, %v607
  %v672 = vsel %vm544, %v413, %v608
  %v673 = vsel %vm545, %v416, %v609
  %v674 = vsel %vm546, %v418, %v610
  %v675 = vsel %vm547, %v421, %v611
  %v676 = vsel %vm548, %v423, %v612
  %v677 = vsel %vm549, %v426, %v613
  %v678 = vsel %vm550, %v428, %v614
  %v679 = vsel %vm551, %v431, %v615
  %v680 = vsel %vm552, %v433, %v616
  %v681 = vsel %vm553, %v436, %v617
  %v682 = vsel %vm554, %v438, %v618
  %v683 = vsel %vm555, %v441, %v619
  %v684 = vsel %vm556, %v443, %v620
  %v685 = vsel %vm557, %v446, %v621
  %v686 = vsel %vm558, %v448, %v622
  %v687 = vsel %vm559, %v451, %v623
  %v688 = vsel %vm560, %v453, %v624
  %v689 = vsel %vm561, %v456, %v625
  %v690 = vsel %vm562, %v458, %v626
  %v691 = vsel %vm563, %v461, %v627
  %v692 = vsel %vm564, %v463, %v628
  %v693 = vsel %vm565, %v466, %v629
  %v694 = vsel %vm566, %v468, %v630
  %v695 = vsel %vm567, %v471, %v631
  %v696 = vsel %vm568, %v473, %v632
  %v697 = vsel %vm569, %v476, %v633
  %v698 = vsel %vm570, %v478, %v634
  %v699 = vsel %vm571, %v481, %v635
  %v700 = vsel %vm572, %v483, %v636
  %v701 = vsel %vm573, %v486, %v637
  %v702 = vsel %vm574, %v488, %v638
  %v703 = vsel %vm575, %v491, %v639
  %v704 = vsel %vm576, %v493, %v640
  %v705 = vsel %vm577, %v496, %v641
  %v706 = vsel %vm578, %v498, %v642
  %v707 = vsel %vm579, %v501, %v643
  %v708 = vsel %vm580, %v503, %v644
  %v709 = vsel %vm581, %v506, %v645
  %v710 = vsel %vm582, %v508, %v646
  %v711 = vsel %vm583, %v511, %v647
  %v712 = vsel %vm584, %v513, %v648
  %v713 = vsel %vm585, %v516, %v649
  %v714 = vsel %vm586, %v518, %v650
  %v715 = vsel %vm587, %v521, %v651
  %v716 = vsel %vm588, %v523, %v652
  %v717 = vpack.c.bf16 %v653, %v653
  %v718 = vpack.c.bf16 %v654, %v654
  %v719 = vpack.c.bf16 %v655, %v655
  %v720 = vpack.c.bf16 %v656, %v656
  %v721 = vpack.c.bf16 %v657, %v657
  %v722 = vpack.c.bf16 %v658, %v658
  %v723 = vpack.c.bf16 %v659, %v659
  %v724 = vpack.c.bf16 %v660, %v660
  %v725 = vpack.c.bf16 %v661, %v661
  %v726 = vpack.c.bf16 %v662, %v662
  %v727 = vpack.c.bf16 %v663, %v663
  %v728 = vpack.c.bf16 %v664, %v664
  %v729 = vpack.c.bf16 %v665, %v665
  %v730 = vpack.c.bf16 %v666, %v666
  %v731 = vpack.c.bf16 %v667, %v667
  %v732 = vpack.c.bf16 %v668, %v668
  %v733 = vpack.c.bf16 %v669, %v669
  %v734 = vpack.c.bf16 %v670, %v670
  %v735 = vpack.c.bf16 %v671, %v671
  %v736 = vpack.c.bf16 %v672, %v672
  %v737 = vpack.c.bf16 %v673, %v673
  %v738 = vpack.c.bf16 %v674, %v674
  %v739 = vpack.c.bf16 %v675, %v675
  %v740 = vpack.c.bf16 %v676, %v676
  %v741 = vpack.c.bf16 %v677, %v677
  %v742 = vpack.c.bf16 %v678, %v678
  %v743 = vpack.c.bf16 %v679, %v679
  %v744 = vpack.c.bf16 %v680, %v680
  %v745 = vpack.c.bf16 %v681, %v681
  %v746 = vpack.c.bf16 %v682, %v682
  %v747 = vpack.c.bf16 %v683, %v683
  %v748 = vpack.c.bf16 %v684, %v684
  %v749 = vpack.c.bf16 %v685, %v685
  %v750 = vpack.c.bf16 %v686, %v686
  %v751 = vpack.c.bf16 %v687, %v687
  %v752 = vpack.c.bf16 %v688, %v688
  %v753 = vpack.c.bf16 %v689, %v689
  %v754 = vpack.c.bf16 %v690, %v690
  %v755 = vpack.c.bf16 %v691, %v691
  %v756 = vpack.c.bf16 %v692, %v692
  %v757 = vpack.c.bf16 %v693, %v693
  %v758 = vpack.c.bf16 %v694, %v694
  %v759 = vpack.c.bf16 %v695, %v695
  %v760 = vpack.c.bf16 %v696, %v696
  %v761 = vpack.c.bf16 %v697, %v697
  %v762 = vpack.c.bf16 %v698, %v698
  %v763 = vpack.c.bf16 %v699, %v699
  %v764 = vpack.c.bf16 %v700, %v700
  %v765 = vpack.c.bf16 %v701, %v701
  %v766 = vpack.c.bf16 %v702, %v702
  %v767 = vpack.c.bf16 %v703, %v703
  %v768 = vpack.c.bf16 %v704, %v704
  %v769 = vpack.c.bf16 %v705, %v705
  %v770 = vpack.c.bf16 %v706, %v706
  %v771 = vpack.c.bf16 %v707, %v707
  %v772 = vpack.c.bf16 %v708, %v708
  %v773 = vpack.c.bf16 %v709, %v709
  %v774 = vpack.c.bf16 %v710, %v710
  %v775 = vpack.c.bf16 %v711, %v711
  %v776 = vpack.c.bf16 %v712, %v712
  %v777 = vpack.c.bf16 %v713, %v713
  %v778 = vpack.c.bf16 %v714, %v714
  %v779 = vpack.c.bf16 %v715, %v715
  %v780 = vpack.c.bf16 %v716, %v716
  %vm781 = vcmask 125952
  %782 = vst.msk [vmem:[%s3] sm:$0xf] %vm781, %v717
  %783 = vst.msk [vmem:[%s3 + $0x4] sm:$0xf] %vm781, %v718
  %784 = vst.msk [vmem:[%s3 + $0x8] sm:$0xf] %vm781, %v719
  %785 = vst.msk [vmem:[%s3 + $0xc] sm:$0xf] %vm781, %v720
  %786 = vst.msk [vmem:[%s3 + $0x10] sm:$0xf] %vm781, %v721
  %787 = vst.msk [vmem:[%s3 + $0x14] sm:$0xf] %vm781, %v722
  %788 = vst.msk [vmem:[%s3 + $0x18] sm:$0xf] %vm781, %v723
  %789 = vst.msk [vmem:[%s3 + $0x1c] sm:$0xf] %vm781, %v724
  %790 = vst.msk [vmem:[%s3 + $0x20] sm:$0xf] %vm781, %v725
  %791 = vst.msk [vmem:[%s3 + $0x24] sm:$0xf] %vm781, %v726
  %792 = vst.msk [vmem:[%s3 + $0x28] sm:$0xf] %vm781, %v727
  %793 = vst.msk [vmem:[%s3 + $0x2c] sm:$0xf] %vm781, %v728
  %794 = vst.msk [vmem:[%s3 + $0x30] sm:$0xf] %vm781, %v729
  %795 = vst.msk [vmem:[%s3 + $0x34] sm:$0xf] %vm781, %v730
  %796 = vst.msk [vmem:[%s3 + $0x38] sm:$0xf] %vm781, %v731
  %797 = vst.msk [vmem:[%s3 + $0x3c] sm:$0xf] %vm781, %v732
  %798 = vst.msk [vmem:[%s3 + $0x40] sm:$0xf] %vm781, %v733
  %799 = vst.msk [vmem:[%s3 + $0x44] sm:$0xf] %vm781, %v734
  %800 = vst.msk [vmem:[%s3 + $0x48] sm:$0xf] %vm781, %v735
  %801 = vst.msk [vmem:[%s3 + $0x4c] sm:$0xf] %vm781, %v736
  %802 = vst.msk [vmem:[%s3 + $0x50] sm:$0xf] %vm781, %v737
  %803 = vst.msk [vmem:[%s3 + $0x54] sm:$0xf] %vm781, %v738
  %804 = vst.msk [vmem:[%s3 + $0x58] sm:$0xf] %vm781, %v739
  %805 = vst.msk [vmem:[%s3 + $0x5c] sm:$0xf] %vm781, %v740
  %806 = vst.msk [vmem:[%s3 + $0x60] sm:$0xf] %vm781, %v741
  %807 = vst.msk [vmem:[%s3 + $0x64] sm:$0xf] %vm781, %v742
  %808 = vst.msk [vmem:[%s3 + $0x68] sm:$0xf] %vm781, %v743
  %809 = vst.msk [vmem:[%s3 + $0x6c] sm:$0xf] %vm781, %v744
  %810 = vst.msk [vmem:[%s3 + $0x70] sm:$0xf] %vm781, %v745
  %811 = vst.msk [vmem:[%s3 + $0x74] sm:$0xf] %vm781, %v746
  %812 = vst.msk [vmem:[%s3 + $0x78] sm:$0xf] %vm781, %v747
  %813 = vst.msk [vmem:[%s3 + $0x7c] sm:$0xf] %vm781, %v748
  %814 = vst.msk [vmem:[%s3 + $0x80] sm:$0xf] %vm781, %v749
  %815 = vst.msk [vmem:[%s3 + $0x84] sm:$0xf] %vm781, %v750
  %816 = vst.msk [vmem:[%s3 + $0x88] sm:$0xf] %vm781, %v751
  %817 = vst.msk [vmem:[%s3 + $0x8c] sm:$0xf] %vm781, %v752
  %818 = vst.msk [vmem:[%s3 + $0x90] sm:$0xf] %vm781, %v753
  %819 = vst.msk [vmem:[%s3 + $0x94] sm:$0xf] %vm781, %v754
  %820 = vst.msk [vmem:[%s3 + $0x98] sm:$0xf] %vm781, %v755
  %821 = vst.msk [vmem:[%s3 + $0x9c] sm:$0xf] %vm781, %v756
  %822 = vst.msk [vmem:[%s3 + $0xa0] sm:$0xf] %vm781, %v757
  %823 = vst.msk [vmem:[%s3 + $0xa4] sm:$0xf] %vm781, %v758
  %824 = vst.msk [vmem:[%s3 + $0xa8] sm:$0xf] %vm781, %v759
  %825 = vst.msk [vmem:[%s3 + $0xac] sm:$0xf] %vm781, %v760
  %826 = vst.msk [vmem:[%s3 + $0xb0] sm:$0xf] %vm781, %v761
  %827 = vst.msk [vmem:[%s3 + $0xb4] sm:$0xf] %vm781, %v762
  %828 = vst.msk [vmem:[%s3 + $0xb8] sm:$0xf] %vm781, %v763
  %829 = vst.msk [vmem:[%s3 + $0xbc] sm:$0xf] %vm781, %v764
  %830 = vst.msk [vmem:[%s3 + $0xc0] sm:$0xf] %vm781, %v765
  %831 = vst.msk [vmem:[%s3 + $0xc4] sm:$0xf] %vm781, %v766
  %832 = vst.msk [vmem:[%s3 + $0xc8] sm:$0xf] %vm781, %v767
  %833 = vst.msk [vmem:[%s3 + $0xcc] sm:$0xf] %vm781, %v768
  %834 = vst.msk [vmem:[%s3 + $0xd0] sm:$0xf] %vm781, %v769
  %835 = vst.msk [vmem:[%s3 + $0xd4] sm:$0xf] %vm781, %v770
  %836 = vst.msk [vmem:[%s3 + $0xd8] sm:$0xf] %vm781, %v771
  %837 = vst.msk [vmem:[%s3 + $0xdc] sm:$0xf] %vm781, %v772
  %838 = vst.msk [vmem:[%s3 + $0xe0] sm:$0xf] %vm781, %v773
  %839 = vst.msk [vmem:[%s3 + $0xe4] sm:$0xf] %vm781, %v774
  %840 = vst.msk [vmem:[%s3 + $0xe8] sm:$0xf] %vm781, %v775
  %841 = vst.msk [vmem:[%s3 + $0xec] sm:$0xf] %vm781, %v776
  %842 = vst.msk [vmem:[%s3 + $0xf0] sm:$0xf] %vm781, %v777
  %843 = vst.msk [vmem:[%s3 + $0xf4] sm:$0xf] %vm781, %v778
  %844 = vst.msk [vmem:[%s3 + $0xf8] sm:$0xf] %vm781, %v779
  %845 = vst.msk [vmem:[%s3 + $0xfc] sm:$0xf] %vm781, %v780
  // Predicated region
  $region14: #{_lambda_.9} parent=0 // pred_check
    _
  $region15: #{_lambda_.9} parent=0 // pred_check_branch
    %847 = sbr.rel (0) target = $region17
  $region16: #{_lambda_.9} parent=0 // pred_region
    _
  $region17: #{_lambda_.9} parent=0 // pred_fallthru
    _
  // Predicated region
  $region18: #{_lambda_.9} parent=0 // pred_check
    _
  $region19: #{_lambda_.9} parent=0 // pred_check_branch
    %849 = sbr.rel (0) target = $region21
  $region20: #{_lambda_.9} parent=0 // pred_region
    _
  $region21: #{_lambda_.9} parent=0 // pred_fallthru
    _

// kernel: _lambda_.10
$region0: #{_lambda_.10}
  #allocation0 [shape = 'u32[]', space=smem, size = 0x4, offset = 0x4, fixed_abs, tag = 'smem constant byte address 0x4 - core index']
  #allocation1 [shape = 'u32[72,128]{1,0:T(1,128)}', space=vmem, size = 0x9000, scoped, tag = 'internal scratch']
  %s0 = inlined_call_operand.vmem [shape: bf16[128,144], index: 0, kind: input, shape index: {}]
  %s1 = inlined_call_operand.vmem [shape: bf16[144,16], index: 1, kind: input, shape index: {}]
  %s2 = inlined_call_operand.vmem [shape: f32[1,16], index: 2, kind: input, shape index: {}]
  %s3 = inlined_call_operand.vmem [shape: bf16[128,16], index: 3, kind: output, shape index: {0}]
  %s4 = inlined_call_operand.vmem [shape: f32[1,1,16], index: 4, kind: output, shape index: {1}]
  %s5 = inlined_call_operand.vmem [shape: f32[1,1,16], index: 5, kind: output, shape index: {2}]
  %6 = xla_tuple %s3, %s4, %s5
  %s7 = sld [smem:[#allocation0]]
  $region46: #{_lambda_.10} parent=0
    _
  %s9 = ssub.s32 1, %s7
  %s10 = scalar_select 0, %s9, %s7
  // Predicated region
  $region2: #{_lambda_.10} parent=0 // pred_check
    _
  $region3: #{_lambda_.10} parent=0 // pred_check_branch
    %12 = sbr.rel (0) target = $region5
  $region4: #{_lambda_.10} parent=0 // pred_region
    _
  $region5: #{_lambda_.10} parent=0 // pred_fallthru
    _
  // Predicated region
  $region6: #{_lambda_.10} parent=0 // pred_check
    _
  $region7: #{_lambda_.10} parent=0 // pred_check_branch
    %14 = sbr.rel (0) target = $region9
  $region8: #{_lambda_.10} parent=0 // pred_region
    _
  $region9: #{_lambda_.10} parent=0 // pred_fallthru
    _
  // Predicated region
  $region10: #{_lambda_.10} parent=0 // pred_check
    _
  $region11: #{_lambda_.10} parent=0 // pred_check_branch
    %16 = sbr.rel (0) target = $region13
  $region12: #{_lambda_.10} parent=0 // pred_region
    _
  $region13: #{_lambda_.10} parent=0 // pred_fallthru
    _
  %v18 = vld [vmem:[%s0] sm:$0xff]
  %v19 = vld [vmem:[%s0 + $0x8] sm:$0xff]
  %v20 = vld [vmem:[%s0 + $0x10] sm:$0xff]
  %v21 = vld [vmem:[%s0 + $0x18] sm:$0xff]
  %v22 = vld [vmem:[%s0 + $0x20] sm:$0xff]
  %v23 = vld [vmem:[%s0 + $0x28] sm:$0xff]
  %v24 = vld [vmem:[%s0 + $0x30] sm:$0xff]
  %v25 = vld [vmem:[%s0 + $0x38] sm:$0xff]
  %v26 = vld [vmem:[%s0 + $0x40] sm:$0xff]
  %v27 = vld [vmem:[%s0 + $0x48] sm:$0xff]
  %v28 = vld [vmem:[%s0 + $0x50] sm:$0xff]
  %v29 = vld [vmem:[%s0 + $0x58] sm:$0xff]
  %v30 = vld [vmem:[%s0 + $0x60] sm:$0xff]
  %v31 = vld [vmem:[%s0 + $0x68] sm:$0xff]
  %v32 = vld [vmem:[%s0 + $0x70] sm:$0xff]
  %v33 = vld [vmem:[%s0 + $0x78] sm:$0xff]
  %v34 = vld [vmem:[%s1] sm:$0xf]
  %v35 = vld [vmem:[%s1 + $0x4] sm:$0xf]
  %v36 = vld [vmem:[%s1 + $0x8] sm:$0xf]
  %v37 = vld [vmem:[%s1 + $0xc] sm:$0xf]
  %v38 = vld [vmem:[%s1 + $0x10] sm:$0xf]
  %v39 = vld [vmem:[%s1 + $0x14] sm:$0xf]
  %v40 = vld [vmem:[%s1 + $0x18] sm:$0xf]
  %v41 = vld [vmem:[%s1 + $0x1c] sm:$0xf]
  %v42 = vld [vmem:[%s1 + $0x20] sm:$0xf]
  %v43 = vld [vmem:[%s1 + $0x24] sm:$0xf]
  %v44 = vld [vmem:[%s1 + $0x28] sm:$0xf]
  %v45 = vld [vmem:[%s1 + $0x2c] sm:$0xf]
  %v46 = vld [vmem:[%s1 + $0x30] sm:$0xf]
  %v47 = vld [vmem:[%s1 + $0x34] sm:$0xf]
  %v48 = vld [vmem:[%s1 + $0x38] sm:$0xf]
  %v49 = vld [vmem:[%s1 + $0x3c] sm:$0xf]
  %v50 = vld [vmem:[%s1 + $0x40] sm:$0xf]
  %v51 = vld [vmem:[%s1 + $0x44] sm:$0xf]
  %v52 = vld [vmem:[%s2] sm:$0x1]
  %v54 = vperm.slane %v52, 0
  %v72 = vunpack.c.l.b16 %v18
  %v73 = vunpack.c.h.b16 %v18
  %v74 = vunpack.c.l.b16 %v19
  %v75 = vunpack.c.h.b16 %v19
  %v76 = vunpack.c.l.b16 %v20
  %v77 = vunpack.c.h.b16 %v20
  %v78 = vunpack.c.l.b16 %v21
  %v79 = vunpack.c.h.b16 %v21
  %v80 = vunpack.c.l.b16 %v22
  %v81 = vunpack.c.h.b16 %v22
  %v82 = vunpack.c.l.b16 %v23
  %v83 = vunpack.c.h.b16 %v23
  %v84 = vunpack.c.l.b16 %v24
  %v85 = vunpack.c.h.b16 %v24
  %v86 = vunpack.c.l.b16 %v25
  %v87 = vunpack.c.h.b16 %v25
  %v88 = vunpack.c.l.b16 %v26
  %v89 = vunpack.c.h.b16 %v26
  %v90 = vunpack.c.l.b16 %v27
  %v91 = vunpack.c.h.b16 %v27
  %v92 = vunpack.c.l.b16 %v28
  %v93 = vunpack.c.h.b16 %v28
  %v94 = vunpack.c.l.b16 %v29
  %v95 = vunpack.c.h.b16 %v29
  %v96 = vunpack.c.l.b16 %v30
  %v97 = vunpack.c.h.b16 %v30
  %v98 = vunpack.c.l.b16 %v31
  %v99 = vunpack.c.h.b16 %v31
  %v100 = vunpack.c.l.b16 %v32
  %v101 = vunpack.c.h.b16 %v32
  %v102 = vunpack.c.l.b16 %v33
  %v103 = vunpack.c.h.b16 %v33
  %v104 = vpack.c.b16 %v74, %v72
  %v105 = vpack.c.b16 %v75, %v73
  %v106 = vpack.c.b16 %v78, %v76
  %v107 = vpack.c.b16 %v79, %v77
  %v108 = vpack.c.b16 %v82, %v80
  %v109 = vpack.c.b16 %v83, %v81
  %v110 = vpack.c.b16 %v86, %v84
  %v111 = vpack.c.b16 %v87, %v85
  %v112 = vpack.c.b16 %v90, %v88
  %v113 = vpack.c.b16 %v91, %v89
  %v114 = vpack.c.b16 %v94, %v92
  %v115 = vpack.c.b16 %v95, %v93
  %v116 = vpack.c.b16 %v98, %v96
  %v117 = vpack.c.b16 %v99, %v97
  %v118 = vpack.c.b16 %v102, %v100
  %v119 = vpack.c.b16 %v103, %v101
  %v146 = vunpack.c.l.b16 %v34
  %v147 = vunpack.c.l.b16 %v35
  %v148 = vunpack.c.l.b16 %v36
  %v149 = vunpack.c.l.b16 %v37
  %v150 = vunpack.c.l.b16 %v38
  %v151 = vunpack.c.l.b16 %v39
  %v152 = vunpack.c.l.b16 %v40
  %v153 = vunpack.c.l.b16 %v41
  %v154 = vunpack.c.l.b16 %v42
  %v155 = vunpack.c.l.b16 %v43
  %v156 = vunpack.c.l.b16 %v44
  %v157 = vunpack.c.l.b16 %v45
  %v158 = vunpack.c.l.b16 %v46
  %v159 = vunpack.c.l.b16 %v47
  %v160 = vunpack.c.l.b16 %v48
  %v161 = vunpack.c.l.b16 %v49
  %v162 = vunpack.c.l.b16 %v50
  %v163 = vunpack.c.l.b16 %v51
  %v164 = vpack.c.b16 %v147, %v146
  %v165 = vpack.c.b16 %v149, %v148
  %v166 = vpack.c.b16 %v151, %v150
  %v167 = vpack.c.b16 %v153, %v152
  %v168 = vpack.c.b16 %v155, %v154
  %v169 = vpack.c.b16 %v157, %v156
  %v170 = vpack.c.b16 %v159, %v158
  %v171 = vpack.c.b16 %v161, %v160
  %v172 = vpack.c.b16 %v163, %v162
  %vm182 = vcmask 130048
  %v184 = vsel %vm182, %v105, 0
  %v187 = vsel %vm182, %v107, 0
  %v190 = vsel %vm182, %v109, 0
  %v193 = vsel %vm182, %v111, 0
  %v196 = vsel %vm182, %v113, 0
  %v199 = vsel %vm182, %v115, 0
  %v202 = vsel %vm182, %v117, 0
  %v205 = vsel %vm182, %v119, 0
  %207 = vmatpush.bf16.msra.mxu0 %v171
  %208 = vmatpush.bf16.msra.mxu0 %v170
  %209 = vmatpush.bf16.msra.mxu0 %v169
  %210 = vmatpush.bf16.msra.mxu0 %v168
  %211 = vmatpush.bf16.msra.mxu0 %v167
  %212 = vmatpush.bf16.msra.mxu0 %v166
  %213 = vmatpush.bf16.msra.mxu0 %v165
  %214 = vmatpush.bf16.msra.mxu0 %v164
  %215 = vmatmul.bf16.gmra.mxu0 %v104
  %v216 = vpop.f32.mrf.mxu0
  %v217 = vadd.f32 %v54, %v216
  %v218 = vpop.f32.mrf.mxu0
  %v219 = vadd.f32 %v54, %v218
  %220 = vmatmul.bf16.gmra.mxu0 %v106
  %v221 = vpop.f32.mrf.mxu0
  %v222 = vadd.f32 %v54, %v221
  %v223 = vpop.f32.mrf.mxu0
  %v224 = vadd.f32 %v54, %v223
  %225 = vmatmul.bf16.gmra.mxu0 %v108
  %v226 = vpop.f32.mrf.mxu0
  %v227 = vadd.f32 %v54, %v226
  %v228 = vpop.f32.mrf.mxu0
  %v229 = vadd.f32 %v54, %v228
  %230 = vmatmul.bf16.gmra.mxu0 %v110
  %v231 = vpop.f32.mrf.mxu0
  %v232 = vadd.f32 %v54, %v231
  %v233 = vpop.f32.mrf.mxu0
  %v234 = vadd.f32 %v54, %v233
  %235 = vmatmul.bf16.gmra.mxu0 %v112
  %v236 = vpop.f32.mrf.mxu0
  %v237 = vadd.f32 %v54, %v236
  %v238 = vpop.f32.mrf.mxu0
  %v239 = vadd.f32 %v54, %v238
  %240 = vmatmul.bf16.gmra.mxu0 %v114
  %v241 = vpop.f32.mrf.mxu0
  %v242 = vadd.f32 %v54, %v241
  %v243 = vpop.f32.mrf.mxu0
  %v244 = vadd.f32 %v54, %v243
  %245 = vmatmul.bf16.gmra.mxu0 %v116
  %v246 = vpop.f32.mrf.mxu0
  %v247 = vadd.f32 %v54, %v246
  %v248 = vpop.f32.mrf.mxu0
  %v249 = vadd.f32 %v54, %v248
  %250 = vmatmul.bf16.gmra.mxu0 %v118
  %v251 = vpop.f32.mrf.mxu0
  %v252 = vadd.f32 %v54, %v251
  %v253 = vpop.f32.mrf.mxu0
  %v254 = vadd.f32 %v54, %v253
  %255 = vdwg.mxu0
  %256 = vmatpush.bf16.msra.mxu0 0
  %257 = vmatpush.bf16.msra.mxu0 0
  %258 = vmatpush.bf16.msra.mxu0 0
  %259 = vmatpush.bf16.msra.mxu0 0
  %260 = vmatpush.bf16.msra.mxu0 0
  %261 = vmatpush.bf16.msra.mxu0 0
  %262 = vmatpush.bf16.msra.mxu0 0
  %263 = vmatpush.bf16.msra.mxu0 %v172
  %264 = vmatmul.bf16.gmra.mxu0 %v184
  %v265 = vpop.f32.mrf.mxu0
  %v266 = vadd.f32 %v217, %v265
  %v267 = vpop.f32.mrf.mxu0
  %v268 = vadd.f32 %v219, %v267
  %269 = vmatmul.bf16.gmra.mxu0 %v187
  %v270 = vpop.f32.mrf.mxu0
  %v271 = vadd.f32 %v222, %v270
  %v272 = vpop.f32.mrf.mxu0
  %v273 = vadd.f32 %v224, %v272
  %274 = vmatmul.bf16.gmra.mxu0 %v190
  %v275 = vpop.f32.mrf.mxu0
  %v276 = vadd.f32 %v227, %v275
  %v277 = vpop.f32.mrf.mxu0
  %v278 = vadd.f32 %v229, %v277
  %279 = vmatmul.bf16.gmra.mxu0 %v193
  %v280 = vpop.f32.mrf.mxu0
  %v281 = vadd.f32 %v232, %v280
  %v282 = vpop.f32.mrf.mxu0
  %v283 = vadd.f32 %v234, %v282
  %284 = vmatmul.bf16.gmra.mxu0 %v196
  %v285 = vpop.f32.mrf.mxu0
  %v286 = vadd.f32 %v237, %v285
  %v287 = vpop.f32.mrf.mxu0
  %v288 = vadd.f32 %v239, %v287
  %289 = vmatmul.bf16.gmra.mxu0 %v199
  %v290 = vpop.f32.mrf.mxu0
  %v291 = vadd.f32 %v242, %v290
  %v292 = vpop.f32.mrf.mxu0
  %v293 = vadd.f32 %v244, %v292
  %294 = vmatmul.bf16.gmra.mxu0 %v202
  %v295 = vpop.f32.mrf.mxu0
  %v296 = vadd.f32 %v247, %v295
  %v297 = vpop.f32.mrf.mxu0
  %v298 = vadd.f32 %v249, %v297
  %299 = vmatmul.bf16.gmra.mxu0 %v205
  %v300 = vpop.f32.mrf.mxu0
  %v301 = vadd.f32 %v252, %v300
  %v302 = vpop.f32.mrf.mxu0
  %v303 = vadd.f32 %v254, %v302
  %304 = vdwg.mxu0
  %v305 = vpack.c.bf16 %v266, %v266
  %v306 = vpack.c.bf16 %v268, %v268
  %v307 = vpack.c.bf16 %v271, %v271
  %v308 = vpack.c.bf16 %v273, %v273
  %v309 = vpack.c.bf16 %v276, %v276
  %v310 = vpack.c.bf16 %v278, %v278
  %v311 = vpack.c.bf16 %v281, %v281
  %v312 = vpack.c.bf16 %v283, %v283
  %v313 = vpack.c.bf16 %v286, %v286
  %v314 = vpack.c.bf16 %v288, %v288
  %v315 = vpack.c.bf16 %v291, %v291
  %v316 = vpack.c.bf16 %v293, %v293
  %v317 = vpack.c.bf16 %v296, %v296
  %v318 = vpack.c.bf16 %v298, %v298
  %v319 = vpack.c.bf16 %v301, %v301
  %v320 = vpack.c.bf16 %v303, %v303
  %vm321 = vcmask 125952
  %322 = vst.msk [vmem:[%s3] sm:$0xf] %vm321, %v305
  %323 = vst.msk [vmem:[%s3 + $0x4] sm:$0xf] %vm321, %v306
  %324 = vst.msk [vmem:[%s3 + $0x8] sm:$0xf] %vm321, %v307
  %325 = vst.msk [vmem:[%s3 + $0xc] sm:$0xf] %vm321, %v308
  %326 = vst.msk [vmem:[%s3 + $0x10] sm:$0xf] %vm321, %v309
  %327 = vst.msk [vmem:[%s3 + $0x14] sm:$0xf] %vm321, %v310
  %328 = vst.msk [vmem:[%s3 + $0x18] sm:$0xf] %vm321, %v311
  %329 = vst.msk [vmem:[%s3 + $0x1c] sm:$0xf] %vm321, %v312
  %330 = vst.msk [vmem:[%s3 + $0x20] sm:$0xf] %vm321, %v313
  %331 = vst.msk [vmem:[%s3 + $0x24] sm:$0xf] %vm321, %v314
  %332 = vst.msk [vmem:[%s3 + $0x28] sm:$0xf] %vm321, %v315
  %333 = vst.msk [vmem:[%s3 + $0x2c] sm:$0xf] %vm321, %v316
  %334 = vst.msk [vmem:[%s3 + $0x30] sm:$0xf] %vm321, %v317
  %335 = vst.msk [vmem:[%s3 + $0x34] sm:$0xf] %vm321, %v318
  %336 = vst.msk [vmem:[%s3 + $0x38] sm:$0xf] %vm321, %v319
  %337 = vst.msk [vmem:[%s3 + $0x3c] sm:$0xf] %vm321, %v320
  %p338 = scmp.lt.s32.totalorder 0, 0
  // Predicated region
  $region14: #{_lambda_.10} parent=0 // pred_check
    %p339 = pneg %p338
  $region15: #{_lambda_.10} parent=0 // pred_check_branch
    %341 = sbr.rel (%p339) target = $region17
  $region16: #{_lambda_.10} parent=0 // pred_region
    %v342 = vsel %vm182, %v266, 0.0
    %v343 = vsel %vm182, %v268, 0.0
    %v344 = vadd.f32 %v342, %v343
    %v345 = vsel %vm182, %v271, 0.0
    %v346 = vadd.f32 %v344, %v345
    %v347 = vsel %vm182, %v273, 0.0
    %v348 = vadd.f32 %v346, %v347
    %v349 = vsel %vm182, %v276, 0.0
    %v350 = vadd.f32 %v348, %v349
    %v351 = vsel %vm182, %v278, 0.0
    %v352 = vadd.f32 %v350, %v351
    %v353 = vsel %vm182, %v281, 0.0
    %v354 = vadd.f32 %v352, %v353
    %v355 = vsel %vm182, %v283, 0.0
    %v356 = vadd.f32 %v354, %v355
    %v357 = vsel %vm182, %v286, 0.0
    %v358 = vadd.f32 %v356, %v357
    %v359 = vsel %vm182, %v288, 0.0
    %v360 = vadd.f32 %v358, %v359
    %v361 = vsel %vm182, %v291, 0.0
    %v362 = vadd.f32 %v360, %v361
    %v363 = vsel %vm182, %v293, 0.0
    %v364 = vadd.f32 %v362, %v363
    %v365 = vsel %vm182, %v296, 0.0
    %v366 = vadd.f32 %v364, %v365
    %v367 = vsel %vm182, %v298, 0.0
    %v368 = vadd.f32 %v366, %v367
    %v369 = vsel %vm182, %v301, 0.0
    %v370 = vadd.f32 %v368, %v369
    %v371 = vsel %vm182, %v303, 0.0
    %v372 = vadd.f32 %v370, %v371
    %v373 = vrot.slane %v372, 4
    %v374 = vadd.f32 %v372, %v373
    %v375 = vrot.slane %v374, 2
    %v376 = vadd.f32 %v374, %v375
    %v377 = vrot.slane %v376, 1
    %v378 = vadd.f32 %v376, %v377
    %vm379 = vcmask 122880
    %380 = vst.msk [vmem:[%s4] sm:$0x1] %vm379, %v378
    %v381 = vmul.f32 %v266, %v266
    %v382 = vmul.f32 %v268, %v268
    %v383 = vmul.f32 %v271, %v271
    %v384 = vmul.f32 %v273, %v273
    %v385 = vmul.f32 %v276, %v276
    %v386 = vmul.f32 %v278, %v278
    %v387 = vmul.f32 %v281, %v281
    %v388 = vmul.f32 %v283, %v283
    %v389 = vmul.f32 %v286, %v286
    %v390 = vmul.f32 %v288, %v288
    %v391 = vmul.f32 %v291, %v291
    %v392 = vmul.f32 %v293, %v293
    %v393 = vmul.f32 %v296, %v296
    %v394 = vmul.f32 %v298, %v298
    %v395 = vmul.f32 %v301, %v301
    %v396 = vmul.f32 %v303, %v303
    %v397 = vsel %vm182, %v381, 0.0
    %v398 = vsel %vm182, %v382, 0.0
    %v399 = vadd.f32 %v397, %v398
    %v400 = vsel %vm182, %v383, 0.0
    %v401 = vadd.f32 %v399, %v400
    %v402 = vsel %vm182, %v384, 0.0
    %v403 = vadd.f32 %v401, %v402
    %v404 = vsel %vm182, %v385, 0.0
    %v405 = vadd.f32 %v403, %v404
    %v406 = vsel %vm182, %v386, 0.0
    %v407 = vadd.f32 %v405, %v406
    %v408 = vsel %vm182, %v387, 0.0
    %v409 = vadd.f32 %v407, %v408
    %v410 = vsel %vm182, %v388, 0.0
    %v411 = vadd.f32 %v409, %v410
    %v412 = vsel %vm182, %v389, 0.0
    %v413 = vadd.f32 %v411, %v412
    %v414 = vsel %vm182, %v390, 0.0
    %v415 = vadd.f32 %v413, %v414
    %v416 = vsel %vm182, %v391, 0.0
    %v417 = vadd.f32 %v415, %v416
    %v418 = vsel %vm182, %v392, 0.0
    %v419 = vadd.f32 %v417, %v418
    %v420 = vsel %vm182, %v393, 0.0
    %v421 = vadd.f32 %v419, %v420
    %v422 = vsel %vm182, %v394, 0.0
    %v423 = vadd.f32 %v421, %v422
    %v424 = vsel %vm182, %v395, 0.0
    %v425 = vadd.f32 %v423, %v424
    %v426 = vsel %vm182, %v396, 0.0
    %v427 = vadd.f32 %v425, %v426
    %v428 = vrot.slane %v427, 4
    %v429 = vadd.f32 %v427, %v428
    %v430 = vrot.slane %v429, 2
    %v431 = vadd.f32 %v429, %v430
    %v432 = vrot.slane %v431, 1
    %v433 = vadd.f32 %v431, %v432
    %434 = vst.msk [vmem:[%s5] sm:$0x1] %vm379, %v433
  $region17: #{_lambda_.10} parent=0 // pred_fallthru
    _
  %p435 = scmp.eq.s32.totalorder 0, 0
  // Predicated region
  $region18: #{_lambda_.10} parent=0 // pred_check
    %p436 = pneg %p435
  $region19: #{_lambda_.10} parent=0 // pred_check_branch
    %438 = sbr.rel (%p436) target = $region21
  $region20: #{_lambda_.10} parent=0 // pred_region
    %s439 = smul.u32 0, 128
    %v440 = vlaneseq
    %v441 = vshrl.u32 %v440, 7
    %v442 = vadd.s32 %v441, 8
    %v443 = vadd.s32 %v441, 16
    %v444 = vadd.s32 %v441, 24
    %v445 = vadd.s32 %v441, 32
    %v446 = vadd.s32 %v441, 40
    %v447 = vadd.s32 %v441, 48
    %v448 = vadd.s32 %v441, 56
    %v449 = vadd.s32 %v441, 64
    %v450 = vadd.s32 %v441, 72
    %v451 = vadd.s32 %v441, 80
    %v452 = vadd.s32 %v441, 88
    %v453 = vadd.s32 %v441, 96
    %v454 = vadd.s32 %v441, 104
    %v455 = vadd.s32 %v441, 112
    %v456 = vadd.s32 %v441, 120
    %v457 = vstv %s439
    %v458 = vadd.s32 %v457, %v441
    %v459 = vadd.s32 %v457, %v442
    %v460 = vadd.s32 %v457, %v443
    %v461 = vadd.s32 %v457, %v444
    %v462 = vadd.s32 %v457, %v445
    %v463 = vadd.s32 %v457, %v446
    %v464 = vadd.s32 %v457, %v447
    %v465 = vadd.s32 %v457, %v448
    %v466 = vadd.s32 %v457, %v449
    %v467 = vadd.s32 %v457, %v450
    %v468 = vadd.s32 %v457, %v451
    %v469 = vadd.s32 %v457, %v452
    %v470 = vadd.s32 %v457, %v453
    %v471 = vadd.s32 %v457, %v454
    %v472 = vadd.s32 %v457, %v455
    %v473 = vadd.s32 %v457, %v456
    %vm474 = vcmp.lt.s32.totalorder %v458, 128
    %vm475 = vcmp.lt.s32.totalorder %v459, 128
    %vm476 = vcmp.lt.s32.totalorder %v460, 128
    %vm477 = vcmp.lt.s32.totalorder %v461, 128
    %vm478 = vcmp.lt.s32.totalorder %v462, 128
    %vm479 = vcmp.lt.s32.totalorder %v463, 128
    %vm480 = vcmp.lt.s32.totalorder %v464, 128
    %vm481 = vcmp.lt.s32.totalorder %v465, 128
    %vm482 = vcmp.lt.s32.totalorder %v466, 128
    %vm483 = vcmp.lt.s32.totalorder %v467, 128
    %vm484 = vcmp.lt.s32.totalorder %v468, 128
    %vm485 = vcmp.lt.s32.totalorder %v469, 128
    %vm486 = vcmp.lt.s32.totalorder %v470, 128
    %vm487 = vcmp.lt.s32.totalorder %v471, 128
    %vm488 = vcmp.lt.s32.totalorder %v472, 128
    %vm489 = vcmp.lt.s32.totalorder %v473, 128
    %v490 = vsel %vm474, %v266, 0.0
    %v491 = vsel %vm475, %v268, 0.0
    %v492 = vsel %vm476, %v271, 0.0
    %v493 = vsel %vm477, %v273, 0.0
    %v494 = vsel %vm478, %v276, 0.0
    %v495 = vsel %vm479, %v278, 0.0
    %v496 = vsel %vm480, %v281, 0.0
    %v497 = vsel %vm481, %v283, 0.0
    %v498 = vsel %vm482, %v286, 0.0
    %v499 = vsel %vm483, %v288, 0.0
    %v500 = vsel %vm484, %v291, 0.0
    %v501 = vsel %vm485, %v293, 0.0
    %v502 = vsel %vm486, %v296, 0.0
    %v503 = vsel %vm487, %v298, 0.0
    %v504 = vsel %vm488, %v301, 0.0
    %v505 = vsel %vm489, %v303, 0.0
    %v506 = vsel %vm182, %v490, 0.0
    %v507 = vsel %vm182, %v491, 0.0
    %v508 = vadd.f32 %v506, %v507
    %v509 = vsel %vm182, %v492, 0.0
    %v510 = vadd.f32 %v508, %v509
    %v511 = vsel %vm182, %v493, 0.0
    %v512 = vadd.f32 %v510, %v511
    %v513 = vsel %vm182, %v494, 0.0
    %v514 = vadd.f32 %v512, %v513
    %v515 = vsel %vm182, %v495, 0.0
    %v516 = vadd.f32 %v514, %v515
    %v517 = vsel %vm182, %v496, 0.0
    %v518 = vadd.f32 %v516, %v517
    %v519 = vsel %vm182, %v497, 0.0
    %v520 = vadd.f32 %v518, %v519
    %v521 = vsel %vm182, %v498, 0.0
    %v522 = vadd.f32 %v520, %v521
    %v523 = vsel %vm182, %v499, 0.0
    %v524 = vadd.f32 %v522, %v523
    %v525 = vsel %vm182, %v500, 0.0
    %v526 = vadd.f32 %v524, %v525
    %v527 = vsel %vm182, %v501, 0.0
    %v528 = vadd.f32 %v526, %v527
    %v529 = vsel %vm182, %v502, 0.0
    %v530 = vadd.f32 %v528, %v529
    %v531 = vsel %vm182, %v503, 0.0
    %v532 = vadd.f32 %v530, %v531
    %v533 = vsel %vm182, %v504, 0.0
    %v534 = vadd.f32 %v532, %v533
    %v535 = vsel %vm182, %v505, 0.0
    %v536 = vadd.f32 %v534, %v535
    %v537 = vrot.slane %v536, 4
    %v538 = vadd.f32 %v536, %v537
    %v539 = vrot.slane %v538, 2
    %v540 = vadd.f32 %v538, %v539
    %v541 = vrot.slane %v540, 1
    %v542 = vadd.f32 %v540, %v541
    %vm543 = vcmask 122880
    %544 = vst.msk [vmem:[%s4] sm:$0x1] %vm543, %v542
    %v545 = vmul.f32 %v490, %v490
    %v546 = vmul.f32 %v491, %v491
    %v547 = vmul.f32 %v492, %v492
    %v548 = vmul.f32 %v493, %v493
    %v549 = vmul.f32 %v494, %v494
    %v550 = vmul.f32 %v495, %v495
    %v551 = vmul.f32 %v496, %v496
    %v552 = vmul.f32 %v497, %v497
    %v553 = vmul.f32 %v498, %v498
    %v554 = vmul.f32 %v499, %v499
    %v555 = vmul.f32 %v500, %v500
    %v556 = vmul.f32 %v501, %v501
    %v557 = vmul.f32 %v502, %v502
    %v558 = vmul.f32 %v503, %v503
    %v559 = vmul.f32 %v504, %v504
    %v560 = vmul.f32 %v505, %v505
    %v561 = vsel %vm182, %v545, 0.0
    %v562 = vsel %vm182, %v546, 0.0
    %v563 = vadd.f32 %v561, %v562
    %v564 = vsel %vm182, %v547, 0.0
    %v565 = vadd.f32 %v563, %v564
    %v566 = vsel %vm182, %v548, 0.0
    %v567 = vadd.f32 %v565, %v566
    %v568 = vsel %vm182, %v549, 0.0
    %v569 = vadd.f32 %v567, %v568
    %v570 = vsel %vm182, %v550, 0.0
    %v571 = vadd.f32 %v569, %v570
    %v572 = vsel %vm182, %v551, 0.0
    %v573 = vadd.f32 %v571, %v572
    %v574 = vsel %vm182, %v552, 0.0
    %v575 = vadd.f32 %v573, %v574
    %v576 = vsel %vm182, %v553, 0.0
    %v577 = vadd.f32 %v575, %v576
    %v578 = vsel %vm182, %v554, 0.0
    %v579 = vadd.f32 %v577, %v578
    %v580 = vsel %vm182, %v555, 0.0
    %v581 = vadd.f32 %v579, %v580
    %v582 = vsel %vm182, %v556, 0.0
    %v583 = vadd.f32 %v581, %v582
    %v584 = vsel %vm182, %v557, 0.0
    %v585 = vadd.f32 %v583, %v584
    %v586 = vsel %vm182, %v558, 0.0
    %v587 = vadd.f32 %v585, %v586
    %v588 = vsel %vm182, %v559, 0.0
    %v589 = vadd.f32 %v587, %v588
    %v590 = vsel %vm182, %v560, 0.0
    %v591 = vadd.f32 %v589, %v590
    %v592 = vrot.slane %v591, 4
    %v593 = vadd.f32 %v591, %v592
    %v594 = vrot.slane %v593, 2
    %v595 = vadd.f32 %v593, %v594
    %v596 = vrot.slane %v595, 1
    %v597 = vadd.f32 %v595, %v596
    %598 = vst.msk [vmem:[%s5] sm:$0x1] %vm543, %v597
  $region21: #{_lambda_.10} parent=0 // pred_fallthru
    _
  // Predicated region
  $region22: #{_lambda_.10} parent=0 // pred_check
    _
  $region23: #{_lambda_.10} parent=0 // pred_check_branch
    %600 = sbr.rel (0) target = $region25
  $region24: #{_lambda_.10} parent=0 // pred_region
    _
  $region25: #{_lambda_.10} parent=0 // pred_fallthru
    _
  // Predicated region
  $region26: #{_lambda_.10} parent=0 // pred_check
    _
  $region27: #{_lambda_.10} parent=0 // pred_check_branch
    %602 = sbr.rel (0) target = $region29
  $region28: #{_lambda_.10} parent=0 // pred_region
    _
  $region29: #{_lambda_.10} parent=0 // pred_fallthru
    _
  // Predicated region
  $region30: #{_lambda_.10} parent=0 // pred_check
    _
  $region31: #{_lambda_.10} parent=0 // pred_check_branch
    %604 = sbr.rel (0) target = $region33
  $region32: #{_lambda_.10} parent=0 // pred_region
    _
  $region33: #{_lambda_.10} parent=0 // pred_fallthru
    _
  // Predicated region
  $region34: #{_lambda_.10} parent=0 // pred_check
    _
  $region35: #{_lambda_.10} parent=0 // pred_check_branch
    %606 = sbr.rel (0) target = $region37
  $region36: #{_lambda_.10} parent=0 // pred_region
    _
  $region37: #{_lambda_.10} parent=0 // pred_fallthru
    _
  // Predicated region
  $region38: #{_lambda_.10} parent=0 // pred_check
    _
  $region39: #{_lambda_.10} parent=0 // pred_check_branch
    %608 = sbr.rel (0) target = $region41
  $region40: #{_lambda_.10} parent=0 // pred_region
    _
  $region41: #{_lambda_.10} parent=0 // pred_fallthru
    _
  // Predicated region
  $region42: #{_lambda_.10} parent=0 // pred_check
    _
  $region43: #{_lambda_.10} parent=0 // pred_check_branch
    %610 = sbr.rel (0) target = $region45
  $region44: #{_lambda_.10} parent=0 // pred_region
    _
  $region45: #{_lambda_.10} parent=0 // pred_fallthru
    _

// kernel: _lambda_.11
$region0: #{_lambda_.11}
  #allocation0 [shape = 'u32[]', space=smem, size = 0x4, offset = 0x4, fixed_abs, tag = 'smem constant byte address 0x4 - core index']
  #allocation1 [shape = 'u32[72,128]{1,0:T(1,128)}', space=vmem, size = 0x9000, scoped, tag = 'internal scratch']
  %s0 = inlined_call_operand.vmem [shape: bf16[128,144], index: 0, kind: input, shape index: {}]
  %s1 = inlined_call_operand.vmem [shape: bf16[144,32], index: 1, kind: input, shape index: {}]
  %s2 = inlined_call_operand.vmem [shape: f32[1,32], index: 2, kind: input, shape index: {}]
  %s3 = inlined_call_operand.vmem [shape: bf16[128,32], index: 3, kind: output, shape index: {0}]
  %s4 = inlined_call_operand.vmem [shape: f32[1,1,32], index: 4, kind: output, shape index: {1}]
  %s5 = inlined_call_operand.vmem [shape: f32[1,1,32], index: 5, kind: output, shape index: {2}]
  %6 = xla_tuple %s3, %s4, %s5
  %s7 = sld [smem:[#allocation0]]
  $region46: #{_lambda_.11} parent=0
    _
  %s9 = ssub.s32 1, %s7
  %s10 = scalar_select 0, %s9, %s7
  // Predicated region
  $region2: #{_lambda_.11} parent=0 // pred_check
    _
  $region3: #{_lambda_.11} parent=0 // pred_check_branch
    %12 = sbr.rel (0) target = $region5
  $region4: #{_lambda_.11} parent=0 // pred_region
    _
  $region5: #{_lambda_.11} parent=0 // pred_fallthru
    _
  // Predicated region
  $region6: #{_lambda_.11} parent=0 // pred_check
    _
  $region7: #{_lambda_.11} parent=0 // pred_check_branch
    %14 = sbr.rel (0) target = $region9
  $region8: #{_lambda_.11} parent=0 // pred_region
    _
  $region9: #{_lambda_.11} parent=0 // pred_fallthru
    _
  // Predicated region
  $region10: #{_lambda_.11} parent=0 // pred_check
    _
  $region11: #{_lambda_.11} parent=0 // pred_check_branch
    %16 = sbr.rel (0) target = $region13
  $region12: #{_lambda_.11} parent=0 // pred_region
    _
  $region13: #{_lambda_.11} parent=0 // pred_fallthru
    _
  %v18 = vld [vmem:[%s0] sm:$0xff]
  %v19 = vld [vmem:[%s0 + $0x8] sm:$0xff]
  %v20 = vld [vmem:[%s0 + $0x10] sm:$0xff]
  %v21 = vld [vmem:[%s0 + $0x18] sm:$0xff]
  %v22 = vld [vmem:[%s0 + $0x20] sm:$0xff]
  %v23 = vld [vmem:[%s0 + $0x28] sm:$0xff]
  %v24 = vld [vmem:[%s0 + $0x30] sm:$0xff]
  %v25 = vld [vmem:[%s0 + $0x38] sm:$0xff]
  %v26 = vld [vmem:[%s0 + $0x40] sm:$0xff]
  %v27 = vld [vmem:[%s0 + $0x48] sm:$0xff]
  %v28 = vld [vmem:[%s0 + $0x50] sm:$0xff]
  %v29 = vld [vmem:[%s0 + $0x58] sm:$0xff]
  %v30 = vld [vmem:[%s0 + $0x60] sm:$0xff]
  %v31 = vld [vmem:[%s0 + $0x68] sm:$0xff]
  %v32 = vld [vmem:[%s0 + $0x70] sm:$0xff]
  %v33 = vld [vmem:[%s0 + $0x78] sm:$0xff]
  %v34 = vld [vmem:[%s1] sm:$0xf]
  %v35 = vld [vmem:[%s1 + $0x4] sm:$0xf]
  %v36 = vld [vmem:[%s1 + $0x8] sm:$0xf]
  %v37 = vld [vmem:[%s1 + $0xc] sm:$0xf]
  %v38 = vld [vmem:[%s1 + $0x10] sm:$0xf]
  %v39 = vld [vmem:[%s1 + $0x14] sm:$0xf]
  %v40 = vld [vmem:[%s1 + $0x18] sm:$0xf]
  %v41 = vld [vmem:[%s1 + $0x1c] sm:$0xf]
  %v42 = vld [vmem:[%s1 + $0x20] sm:$0xf]
  %v43 = vld [vmem:[%s1 + $0x24] sm:$0xf]
  %v44 = vld [vmem:[%s1 + $0x28] sm:$0xf]
  %v45 = vld [vmem:[%s1 + $0x2c] sm:$0xf]
  %v46 = vld [vmem:[%s1 + $0x30] sm:$0xf]
  %v47 = vld [vmem:[%s1 + $0x34] sm:$0xf]
  %v48 = vld [vmem:[%s1 + $0x38] sm:$0xf]
  %v49 = vld [vmem:[%s1 + $0x3c] sm:$0xf]
  %v50 = vld [vmem:[%s1 + $0x40] sm:$0xf]
  %v51 = vld [vmem:[%s1 + $0x44] sm:$0xf]
  %v52 = vld [vmem:[%s2] sm:$0x1]
  %v54 = vperm.slane %v52, 0
  %v72 = vunpack.c.l.b16 %v18
  %v73 = vunpack.c.h.b16 %v18
  %v74 = vunpack.c.l.b16 %v19
  %v75 = vunpack.c.h.b16 %v19
  %v76 = vunpack.c.l.b16 %v20
  %v77 = vunpack.c.h.b16 %v20
  %v78 = vunpack.c.l.b16 %v21
  %v79 = vunpack.c.h.b16 %v21
  %v80 = vunpack.c.l.b16 %v22
  %v81 = vunpack.c.h.b16 %v22
  %v82 = vunpack.c.l.b16 %v23
  %v83 = vunpack.c.h.b16 %v23
  %v84 = vunpack.c.l.b16 %v24
  %v85 = vunpack.c.h.b16 %v24
  %v86 = vunpack.c.l.b16 %v25
  %v87 = vunpack.c.h.b16 %v25
  %v88 = vunpack.c.l.b16 %v26
  %v89 = vunpack.c.h.b16 %v26
  %v90 = vunpack.c.l.b16 %v27
  %v91 = vunpack.c.h.b16 %v27
  %v92 = vunpack.c.l.b16 %v28
  %v93 = vunpack.c.h.b16 %v28
  %v94 = vunpack.c.l.b16 %v29
  %v95 = vunpack.c.h.b16 %v29
  %v96 = vunpack.c.l.b16 %v30
  %v97 = vunpack.c.h.b16 %v30
  %v98 = vunpack.c.l.b16 %v31
  %v99 = vunpack.c.h.b16 %v31
  %v100 = vunpack.c.l.b16 %v32
  %v101 = vunpack.c.h.b16 %v32
  %v102 = vunpack.c.l.b16 %v33
  %v103 = vunpack.c.h.b16 %v33
  %v104 = vpack.c.b16 %v74, %v72
  %v105 = vpack.c.b16 %v75, %v73
  %v106 = vpack.c.b16 %v78, %v76
  %v107 = vpack.c.b16 %v79, %v77
  %v108 = vpack.c.b16 %v82, %v80
  %v109 = vpack.c.b16 %v83, %v81
  %v110 = vpack.c.b16 %v86, %v84
  %v111 = vpack.c.b16 %v87, %v85
  %v112 = vpack.c.b16 %v90, %v88
  %v113 = vpack.c.b16 %v91, %v89
  %v114 = vpack.c.b16 %v94, %v92
  %v115 = vpack.c.b16 %v95, %v93
  %v116 = vpack.c.b16 %v98, %v96
  %v117 = vpack.c.b16 %v99, %v97
  %v118 = vpack.c.b16 %v102, %v100
  %v119 = vpack.c.b16 %v103, %v101
  %v146 = vunpack.c.l.b16 %v34
  %v147 = vunpack.c.l.b16 %v35
  %v148 = vunpack.c.l.b16 %v36
  %v149 = vunpack.c.l.b16 %v37
  %v150 = vunpack.c.l.b16 %v38
  %v151 = vunpack.c.l.b16 %v39
  %v152 = vunpack.c.l.b16 %v40
  %v153 = vunpack.c.l.b16 %v41
  %v154 = vunpack.c.l.b16 %v42
  %v155 = vunpack.c.l.b16 %v43
  %v156 = vunpack.c.l.b16 %v44
  %v157 = vunpack.c.l.b16 %v45
  %v158 = vunpack.c.l.b16 %v46
  %v159 = vunpack.c.l.b16 %v47
  %v160 = vunpack.c.l.b16 %v48
  %v161 = vunpack.c.l.b16 %v49
  %v162 = vunpack.c.l.b16 %v50
  %v163 = vunpack.c.l.b16 %v51
  %v164 = vpack.c.b16 %v147, %v146
  %v165 = vpack.c.b16 %v149, %v148
  %v166 = vpack.c.b16 %v151, %v150
  %v167 = vpack.c.b16 %v153, %v152
  %v168 = vpack.c.b16 %v155, %v154
  %v169 = vpack.c.b16 %v157, %v156
  %v170 = vpack.c.b16 %v159, %v158
  %v171 = vpack.c.b16 %v161, %v160
  %v172 = vpack.c.b16 %v163, %v162
  %vm182 = vcmask 130048
  %v184 = vsel %vm182, %v105, 0
  %v187 = vsel %vm182, %v107, 0
  %v190 = vsel %vm182, %v109, 0
  %v193 = vsel %vm182, %v111, 0
  %v196 = vsel %vm182, %v113, 0
  %v199 = vsel %vm182, %v115, 0
  %v202 = vsel %vm182, %v117, 0
  %v205 = vsel %vm182, %v119, 0
  %207 = vmatpush.bf16.msra.mxu0 %v171
  %208 = vmatpush.bf16.msra.mxu0 %v170
  %209 = vmatpush.bf16.msra.mxu0 %v169
  %210 = vmatpush.bf16.msra.mxu0 %v168
  %211 = vmatpush.bf16.msra.mxu0 %v167
  %212 = vmatpush.bf16.msra.mxu0 %v166
  %213 = vmatpush.bf16.msra.mxu0 %v165
  %214 = vmatpush.bf16.msra.mxu0 %v164
  %215 = vmatmul.bf16.gmra.mxu0 %v104
  %v216 = vpop.f32.mrf.mxu0
  %v217 = vadd.f32 %v54, %v216
  %v218 = vpop.f32.mrf.mxu0
  %v219 = vadd.f32 %v54, %v218
  %220 = vmatmul.bf16.gmra.mxu0 %v106
  %v221 = vpop.f32.mrf.mxu0
  %v222 = vadd.f32 %v54, %v221
  %v223 = vpop.f32.mrf.mxu0
  %v224 = vadd.f32 %v54, %v223
  %225 = vmatmul.bf16.gmra.mxu0 %v108
  %v226 = vpop.f32.mrf.mxu0
  %v227 = vadd.f32 %v54, %v226
  %v228 = vpop.f32.mrf.mxu0
  %v229 = vadd.f32 %v54, %v228
  %230 = vmatmul.bf16.gmra.mxu0 %v110
  %v231 = vpop.f32.mrf.mxu0
  %v232 = vadd.f32 %v54, %v231
  %v233 = vpop.f32.mrf.mxu0
  %v234 = vadd.f32 %v54, %v233
  %235 = vmatmul.bf16.gmra.mxu0 %v112
  %v236 = vpop.f32.mrf.mxu0
  %v237 = vadd.f32 %v54, %v236
  %v238 = vpop.f32.mrf.mxu0
  %v239 = vadd.f32 %v54, %v238
  %240 = vmatmul.bf16.gmra.mxu0 %v114
  %v241 = vpop.f32.mrf.mxu0
  %v242 = vadd.f32 %v54, %v241
  %v243 = vpop.f32.mrf.mxu0
  %v244 = vadd.f32 %v54, %v243
  %245 = vmatmul.bf16.gmra.mxu0 %v116
  %v246 = vpop.f32.mrf.mxu0
  %v247 = vadd.f32 %v54, %v246
  %v248 = vpop.f32.mrf.mxu0
  %v249 = vadd.f32 %v54, %v248
  %250 = vmatmul.bf16.gmra.mxu0 %v118
  %v251 = vpop.f32.mrf.mxu0
  %v252 = vadd.f32 %v54, %v251
  %v253 = vpop.f32.mrf.mxu0
  %v254 = vadd.f32 %v54, %v253
  %255 = vdwg.mxu0
  %256 = vmatpush.bf16.msra.mxu0 0
  %257 = vmatpush.bf16.msra.mxu0 0
  %258 = vmatpush.bf16.msra.mxu0 0
  %259 = vmatpush.bf16.msra.mxu0 0
  %260 = vmatpush.bf16.msra.mxu0 0
  %261 = vmatpush.bf16.msra.mxu0 0
  %262 = vmatpush.bf16.msra.mxu0 0
  %263 = vmatpush.bf16.msra.mxu0 %v172
  %264 = vmatmul.bf16.gmra.mxu0 %v184
  %v265 = vpop.f32.mrf.mxu0
  %v266 = vadd.f32 %v217, %v265
  %v267 = vpop.f32.mrf.mxu0
  %v268 = vadd.f32 %v219, %v267
  %269 = vmatmul.bf16.gmra.mxu0 %v187
  %v270 = vpop.f32.mrf.mxu0
  %v271 = vadd.f32 %v222, %v270
  %v272 = vpop.f32.mrf.mxu0
  %v273 = vadd.f32 %v224, %v272
  %274 = vmatmul.bf16.gmra.mxu0 %v190
  %v275 = vpop.f32.mrf.mxu0
  %v276 = vadd.f32 %v227, %v275
  %v277 = vpop.f32.mrf.mxu0
  %v278 = vadd.f32 %v229, %v277
  %279 = vmatmul.bf16.gmra.mxu0 %v193
  %v280 = vpop.f32.mrf.mxu0
  %v281 = vadd.f32 %v232, %v280
  %v282 = vpop.f32.mrf.mxu0
  %v283 = vadd.f32 %v234, %v282
  %284 = vmatmul.bf16.gmra.mxu0 %v196
  %v285 = vpop.f32.mrf.mxu0
  %v286 = vadd.f32 %v237, %v285
  %v287 = vpop.f32.mrf.mxu0
  %v288 = vadd.f32 %v239, %v287
  %289 = vmatmul.bf16.gmra.mxu0 %v199
  %v290 = vpop.f32.mrf.mxu0
  %v291 = vadd.f32 %v242, %v290
  %v292 = vpop.f32.mrf.mxu0
  %v293 = vadd.f32 %v244, %v292
  %294 = vmatmul.bf16.gmra.mxu0 %v202
  %v295 = vpop.f32.mrf.mxu0
  %v296 = vadd.f32 %v247, %v295
  %v297 = vpop.f32.mrf.mxu0
  %v298 = vadd.f32 %v249, %v297
  %299 = vmatmul.bf16.gmra.mxu0 %v205
  %v300 = vpop.f32.mrf.mxu0
  %v301 = vadd.f32 %v252, %v300
  %v302 = vpop.f32.mrf.mxu0
  %v303 = vadd.f32 %v254, %v302
  %304 = vdwg.mxu0
  %v305 = vpack.c.bf16 %v266, %v266
  %v306 = vpack.c.bf16 %v268, %v268
  %v307 = vpack.c.bf16 %v271, %v271
  %v308 = vpack.c.bf16 %v273, %v273
  %v309 = vpack.c.bf16 %v276, %v276
  %v310 = vpack.c.bf16 %v278, %v278
  %v311 = vpack.c.bf16 %v281, %v281
  %v312 = vpack.c.bf16 %v283, %v283
  %v313 = vpack.c.bf16 %v286, %v286
  %v314 = vpack.c.bf16 %v288, %v288
  %v315 = vpack.c.bf16 %v291, %v291
  %v316 = vpack.c.bf16 %v293, %v293
  %v317 = vpack.c.bf16 %v296, %v296
  %v318 = vpack.c.bf16 %v298, %v298
  %v319 = vpack.c.bf16 %v301, %v301
  %v320 = vpack.c.bf16 %v303, %v303
  %vm321 = vcmask 257024
  %322 = vst.msk [vmem:[%s3] sm:$0xf] %vm321, %v305
  %323 = vst.msk [vmem:[%s3 + $0x4] sm:$0xf] %vm321, %v306
  %324 = vst.msk [vmem:[%s3 + $0x8] sm:$0xf] %vm321, %v307
  %325 = vst.msk [vmem:[%s3 + $0xc] sm:$0xf] %vm321, %v308
  %326 = vst.msk [vmem:[%s3 + $0x10] sm:$0xf] %vm321, %v309
  %327 = vst.msk [vmem:[%s3 + $0x14] sm:$0xf] %vm321, %v310
  %328 = vst.msk [vmem:[%s3 + $0x18] sm:$0xf] %vm321, %v311
  %329 = vst.msk [vmem:[%s3 + $0x1c] sm:$0xf] %vm321, %v312
  %330 = vst.msk [vmem:[%s3 + $0x20] sm:$0xf] %vm321, %v313
  %331 = vst.msk [vmem:[%s3 + $0x24] sm:$0xf] %vm321, %v314
  %332 = vst.msk [vmem:[%s3 + $0x28] sm:$0xf] %vm321, %v315
  %333 = vst.msk [vmem:[%s3 + $0x2c] sm:$0xf] %vm321, %v316
  %334 = vst.msk [vmem:[%s3 + $0x30] sm:$0xf] %vm321, %v317
  %335 = vst.msk [vmem:[%s3 + $0x34] sm:$0xf] %vm321, %v318
  %336 = vst.msk [vmem:[%s3 + $0x38] sm:$0xf] %vm321, %v319
  %337 = vst.msk [vmem:[%s3 + $0x3c] sm:$0xf] %vm321, %v320
  %p338 = scmp.lt.s32.totalorder 0, 0
  // Predicated region
  $region14: #{_lambda_.11} parent=0 // pred_check
    %p339 = pneg %p338
  $region15: #{_lambda_.11} parent=0 // pred_check_branch
    %341 = sbr.rel (%p339) target = $region17
  $region16: #{_lambda_.11} parent=0 // pred_region
    %vm342 = vcmask 261120
    %v343 = vsel %vm342, %v266, 0.0
    %v344 = vsel %vm342, %v268, 0.0
    %v345 = vadd.f32 %v343, %v344
    %v346 = vsel %vm342, %v271, 0.0
    %v347 = vadd.f32 %v345, %v346
    %v348 = vsel %vm342, %v273, 0.0
    %v349 = vadd.f32 %v347, %v348
    %v350 = vsel %vm342, %v276, 0.0
    %v351 = vadd.f32 %v349, %v350
    %v352 = vsel %vm342, %v278, 0.0
    %v353 = vadd.f32 %v351, %v352
    %v354 = vsel %vm342, %v281, 0.0
    %v355 = vadd.f32 %v353, %v354
    %v356 = vsel %vm342, %v283, 0.0
    %v357 = vadd.f32 %v355, %v356
    %v358 = vsel %vm342, %v286, 0.0
    %v359 = vadd.f32 %v357, %v358
    %v360 = vsel %vm342, %v288, 0.0
    %v361 = vadd.f32 %v359, %v360
    %v362 = vsel %vm342, %v291, 0.0
    %v363 = vadd.f32 %v361, %v362
    %v364 = vsel %vm342, %v293, 0.0
    %v365 = vadd.f32 %v363, %v364
    %v366 = vsel %vm342, %v296, 0.0
    %v367 = vadd.f32 %v365, %v366
    %v368 = vsel %vm342, %v298, 0.0
    %v369 = vadd.f32 %v367, %v368
    %v370 = vsel %vm342, %v301, 0.0
    %v371 = vadd.f32 %v369, %v370
    %v372 = vsel %vm342, %v303, 0.0
    %v373 = vadd.f32 %v371, %v372
    %v374 = vrot.slane %v373, 4
    %v375 = vadd.f32 %v373, %v374
    %v376 = vrot.slane %v375, 2
    %v377 = vadd.f32 %v375, %v376
    %v378 = vrot.slane %v377, 1
    %v379 = vadd.f32 %v377, %v378
    %vm380 = vcmask 253952
    %381 = vst.msk [vmem:[%s4] sm:$0x1] %vm380, %v379
    %v382 = vmul.f32 %v266, %v266
    %v383 = vmul.f32 %v268, %v268
    %v384 = vmul.f32 %v271, %v271
    %v385 = vmul.f32 %v273, %v273
    %v386 = vmul.f32 %v276, %v276
    %v387 = vmul.f32 %v278, %v278
    %v388 = vmul.f32 %v281, %v281
    %v389 = vmul.f32 %v283, %v283
    %v390 = vmul.f32 %v286, %v286
    %v391 = vmul.f32 %v288, %v288
    %v392 = vmul.f32 %v291, %v291
    %v393 = vmul.f32 %v293, %v293
    %v394 = vmul.f32 %v296, %v296
    %v395 = vmul.f32 %v298, %v298
    %v396 = vmul.f32 %v301, %v301
    %v397 = vmul.f32 %v303, %v303
    %v398 = vsel %vm342, %v382, 0.0
    %v399 = vsel %vm342, %v383, 0.0
    %v400 = vadd.f32 %v398, %v399
    %v401 = vsel %vm342, %v384, 0.0
    %v402 = vadd.f32 %v400, %v401
    %v403 = vsel %vm342, %v385, 0.0
    %v404 = vadd.f32 %v402, %v403
    %v405 = vsel %vm342, %v386, 0.0
    %v406 = vadd.f32 %v404, %v405
    %v407 = vsel %vm342, %v387, 0.0
    %v408 = vadd.f32 %v406, %v407
    %v409 = vsel %vm342, %v388, 0.0
    %v410 = vadd.f32 %v408, %v409
    %v411 = vsel %vm342, %v389, 0.0
    %v412 = vadd.f32 %v410, %v411
    %v413 = vsel %vm342, %v390, 0.0
    %v414 = vadd.f32 %v412, %v413
    %v415 = vsel %vm342, %v391, 0.0
    %v416 = vadd.f32 %v414, %v415
    %v417 = vsel %vm342, %v392, 0.0
    %v418 = vadd.f32 %v416, %v417
    %v419 = vsel %vm342, %v393, 0.0
    %v420 = vadd.f32 %v418, %v419
    %v421 = vsel %vm342, %v394, 0.0
    %v422 = vadd.f32 %v420, %v421
    %v423 = vsel %vm342, %v395, 0.0
    %v424 = vadd.f32 %v422, %v423
    %v425 = vsel %vm342, %v396, 0.0
    %v426 = vadd.f32 %v424, %v425
    %v427 = vsel %vm342, %v397, 0.0
    %v428 = vadd.f32 %v426, %v427
    %v429 = vrot.slane %v428, 4
    %v430 = vadd.f32 %v428, %v429
    %v431 = vrot.slane %v430, 2
    %v432 = vadd.f32 %v430, %v431
    %v433 = vrot.slane %v432, 1
    %v434 = vadd.f32 %v432, %v433
    %435 = vst.msk [vmem:[%s5] sm:$0x1] %vm380, %v434
  $region17: #{_lambda_.11} parent=0 // pred_fallthru
    _
  %p436 = scmp.eq.s32.totalorder 0, 0
  // Predicated region
  $region18: #{_lambda_.11} parent=0 // pred_check
    %p437 = pneg %p436
  $region19: #{_lambda_.11} parent=0 // pred_check_branch
    %439 = sbr.rel (%p437) target = $region21
  $region20: #{_lambda_.11} parent=0 // pred_region
    %s440 = smul.u32 0, 128
    %v441 = vlaneseq
    %v442 = vshrl.u32 %v441, 7
    %v443 = vadd.s32 %v442, 8
    %v444 = vadd.s32 %v442, 16
    %v445 = vadd.s32 %v442, 24
    %v446 = vadd.s32 %v442, 32
    %v447 = vadd.s32 %v442, 40
    %v448 = vadd.s32 %v442, 48
    %v449 = vadd.s32 %v442, 56
    %v450 = vadd.s32 %v442, 64
    %v451 = vadd.s32 %v442, 72
    %v452 = vadd.s32 %v442, 80
    %v453 = vadd.s32 %v442, 88
    %v454 = vadd.s32 %v442, 96
    %v455 = vadd.s32 %v442, 104
    %v456 = vadd.s32 %v442, 112
    %v457 = vadd.s32 %v442, 120
    %v458 = vstv %s440
    %v459 = vadd.s32 %v458, %v442
    %v460 = vadd.s32 %v458, %v443
    %v461 = vadd.s32 %v458, %v444
    %v462 = vadd.s32 %v458, %v445
    %v463 = vadd.s32 %v458, %v446
    %v464 = vadd.s32 %v458, %v447
    %v465 = vadd.s32 %v458, %v448
    %v466 = vadd.s32 %v458, %v449
    %v467 = vadd.s32 %v458, %v450
    %v468 = vadd.s32 %v458, %v451
    %v469 = vadd.s32 %v458, %v452
    %v470 = vadd.s32 %v458, %v453
    %v471 = vadd.s32 %v458, %v454
    %v472 = vadd.s32 %v458, %v455
    %v473 = vadd.s32 %v458, %v456
    %v474 = vadd.s32 %v458, %v457
    %vm475 = vcmp.lt.s32.totalorder %v459, 128
    %vm476 = vcmp.lt.s32.totalorder %v460, 128
    %vm477 = vcmp.lt.s32.totalorder %v461, 128
    %vm478 = vcmp.lt.s32.totalorder %v462, 128
    %vm479 = vcmp.lt.s32.totalorder %v463, 128
    %vm480 = vcmp.lt.s32.totalorder %v464, 128
    %vm481 = vcmp.lt.s32.totalorder %v465, 128
    %vm482 = vcmp.lt.s32.totalorder %v466, 128
    %vm483 = vcmp.lt.s32.totalorder %v467, 128
    %vm484 = vcmp.lt.s32.totalorder %v468, 128
    %vm485 = vcmp.lt.s32.totalorder %v469, 128
    %vm486 = vcmp.lt.s32.totalorder %v470, 128
    %vm487 = vcmp.lt.s32.totalorder %v471, 128
    %vm488 = vcmp.lt.s32.totalorder %v472, 128
    %vm489 = vcmp.lt.s32.totalorder %v473, 128
    %vm490 = vcmp.lt.s32.totalorder %v474, 128
    %v491 = vsel %vm475, %v266, 0.0
    %v492 = vsel %vm476, %v268, 0.0
    %v493 = vsel %vm477, %v271, 0.0
    %v494 = vsel %vm478, %v273, 0.0
    %v495 = vsel %vm479, %v276, 0.0
    %v496 = vsel %vm480, %v278, 0.0
    %v497 = vsel %vm481, %v281, 0.0
    %v498 = vsel %vm482, %v283, 0.0
    %v499 = vsel %vm483, %v286, 0.0
    %v500 = vsel %vm484, %v288, 0.0
    %v501 = vsel %vm485, %v291, 0.0
    %v502 = vsel %vm486, %v293, 0.0
    %v503 = vsel %vm487, %v296, 0.0
    %v504 = vsel %vm488, %v298, 0.0
    %v505 = vsel %vm489, %v301, 0.0
    %v506 = vsel %vm490, %v303, 0.0
    %vm507 = vcmask 261120
    %v508 = vsel %vm507, %v491, 0.0
    %v509 = vsel %vm507, %v492, 0.0
    %v510 = vadd.f32 %v508, %v509
    %v511 = vsel %vm507, %v493, 0.0
    %v512 = vadd.f32 %v510, %v511
    %v513 = vsel %vm507, %v494, 0.0
    %v514 = vadd.f32 %v512, %v513
    %v515 = vsel %vm507, %v495, 0.0
    %v516 = vadd.f32 %v514, %v515
    %v517 = vsel %vm507, %v496, 0.0
    %v518 = vadd.f32 %v516, %v517
    %v519 = vsel %vm507, %v497, 0.0
    %v520 = vadd.f32 %v518, %v519
    %v521 = vsel %vm507, %v498, 0.0
    %v522 = vadd.f32 %v520, %v521
    %v523 = vsel %vm507, %v499, 0.0
    %v524 = vadd.f32 %v522, %v523
    %v525 = vsel %vm507, %v500, 0.0
    %v526 = vadd.f32 %v524, %v525
    %v527 = vsel %vm507, %v501, 0.0
    %v528 = vadd.f32 %v526, %v527
    %v529 = vsel %vm507, %v502, 0.0
    %v530 = vadd.f32 %v528, %v529
    %v531 = vsel %vm507, %v503, 0.0
    %v532 = vadd.f32 %v530, %v531
    %v533 = vsel %vm507, %v504, 0.0
    %v534 = vadd.f32 %v532, %v533
    %v535 = vsel %vm507, %v505, 0.0
    %v536 = vadd.f32 %v534, %v535
    %v537 = vsel %vm507, %v506, 0.0
    %v538 = vadd.f32 %v536, %v537
    %v539 = vrot.slane %v538, 4
    %v540 = vadd.f32 %v538, %v539
    %v541 = vrot.slane %v540, 2
    %v542 = vadd.f32 %v540, %v541
    %v543 = vrot.slane %v542, 1
    %v544 = vadd.f32 %v542, %v543
    %vm545 = vcmask 253952
    %546 = vst.msk [vmem:[%s4] sm:$0x1] %vm545, %v544
    %v547 = vmul.f32 %v491, %v491
    %v548 = vmul.f32 %v492, %v492
    %v549 = vmul.f32 %v493, %v493
    %v550 = vmul.f32 %v494, %v494
    %v551 = vmul.f32 %v495, %v495
    %v552 = vmul.f32 %v496, %v496
    %v553 = vmul.f32 %v497, %v497
    %v554 = vmul.f32 %v498, %v498
    %v555 = vmul.f32 %v499, %v499
    %v556 = vmul.f32 %v500, %v500
    %v557 = vmul.f32 %v501, %v501
    %v558 = vmul.f32 %v502, %v502
    %v559 = vmul.f32 %v503, %v503
    %v560 = vmul.f32 %v504, %v504
    %v561 = vmul.f32 %v505, %v505
    %v562 = vmul.f32 %v506, %v506
    %v563 = vsel %vm507, %v547, 0.0
    %v564 = vsel %vm507, %v548, 0.0
    %v565 = vadd.f32 %v563, %v564
    %v566 = vsel %vm507, %v549, 0.0
    %v567 = vadd.f32 %v565, %v566
    %v568 = vsel %vm507, %v550, 0.0
    %v569 = vadd.f32 %v567, %v568
    %v570 = vsel %vm507, %v551, 0.0
    %v571 = vadd.f32 %v569, %v570
    %v572 = vsel %vm507, %v552, 0.0
    %v573 = vadd.f32 %v571, %v572
    %v574 = vsel %vm507, %v553, 0.0
    %v575 = vadd.f32 %v573, %v574
    %v576 = vsel %vm507, %v554, 0.0
    %v577 = vadd.f32 %v575, %v576
    %v578 = vsel %vm507, %v555, 0.0
    %v579 = vadd.f32 %v577, %v578
    %v580 = vsel %vm507, %v556, 0.0
    %v581 = vadd.f32 %v579, %v580
    %v582 = vsel %vm507, %v557, 0.0
    %v583 = vadd.f32 %v581, %v582
    %v584 = vsel %vm507, %v558, 0.0
    %v585 = vadd.f32 %v583, %v584
    %v586 = vsel %vm507, %v559, 0.0
    %v587 = vadd.f32 %v585, %v586
    %v588 = vsel %vm507, %v560, 0.0
    %v589 = vadd.f32 %v587, %v588
    %v590 = vsel %vm507, %v561, 0.0
    %v591 = vadd.f32 %v589, %v590
    %v592 = vsel %vm507, %v562, 0.0
    %v593 = vadd.f32 %v591, %v592
    %v594 = vrot.slane %v593, 4
    %v595 = vadd.f32 %v593, %v594
    %v596 = vrot.slane %v595, 2
    %v597 = vadd.f32 %v595, %v596
    %v598 = vrot.slane %v597, 1
    %v599 = vadd.f32 %v597, %v598
    %600 = vst.msk [vmem:[%s5] sm:$0x1] %vm545, %v599
  $region21: #{_lambda_.11} parent=0 // pred_fallthru
    _
  // Predicated region
  $region22: #{_lambda_.11} parent=0 // pred_check
    _
  $region23: #{_lambda_.11} parent=0 // pred_check_branch
    %602 = sbr.rel (0) target = $region25
  $region24: #{_lambda_.11} parent=0 // pred_region
    _
  $region25: #{_lambda_.11} parent=0 // pred_fallthru
    _
  // Predicated region
  $region26: #{_lambda_.11} parent=0 // pred_check
    _
  $region27: #{_lambda_.11} parent=0 // pred_check_branch
    %604 = sbr.rel (0) target = $region29
  $region28: #{_lambda_.11} parent=0 // pred_region
    _
  $region29: #{_lambda_.11} parent=0 // pred_fallthru
    _
  // Predicated region
  $region30: #{_lambda_.11} parent=0 // pred_check
    _
  $region31: #{_lambda_.11} parent=0 // pred_check_branch
    %606 = sbr.rel (0) target = $region33
  $region32: #{_lambda_.11} parent=0 // pred_region
    _
  $region33: #{_lambda_.11} parent=0 // pred_fallthru
    _
  // Predicated region
  $region34: #{_lambda_.11} parent=0 // pred_check
    _
  $region35: #{_lambda_.11} parent=0 // pred_check_branch
    %608 = sbr.rel (0) target = $region37
  $region36: #{_lambda_.11} parent=0 // pred_region
    _
  $region37: #{_lambda_.11} parent=0 // pred_fallthru
    _
  // Predicated region
  $region38: #{_lambda_.11} parent=0 // pred_check
    _
  $region39: #{_lambda_.11} parent=0 // pred_check_branch
    %610 = sbr.rel (0) target = $region41
  $region40: #{_lambda_.11} parent=0 // pred_region
    _
  $region41: #{_lambda_.11} parent=0 // pred_fallthru
    _
  // Predicated region
  $region42: #{_lambda_.11} parent=0 // pred_check
    _
  $region43: #{_lambda_.11} parent=0 // pred_check_branch
    %612 = sbr.rel (0) target = $region45
  $region44: #{_lambda_.11} parent=0 // pred_region
    _
  $region45: #{_lambda_.11} parent=0 // pred_fallthru
    _

// kernel: _lambda_.12
$region0: #{_lambda_.12}
  #allocation0 [shape = 'u32[]', space=smem, size = 0x4, offset = 0x4, fixed_abs, tag = 'smem constant byte address 0x4 - core index']
  #allocation1 [shape = 'u32[72,128]{1,0:T(1,128)}', space=vmem, size = 0x9000, scoped, tag = 'internal scratch']
  %s0 = inlined_call_operand.vmem [shape: bf16[32,288], index: 0, kind: input, shape index: {}]
  %s1 = inlined_call_operand.vmem [shape: bf16[288,32], index: 1, kind: input, shape index: {}]
  %s2 = inlined_call_operand.vmem [shape: f32[1,32], index: 2, kind: input, shape index: {}]
  %s3 = inlined_call_operand.vmem [shape: bf16[32,32], index: 3, kind: output, shape index: {0}]
  %s4 = inlined_call_operand.vmem [shape: f32[1,1,32], index: 4, kind: output, shape index: {1}]
  %s5 = inlined_call_operand.vmem [shape: f32[1,1,32], index: 5, kind: output, shape index: {2}]
  %6 = xla_tuple %s3, %s4, %s5
  %s7 = sld [smem:[#allocation0]]
  $region46: #{_lambda_.12} parent=0
    _
  %s9 = ssub.s32 1, %s7
  %s10 = scalar_select 0, %s9, %s7
  // Predicated region
  $region2: #{_lambda_.12} parent=0 // pred_check
    _
  $region3: #{_lambda_.12} parent=0 // pred_check_branch
    %12 = sbr.rel (0) target = $region5
  $region4: #{_lambda_.12} parent=0 // pred_region
    _
  $region5: #{_lambda_.12} parent=0 // pred_fallthru
    _
  // Predicated region
  $region6: #{_lambda_.12} parent=0 // pred_check
    _
  $region7: #{_lambda_.12} parent=0 // pred_check_branch
    %14 = sbr.rel (0) target = $region9
  $region8: #{_lambda_.12} parent=0 // pred_region
    _
  $region9: #{_lambda_.12} parent=0 // pred_fallthru
    _
  // Predicated region
  $region10: #{_lambda_.12} parent=0 // pred_check
    _
  $region11: #{_lambda_.12} parent=0 // pred_check_branch
    %16 = sbr.rel (0) target = $region13
  $region12: #{_lambda_.12} parent=0 // pred_region
    _
  $region13: #{_lambda_.12} parent=0 // pred_fallthru
    _
  %v18 = vld [vmem:[%s0] sm:$0xff]
  %v19 = vld [vmem:[%s0 + $0x8] sm:$0xf]
  %v20 = vld [vmem:[%s0 + $0xc] sm:$0xff]
  %v21 = vld [vmem:[%s0 + $0x14] sm:$0xf]
  %v22 = vld [vmem:[%s0 + $0x18] sm:$0xff]
  %v23 = vld [vmem:[%s0 + $0x20] sm:$0xf]
  %v24 = vld [vmem:[%s0 + $0x24] sm:$0xff]
  %v25 = vld [vmem:[%s0 + $0x2c] sm:$0xf]
  %v26 = vld [vmem:[%s1] sm:$0xf]
  %v27 = vld [vmem:[%s1 + $0x4] sm:$0xf]
  %v28 = vld [vmem:[%s1 + $0x8] sm:$0xf]
  %v29 = vld [vmem:[%s1 + $0xc] sm:$0xf]
  %v30 = vld [vmem:[%s1 + $0x10] sm:$0xf]
  %v31 = vld [vmem:[%s1 + $0x14] sm:$0xf]
  %v32 = vld [vmem:[%s1 + $0x18] sm:$0xf]
  %v33 = vld [vmem:[%s1 + $0x1c] sm:$0xf]
  %v34 = vld [vmem:[%s1 + $0x20] sm:$0xf]
  %v35 = vld [vmem:[%s1 + $0x24] sm:$0xf]
  %v36 = vld [vmem:[%s1 + $0x28] sm:$0xf]
  %v37 = vld [vmem:[%s1 + $0x2c] sm:$0xf]
  %v38 = vld [vmem:[%s1 + $0x30] sm:$0xf]
  %v39 = vld [vmem:[%s1 + $0x34] sm:$0xf]
  %v40 = vld [vmem:[%s1 + $0x38] sm:$0xf]
  %v41 = vld [vmem:[%s1 + $0x3c] sm:$0xf]
  %v42 = vld [vmem:[%s1 + $0x40] sm:$0xf]
  %v43 = vld [vmem:[%s1 + $0x44] sm:$0xf]
  %v44 = vld [vmem:[%s1 + $0x48] sm:$0xf]
  %v45 = vld [vmem:[%s1 + $0x4c] sm:$0xf]
  %v46 = vld [vmem:[%s1 + $0x50] sm:$0xf]
  %v47 = vld [vmem:[%s1 + $0x54] sm:$0xf]
  %v48 = vld [vmem:[%s1 + $0x58] sm:$0xf]
  %v49 = vld [vmem:[%s1 + $0x5c] sm:$0xf]
  %v50 = vld [vmem:[%s1 + $0x60] sm:$0xf]
  %v51 = vld [vmem:[%s1 + $0x64] sm:$0xf]
  %v52 = vld [vmem:[%s1 + $0x68] sm:$0xf]
  %v53 = vld [vmem:[%s1 + $0x6c] sm:$0xf]
  %v54 = vld [vmem:[%s1 + $0x70] sm:$0xf]
  %v55 = vld [vmem:[%s1 + $0x74] sm:$0xf]
  %v56 = vld [vmem:[%s1 + $0x78] sm:$0xf]
  %v57 = vld [vmem:[%s1 + $0x7c] sm:$0xf]
  %v58 = vld [vmem:[%s1 + $0x80] sm:$0xf]
  %v59 = vld [vmem:[%s1 + $0x84] sm:$0xf]
  %v60 = vld [vmem:[%s1 + $0x88] sm:$0xf]
  %v61 = vld [vmem:[%s1 + $0x8c] sm:$0xf]
  %v62 = vld [vmem:[%s2] sm:$0x1]
  %v64 = vperm.slane %v62, 0
  %v74 = vunpack.c.l.b16 %v18
  %v75 = vunpack.c.h.b16 %v18
  %v76 = vunpack.c.l.b16 %v19
  %v77 = vunpack.c.l.b16 %v20
  %v78 = vunpack.c.h.b16 %v20
  %v79 = vunpack.c.l.b16 %v21
  %v80 = vunpack.c.l.b16 %v22
  %v81 = vunpack.c.h.b16 %v22
  %v82 = vunpack.c.l.b16 %v23
  %v83 = vunpack.c.l.b16 %v24
  %v84 = vunpack.c.h.b16 %v24
  %v85 = vunpack.c.l.b16 %v25
  %v86 = vpack.c.b16 %v77, %v74
  %v87 = vpack.c.b16 %v78, %v75
  %v88 = vpack.c.b16 %v79, %v76
  %v89 = vpack.c.b16 %v83, %v80
  %v90 = vpack.c.b16 %v84, %v81
  %v91 = vpack.c.b16 %v85, %v82
  %v132 = vunpack.c.l.b16 %v26
  %v133 = vunpack.c.l.b16 %v27
  %v134 = vunpack.c.l.b16 %v28
  %v135 = vunpack.c.l.b16 %v29
  %v136 = vunpack.c.l.b16 %v30
  %v137 = vunpack.c.l.b16 %v31
  %v138 = vunpack.c.l.b16 %v32
  %v139 = vunpack.c.l.b16 %v33
  %v140 = vunpack.c.l.b16 %v34
  %v141 = vunpack.c.l.b16 %v35
  %v142 = vunpack.c.l.b16 %v36
  %v143 = vunpack.c.l.b16 %v37
  %v144 = vunpack.c.l.b16 %v38
  %v145 = vunpack.c.l.b16 %v39
  %v146 = vunpack.c.l.b16 %v40
  %v147 = vunpack.c.l.b16 %v41
  %v148 = vunpack.c.l.b16 %v42
  %v149 = vunpack.c.l.b16 %v43
  %v150 = vunpack.c.l.b16 %v44
  %v151 = vunpack.c.l.b16 %v45
  %v152 = vunpack.c.l.b16 %v46
  %v153 = vunpack.c.l.b16 %v47
  %v154 = vunpack.c.l.b16 %v48
  %v155 = vunpack.c.l.b16 %v49
  %v156 = vunpack.c.l.b16 %v50
  %v157 = vunpack.c.l.b16 %v51
  %v158 = vunpack.c.l.b16 %v52
  %v159 = vunpack.c.l.b16 %v53
  %v160 = vunpack.c.l.b16 %v54
  %v161 = vunpack.c.l.b16 %v55
  %v162 = vunpack.c.l.b16 %v56
  %v163 = vunpack.c.l.b16 %v57
  %v164 = vunpack.c.l.b16 %v58
  %v165 = vunpack.c.l.b16 %v59
  %v166 = vunpack.c.l.b16 %v60
  %v167 = vunpack.c.l.b16 %v61
  %v168 = vpack.c.b16 %v133, %v132
  %v169 = vpack.c.b16 %v135, %v134
  %v170 = vpack.c.b16 %v137, %v136
  %v171 = vpack.c.b16 %v139, %v138
  %v172 = vpack.c.b16 %v141, %v140
  %v173 = vpack.c.b16 %v143, %v142
  %v174 = vpack.c.b16 %v145, %v144
  %v175 = vpack.c.b16 %v147, %v146
  %v176 = vpack.c.b16 %v149, %v148
  %v177 = vpack.c.b16 %v151, %v150
  %v178 = vpack.c.b16 %v153, %v152
  %v179 = vpack.c.b16 %v155, %v154
  %v180 = vpack.c.b16 %v157, %v156
  %v181 = vpack.c.b16 %v159, %v158
  %v182 = vpack.c.b16 %v161, %v160
  %v183 = vpack.c.b16 %v163, %v162
  %v184 = vpack.c.b16 %v165, %v164
  %v185 = vpack.c.b16 %v167, %v166
  %vm204 = vcmask 261120
  %v206 = vsel %vm204, %v88, 0
  %v209 = vsel %vm204, %v91, 0
  %211 = vmatpush.bf16.msra.mxu0 %v175
  %212 = vmatpush.bf16.msra.mxu0 %v174
  %213 = vmatpush.bf16.msra.mxu0 %v173
  %214 = vmatpush.bf16.msra.mxu0 %v172
  %215 = vmatpush.bf16.msra.mxu0 %v171
  %216 = vmatpush.bf16.msra.mxu0 %v170
  %217 = vmatpush.bf16.msra.mxu0 %v169
  %218 = vmatpush.bf16.msra.mxu0 %v168
  %219 = vmatmul.bf16.gmra.mxu0 %v86
  %v220 = vpop.f32.mrf.mxu0
  %v221 = vadd.f32 %v64, %v220
  %v222 = vpop.f32.mrf.mxu0
  %v223 = vadd.f32 %v64, %v222
  %224 = vmatmul.bf16.gmra.mxu0 %v89
  %v225 = vpop.f32.mrf.mxu0
  %v226 = vadd.f32 %v64, %v225
  %v227 = vpop.f32.mrf.mxu0
  %v228 = vadd.f32 %v64, %v227
  %229 = vdwg.mxu0
  %230 = vmatpush.bf16.msra.mxu0 %v183
  %231 = vmatpush.bf16.msra.mxu0 %v182
  %232 = vmatpush.bf16.msra.mxu0 %v181
  %233 = vmatpush.bf16.msra.mxu0 %v180
  %234 = vmatpush.bf16.msra.mxu0 %v179
  %235 = vmatpush.bf16.msra.mxu0 %v178
  %236 = vmatpush.bf16.msra.mxu0 %v177
  %237 = vmatpush.bf16.msra.mxu0 %v176
  %238 = vmatmul.bf16.gmra.mxu0 %v87
  %v239 = vpop.f32.mrf.mxu0
  %v240 = vadd.f32 %v221, %v239
  %v241 = vpop.f32.mrf.mxu0
  %v242 = vadd.f32 %v223, %v241
  %243 = vmatmul.bf16.gmra.mxu0 %v90
  %v244 = vpop.f32.mrf.mxu0
  %v245 = vadd.f32 %v226, %v244
  %v246 = vpop.f32.mrf.mxu0
  %v247 = vadd.f32 %v228, %v246
  %248 = vdwg.mxu0
  %249 = vmatpush.bf16.msra.mxu0 0
  %250 = vmatpush.bf16.msra.mxu0 0
  %251 = vmatpush.bf16.msra.mxu0 0
  %252 = vmatpush.bf16.msra.mxu0 0
  %253 = vmatpush.bf16.msra.mxu0 0
  %254 = vmatpush.bf16.msra.mxu0 0
  %255 = vmatpush.bf16.msra.mxu0 %v185
  %256 = vmatpush.bf16.msra.mxu0 %v184
  %257 = vmatmul.bf16.gmra.mxu0 %v206
  %v258 = vpop.f32.mrf.mxu0
  %v259 = vadd.f32 %v240, %v258
  %v260 = vpop.f32.mrf.mxu0
  %v261 = vadd.f32 %v242, %v260
  %262 = vmatmul.bf16.gmra.mxu0 %v209
  %v263 = vpop.f32.mrf.mxu0
  %v264 = vadd.f32 %v245, %v263
  %v265 = vpop.f32.mrf.mxu0
  %v266 = vadd.f32 %v247, %v265
  %267 = vdwg.mxu0
  %v268 = vpack.c.bf16 %v259, %v259
  %v269 = vpack.c.bf16 %v261, %v261
  %v270 = vpack.c.bf16 %v264, %v264
  %v271 = vpack.c.bf16 %v266, %v266
  %vm272 = vcmask 257024
  %273 = vst.msk [vmem:[%s3] sm:$0xf] %vm272, %v268
  %274 = vst.msk [vmem:[%s3 + $0x4] sm:$0xf] %vm272, %v269
  %275 = vst.msk [vmem:[%s3 + $0x8] sm:$0xf] %vm272, %v270
  %276 = vst.msk [vmem:[%s3 + $0xc] sm:$0xf] %vm272, %v271
  %p277 = scmp.lt.s32.totalorder 0, 0
  // Predicated region
  $region14: #{_lambda_.12} parent=0 // pred_check
    %p278 = pneg %p277
  $region15: #{_lambda_.12} parent=0 // pred_check_branch
    %280 = sbr.rel (%p278) target = $region17
  $region16: #{_lambda_.12} parent=0 // pred_region
    %v281 = vsel %vm204, %v259, 0.0
    %v282 = vsel %vm204, %v261, 0.0
    %v283 = vadd.f32 %v281, %v282
    %v284 = vsel %vm204, %v264, 0.0
    %v285 = vadd.f32 %v283, %v284
    %v286 = vsel %vm204, %v266, 0.0
    %v287 = vadd.f32 %v285, %v286
    %v288 = vrot.slane %v287, 4
    %v289 = vadd.f32 %v287, %v288
    %v290 = vrot.slane %v289, 2
    %v291 = vadd.f32 %v289, %v290
    %v292 = vrot.slane %v291, 1
    %v293 = vadd.f32 %v291, %v292
    %vm294 = vcmask 253952
    %295 = vst.msk [vmem:[%s4] sm:$0x1] %vm294, %v293
    %v296 = vmul.f32 %v259, %v259
    %v297 = vmul.f32 %v261, %v261
    %v298 = vmul.f32 %v264, %v264
    %v299 = vmul.f32 %v266, %v266
    %v300 = vsel %vm204, %v296, 0.0
    %v301 = vsel %vm204, %v297, 0.0
    %v302 = vadd.f32 %v300, %v301
    %v303 = vsel %vm204, %v298, 0.0
    %v304 = vadd.f32 %v302, %v303
    %v305 = vsel %vm204, %v299, 0.0
    %v306 = vadd.f32 %v304, %v305
    %v307 = vrot.slane %v306, 4
    %v308 = vadd.f32 %v306, %v307
    %v309 = vrot.slane %v308, 2
    %v310 = vadd.f32 %v308, %v309
    %v311 = vrot.slane %v310, 1
    %v312 = vadd.f32 %v310, %v311
    %313 = vst.msk [vmem:[%s5] sm:$0x1] %vm294, %v312
  $region17: #{_lambda_.12} parent=0 // pred_fallthru
    _
  %p314 = scmp.eq.s32.totalorder 0, 0
  // Predicated region
  $region18: #{_lambda_.12} parent=0 // pred_check
    %p315 = pneg %p314
  $region19: #{_lambda_.12} parent=0 // pred_check_branch
    %317 = sbr.rel (%p315) target = $region21
  $region20: #{_lambda_.12} parent=0 // pred_region
    %s318 = smul.u32 0, 32
    %v319 = vlaneseq
    %v320 = vshrl.u32 %v319, 7
    %v321 = vadd.s32 %v320, 8
    %v322 = vadd.s32 %v320, 16
    %v323 = vadd.s32 %v320, 24
    %v324 = vstv %s318
    %v325 = vadd.s32 %v324, %v320
    %v326 = vadd.s32 %v324, %v321
    %v327 = vadd.s32 %v324, %v322
    %v328 = vadd.s32 %v324, %v323
    %vm329 = vcmp.lt.s32.totalorder %v325, 32
    %vm330 = vcmp.lt.s32.totalorder %v326, 32
    %vm331 = vcmp.lt.s32.totalorder %v327, 32
    %vm332 = vcmp.lt.s32.totalorder %v328, 32
    %v333 = vsel %vm329, %v259, 0.0
    %v334 = vsel %vm330, %v261, 0.0
    %v335 = vsel %vm331, %v264, 0.0
    %v336 = vsel %vm332, %v266, 0.0
    %v337 = vsel %vm204, %v333, 0.0
    %v338 = vsel %vm204, %v334, 0.0
    %v339 = vadd.f32 %v337, %v338
    %v340 = vsel %vm204, %v335, 0.0
    %v341 = vadd.f32 %v339, %v340
    %v342 = vsel %vm204, %v336, 0.0
    %v343 = vadd.f32 %v341, %v342
    %v344 = vrot.slane %v343, 4
    %v345 = vadd.f32 %v343, %v344
    %v346 = vrot.slane %v345, 2
    %v347 = vadd.f32 %v345, %v346
    %v348 = vrot.slane %v347, 1
    %v349 = vadd.f32 %v347, %v348
    %vm350 = vcmask 253952
    %351 = vst.msk [vmem:[%s4] sm:$0x1] %vm350, %v349
    %v352 = vmul.f32 %v333, %v333
    %v353 = vmul.f32 %v334, %v334
    %v354 = vmul.f32 %v335, %v335
    %v355 = vmul.f32 %v336, %v336
    %v356 = vsel %vm204, %v352, 0.0
    %v357 = vsel %vm204, %v353, 0.0
    %v358 = vadd.f32 %v356, %v357
    %v359 = vsel %vm204, %v354, 0.0
    %v360 = vadd.f32 %v358, %v359
    %v361 = vsel %vm204, %v355, 0.0
    %v362 = vadd.f32 %v360, %v361
    %v363 = vrot.slane %v362, 4
    %v364 = vadd.f32 %v362, %v363
    %v365 = vrot.slane %v364, 2
    %v366 = vadd.f32 %v364, %v365
    %v367 = vrot.slane %v366, 1
    %v368 = vadd.f32 %v366, %v367
    %369 = vst.msk [vmem:[%s5] sm:$0x1] %vm350, %v368
  $region21: #{_lambda_.12} parent=0 // pred_fallthru
    _
  // Predicated region
  $region22: #{_lambda_.12} parent=0 // pred_check
    _
  $region23: #{_lambda_.12} parent=0 // pred_check_branch
    %371 = sbr.rel (0) target = $region25
  $region24: #{_lambda_.12} parent=0 // pred_region
    _
  $region25: #{_lambda_.12} parent=0 // pred_fallthru
    _
  // Predicated region
  $region26: #{_lambda_.12} parent=0 // pred_check
    _
  $region27: #{_lambda_.12} parent=0 // pred_check_branch
    %373 = sbr.rel (0) target = $region29
  $region28: #{_lambda_.12} parent=0 // pred_region
    _
  $region29: #{_lambda_.12} parent=0 // pred_fallthru
    _
  // Predicated region
  $region30: #{_lambda_.12} parent=0 // pred_check
    _
  $region31: #{_lambda_.12} parent=0 // pred_check_branch
    %375 = sbr.rel (0) target = $region33
  $region32: #{_lambda_.12} parent=0 // pred_region
    _
  $region33: #{_lambda_.12} parent=0 // pred_fallthru
    _
  // Predicated region
  $region34: #{_lambda_.12} parent=0 // pred_check
    _
  $region35: #{_lambda_.12} parent=0 // pred_check_branch
    %377 = sbr.rel (0) target = $region37
  $region36: #{_lambda_.12} parent=0 // pred_region
    _
  $region37: #{_lambda_.12} parent=0 // pred_fallthru
    _
  // Predicated region
  $region38: #{_lambda_.12} parent=0 // pred_check
    _
  $region39: #{_lambda_.12} parent=0 // pred_check_branch
    %379 = sbr.rel (0) target = $region41
  $region40: #{_lambda_.12} parent=0 // pred_region
    _
  $region41: #{_lambda_.12} parent=0 // pred_fallthru
    _
  // Predicated region
  $region42: #{_lambda_.12} parent=0 // pred_check
    _
  $region43: #{_lambda_.12} parent=0 // pred_check_branch
    %381 = sbr.rel (0) target = $region45
  $region44: #{_lambda_.12} parent=0 // pred_region
    _
  $region45: #{_lambda_.12} parent=0 // pred_fallthru
    _

// kernel: _lambda_.13
$region0: #{_lambda_.13}
  #allocation0 [shape = 'u32[]', space=smem, size = 0x4, offset = 0x4, fixed_abs, tag = 'smem constant byte address 0x4 - core index']
  #allocation1 [shape = 'u32[72,128]{1,0:T(1,128)}', space=vmem, size = 0x9000, scoped, tag = 'internal scratch']
  %s0 = inlined_call_operand.vmem [shape: bf16[32,288], index: 0, kind: input, shape index: {}]
  %s1 = inlined_call_operand.vmem [shape: bf16[288,64], index: 1, kind: input, shape index: {}]
  %s2 = inlined_call_operand.vmem [shape: f32[1,64], index: 2, kind: input, shape index: {}]
  %s3 = inlined_call_operand.vmem [shape: bf16[32,64], index: 3, kind: output, shape index: {0}]
  %s4 = inlined_call_operand.vmem [shape: f32[1,1,64], index: 4, kind: output, shape index: {1}]
  %s5 = inlined_call_operand.vmem [shape: f32[1,1,64], index: 5, kind: output, shape index: {2}]
  %6 = xla_tuple %s3, %s4, %s5
  %s7 = sld [smem:[#allocation0]]
  $region46: #{_lambda_.13} parent=0
    _
  %s9 = ssub.s32 1, %s7
  %s10 = scalar_select 0, %s9, %s7
  // Predicated region
  $region2: #{_lambda_.13} parent=0 // pred_check
    _
  $region3: #{_lambda_.13} parent=0 // pred_check_branch
    %12 = sbr.rel (0) target = $region5
  $region4: #{_lambda_.13} parent=0 // pred_region
    _
  $region5: #{_lambda_.13} parent=0 // pred_fallthru
    _
  // Predicated region
  $region6: #{_lambda_.13} parent=0 // pred_check
    _
  $region7: #{_lambda_.13} parent=0 // pred_check_branch
    %14 = sbr.rel (0) target = $region9
  $region8: #{_lambda_.13} parent=0 // pred_region
    _
  $region9: #{_lambda_.13} parent=0 // pred_fallthru
    _
  // Predicated region
  $region10: #{_lambda_.13} parent=0 // pred_check
    _
  $region11: #{_lambda_.13} parent=0 // pred_check_branch
    %16 = sbr.rel (0) target = $region13
  $region12: #{_lambda_.13} parent=0 // pred_region
    _
  $region13: #{_lambda_.13} parent=0 // pred_fallthru
    _
  %v18 = vld [vmem:[%s0] sm:$0xff]
  %v19 = vld [vmem:[%s0 + $0x8] sm:$0xf]
  %v20 = vld [vmem:[%s0 + $0xc] sm:$0xff]
  %v21 = vld [vmem:[%s0 + $0x14] sm:$0xf]
  %v22 = vld [vmem:[%s0 + $0x18] sm:$0xff]
  %v23 = vld [vmem:[%s0 + $0x20] sm:$0xf]
  %v24 = vld [vmem:[%s0 + $0x24] sm:$0xff]
  %v25 = vld [vmem:[%s0 + $0x2c] sm:$0xf]
  %v26 = vld [vmem:[%s1] sm:$0xf]
  %v27 = vld [vmem:[%s1 + $0x4] sm:$0xf]
  %v28 = vld [vmem:[%s1 + $0x8] sm:$0xf]
  %v29 = vld [vmem:[%s1 + $0xc] sm:$0xf]
  %v30 = vld [vmem:[%s1 + $0x10] sm:$0xf]
  %v31 = vld [vmem:[%s1 + $0x14] sm:$0xf]
  %v32 = vld [vmem:[%s1 + $0x18] sm:$0xf]
  %v33 = vld [vmem:[%s1 + $0x1c] sm:$0xf]
  %v34 = vld [vmem:[%s1 + $0x20] sm:$0xf]
  %v35 = vld [vmem:[%s1 + $0x24] sm:$0xf]
  %v36 = vld [vmem:[%s1 + $0x28] sm:$0xf]
  %v37 = vld [vmem:[%s1 + $0x2c] sm:$0xf]
  %v38 = vld [vmem:[%s1 + $0x30] sm:$0xf]
  %v39 = vld [vmem:[%s1 + $0x34] sm:$0xf]
  %v40 = vld [vmem:[%s1 + $0x38] sm:$0xf]
  %v41 = vld [vmem:[%s1 + $0x3c] sm:$0xf]
  %v42 = vld [vmem:[%s1 + $0x40] sm:$0xf]
  %v43 = vld [vmem:[%s1 + $0x44] sm:$0xf]
  %v44 = vld [vmem:[%s1 + $0x48] sm:$0xf]
  %v45 = vld [vmem:[%s1 + $0x4c] sm:$0xf]
  %v46 = vld [vmem:[%s1 + $0x50] sm:$0xf]
  %v47 = vld [vmem:[%s1 + $0x54] sm:$0xf]
  %v48 = vld [vmem:[%s1 + $0x58] sm:$0xf]
  %v49 = vld [vmem:[%s1 + $0x5c] sm:$0xf]
  %v50 = vld [vmem:[%s1 + $0x60] sm:$0xf]
  %v51 = vld [vmem:[%s1 + $0x64] sm:$0xf]
  %v52 = vld [vmem:[%s1 + $0x68] sm:$0xf]
  %v53 = vld [vmem:[%s1 + $0x6c] sm:$0xf]
  %v54 = vld [vmem:[%s1 + $0x70] sm:$0xf]
  %v55 = vld [vmem:[%s1 + $0x74] sm:$0xf]
  %v56 = vld [vmem:[%s1 + $0x78] sm:$0xf]
  %v57 = vld [vmem:[%s1 + $0x7c] sm:$0xf]
  %v58 = vld [vmem:[%s1 + $0x80] sm:$0xf]
  %v59 = vld [vmem:[%s1 + $0x84] sm:$0xf]
  %v60 = vld [vmem:[%s1 + $0x88] sm:$0xf]
  %v61 = vld [vmem:[%s1 + $0x8c] sm:$0xf]
  %v62 = vld [vmem:[%s2] sm:$0x1]
  %v64 = vperm.slane %v62, 0
  %v74 = vunpack.c.l.b16 %v18
  %v75 = vunpack.c.h.b16 %v18
  %v76 = vunpack.c.l.b16 %v19
  %v77 = vunpack.c.l.b16 %v20
  %v78 = vunpack.c.h.b16 %v20
  %v79 = vunpack.c.l.b16 %v21
  %v80 = vunpack.c.l.b16 %v22
  %v81 = vunpack.c.h.b16 %v22
  %v82 = vunpack.c.l.b16 %v23
  %v83 = vunpack.c.l.b16 %v24
  %v84 = vunpack.c.h.b16 %v24
  %v85 = vunpack.c.l.b16 %v25
  %v86 = vpack.c.b16 %v77, %v74
  %v87 = vpack.c.b16 %v78, %v75
  %v88 = vpack.c.b16 %v79, %v76
  %v89 = vpack.c.b16 %v83, %v80
  %v90 = vpack.c.b16 %v84, %v81
  %v91 = vpack.c.b16 %v85, %v82
  %v132 = vunpack.c.l.b16 %v26
  %v133 = vunpack.c.l.b16 %v27
  %v134 = vunpack.c.l.b16 %v28
  %v135 = vunpack.c.l.b16 %v29
  %v136 = vunpack.c.l.b16 %v30
  %v137 = vunpack.c.l.b16 %v31
  %v138 = vunpack.c.l.b16 %v32
  %v139 = vunpack.c.l.b16 %v33
  %v140 = vunpack.c.l.b16 %v34
  %v141 = vunpack.c.l.b16 %v35
  %v142 = vunpack.c.l.b16 %v36
  %v143 = vunpack.c.l.b16 %v37
  %v144 = vunpack.c.l.b16 %v38
  %v145 = vunpack.c.l.b16 %v39
  %v146 = vunpack.c.l.b16 %v40
  %v147 = vunpack.c.l.b16 %v41
  %v148 = vunpack.c.l.b16 %v42
  %v149 = vunpack.c.l.b16 %v43
  %v150 = vunpack.c.l.b16 %v44
  %v151 = vunpack.c.l.b16 %v45
  %v152 = vunpack.c.l.b16 %v46
  %v153 = vunpack.c.l.b16 %v47
  %v154 = vunpack.c.l.b16 %v48
  %v155 = vunpack.c.l.b16 %v49
  %v156 = vunpack.c.l.b16 %v50
  %v157 = vunpack.c.l.b16 %v51
  %v158 = vunpack.c.l.b16 %v52
  %v159 = vunpack.c.l.b16 %v53
  %v160 = vunpack.c.l.b16 %v54
  %v161 = vunpack.c.l.b16 %v55
  %v162 = vunpack.c.l.b16 %v56
  %v163 = vunpack.c.l.b16 %v57
  %v164 = vunpack.c.l.b16 %v58
  %v165 = vunpack.c.l.b16 %v59
  %v166 = vunpack.c.l.b16 %v60
  %v167 = vunpack.c.l.b16 %v61
  %v168 = vpack.c.b16 %v133, %v132
  %v169 = vpack.c.b16 %v135, %v134
  %v170 = vpack.c.b16 %v137, %v136
  %v171 = vpack.c.b16 %v139, %v138
  %v172 = vpack.c.b16 %v141, %v140
  %v173 = vpack.c.b16 %v143, %v142
  %v174 = vpack.c.b16 %v145, %v144
  %v175 = vpack.c.b16 %v147, %v146
  %v176 = vpack.c.b16 %v149, %v148
  %v177 = vpack.c.b16 %v151, %v150
  %v178 = vpack.c.b16 %v153, %v152
  %v179 = vpack.c.b16 %v155, %v154
  %v180 = vpack.c.b16 %v157, %v156
  %v181 = vpack.c.b16 %v159, %v158
  %v182 = vpack.c.b16 %v161, %v160
  %v183 = vpack.c.b16 %v163, %v162
  %v184 = vpack.c.b16 %v165, %v164
  %v185 = vpack.c.b16 %v167, %v166
  %vm204 = vcmask 261120
  %v206 = vsel %vm204, %v88, 0
  %v209 = vsel %vm204, %v91, 0
  %211 = vmatpush.bf16.msra.mxu0 %v175
  %212 = vmatpush.bf16.msra.mxu0 %v174
  %213 = vmatpush.bf16.msra.mxu0 %v173
  %214 = vmatpush.bf16.msra.mxu0 %v172
  %215 = vmatpush.bf16.msra.mxu0 %v171
  %216 = vmatpush.bf16.msra.mxu0 %v170
  %217 = vmatpush.bf16.msra.mxu0 %v169
  %218 = vmatpush.bf16.msra.mxu0 %v168
  %219 = vmatmul.bf16.gmra.mxu0 %v86
  %v220 = vpop.f32.mrf.mxu0
  %v221 = vadd.f32 %v64, %v220
  %v222 = vpop.f32.mrf.mxu0
  %v223 = vadd.f32 %v64, %v222
  %224 = vmatmul.bf16.gmra.mxu0 %v89
  %v225 = vpop.f32.mrf.mxu0
  %v226 = vadd.f32 %v64, %v225
  %v227 = vpop.f32.mrf.mxu0
  %v228 = vadd.f32 %v64, %v227
  %229 = vdwg.mxu0
  %230 = vmatpush.bf16.msra.mxu0 %v183
  %231 = vmatpush.bf16.msra.mxu0 %v182
  %232 = vmatpush.bf16.msra.mxu0 %v181
  %233 = vmatpush.bf16.msra.mxu0 %v180
  %234 = vmatpush.bf16.msra.mxu0 %v179
  %235 = vmatpush.bf16.msra.mxu0 %v178
  %236 = vmatpush.bf16.msra.mxu0 %v177
  %237 = vmatpush.bf16.msra.mxu0 %v176
  %238 = vmatmul.bf16.gmra.mxu0 %v87
  %v239 = vpop.f32.mrf.mxu0
  %v240 = vadd.f32 %v221, %v239
  %v241 = vpop.f32.mrf.mxu0
  %v242 = vadd.f32 %v223, %v241
  %243 = vmatmul.bf16.gmra.mxu0 %v90
  %v244 = vpop.f32.mrf.mxu0
  %v245 = vadd.f32 %v226, %v244
  %v246 = vpop.f32.mrf.mxu0
  %v247 = vadd.f32 %v228, %v246
  %248 = vdwg.mxu0
  %249 = vmatpush.bf16.msra.mxu0 0
  %250 = vmatpush.bf16.msra.mxu0 0
  %251 = vmatpush.bf16.msra.mxu0 0
  %252 = vmatpush.bf16.msra.mxu0 0
  %253 = vmatpush.bf16.msra.mxu0 0
  %254 = vmatpush.bf16.msra.mxu0 0
  %255 = vmatpush.bf16.msra.mxu0 %v185
  %256 = vmatpush.bf16.msra.mxu0 %v184
  %257 = vmatmul.bf16.gmra.mxu0 %v206
  %v258 = vpop.f32.mrf.mxu0
  %v259 = vadd.f32 %v240, %v258
  %v260 = vpop.f32.mrf.mxu0
  %v261 = vadd.f32 %v242, %v260
  %262 = vmatmul.bf16.gmra.mxu0 %v209
  %v263 = vpop.f32.mrf.mxu0
  %v264 = vadd.f32 %v245, %v263
  %v265 = vpop.f32.mrf.mxu0
  %v266 = vadd.f32 %v247, %v265
  %267 = vdwg.mxu0
  %v268 = vpack.c.bf16 %v259, %v259
  %v269 = vpack.c.bf16 %v261, %v261
  %v270 = vpack.c.bf16 %v264, %v264
  %v271 = vpack.c.bf16 %v266, %v266
  %vm272 = vcmask 519168
  %273 = vst.msk [vmem:[%s3] sm:$0xf] %vm272, %v268
  %274 = vst.msk [vmem:[%s3 + $0x4] sm:$0xf] %vm272, %v269
  %275 = vst.msk [vmem:[%s3 + $0x8] sm:$0xf] %vm272, %v270
  %276 = vst.msk [vmem:[%s3 + $0xc] sm:$0xf] %vm272, %v271
  %p277 = scmp.lt.s32.totalorder 0, 0
  // Predicated region
  $region14: #{_lambda_.13} parent=0 // pred_check
    %p278 = pneg %p277
  $region15: #{_lambda_.13} parent=0 // pred_check_branch
    %280 = sbr.rel (%p278) target = $region17
  $region16: #{_lambda_.13} parent=0 // pred_region
    %vm281 = vcmask 523264
    %v282 = vsel %vm281, %v259, 0.0
    %v283 = vsel %vm281, %v261, 0.0
    %v284 = vadd.f32 %v282, %v283
    %v285 = vsel %vm281, %v264, 0.0
    %v286 = vadd.f32 %v284, %v285
    %v287 = vsel %vm281, %v266, 0.0
    %v288 = vadd.f32 %v286, %v287
    %v289 = vrot.slane %v288, 4
    %v290 = vadd.f32 %v288, %v289
    %v291 = vrot.slane %v290, 2
    %v292 = vadd.f32 %v290, %v291
    %v293 = vrot.slane %v292, 1
    %v294 = vadd.f32 %v292, %v293
    %vm295 = vcmask 516096
    %296 = vst.msk [vmem:[%s4] sm:$0x1] %vm295, %v294
    %v297 = vmul.f32 %v259, %v259
    %v298 = vmul.f32 %v261, %v261
    %v299 = vmul.f32 %v264, %v264
    %v300 = vmul.f32 %v266, %v266
    %v301 = vsel %vm281, %v297, 0.0
    %v302 = vsel %vm281, %v298, 0.0
    %v303 = vadd.f32 %v301, %v302
    %v304 = vsel %vm281, %v299, 0.0
    %v305 = vadd.f32 %v303, %v304
    %v306 = vsel %vm281, %v300, 0.0
    %v307 = vadd.f32 %v305, %v306
    %v308 = vrot.slane %v307, 4
    %v309 = vadd.f32 %v307, %v308
    %v310 = vrot.slane %v309, 2
    %v311 = vadd.f32 %v309, %v310
    %v312 = vrot.slane %v311, 1
    %v313 = vadd.f32 %v311, %v312
    %314 = vst.msk [vmem:[%s5] sm:$0x1] %vm295, %v313
  $region17: #{_lambda_.13} parent=0 // pred_fallthru
    _
  %p315 = scmp.eq.s32.totalorder 0, 0
  // Predicated region
  $region18: #{_lambda_.13} parent=0 // pred_check
    %p316 = pneg %p315
  $region19: #{_lambda_.13} parent=0 // pred_check_branch
    %318 = sbr.rel (%p316) target = $region21
  $region20: #{_lambda_.13} parent=0 // pred_region
    %s319 = smul.u32 0, 32
    %v320 = vlaneseq
    %v321 = vshrl.u32 %v320, 7
    %v322 = vadd.s32 %v321, 8
    %v323 = vadd.s32 %v321, 16
    %v324 = vadd.s32 %v321, 24
    %v325 = vstv %s319
    %v326 = vadd.s32 %v325, %v321
    %v327 = vadd.s32 %v325, %v322
    %v328 = vadd.s32 %v325, %v323
    %v329 = vadd.s32 %v325, %v324
    %vm330 = vcmp.lt.s32.totalorder %v326, 32
    %vm331 = vcmp.lt.s32.totalorder %v327, 32
    %vm332 = vcmp.lt.s32.totalorder %v328, 32
    %vm333 = vcmp.lt.s32.totalorder %v329, 32
    %v334 = vsel %vm330, %v259, 0.0
    %v335 = vsel %vm331, %v261, 0.0
    %v336 = vsel %vm332, %v264, 0.0
    %v337 = vsel %vm333, %v266, 0.0
    %vm338 = vcmask 523264
    %v339 = vsel %vm338, %v334, 0.0
    %v340 = vsel %vm338, %v335, 0.0
    %v341 = vadd.f32 %v339, %v340
    %v342 = vsel %vm338, %v336, 0.0
    %v343 = vadd.f32 %v341, %v342
    %v344 = vsel %vm338, %v337, 0.0
    %v345 = vadd.f32 %v343, %v344
    %v346 = vrot.slane %v345, 4
    %v347 = vadd.f32 %v345, %v346
    %v348 = vrot.slane %v347, 2
    %v349 = vadd.f32 %v347, %v348
    %v350 = vrot.slane %v349, 1
    %v351 = vadd.f32 %v349, %v350
    %vm352 = vcmask 516096
    %353 = vst.msk [vmem:[%s4] sm:$0x1] %vm352, %v351
    %v354 = vmul.f32 %v334, %v334
    %v355 = vmul.f32 %v335, %v335
    %v356 = vmul.f32 %v336, %v336
    %v357 = vmul.f32 %v337, %v337
    %v358 = vsel %vm338, %v354, 0.0
    %v359 = vsel %vm338, %v355, 0.0
    %v360 = vadd.f32 %v358, %v359
    %v361 = vsel %vm338, %v356, 0.0
    %v362 = vadd.f32 %v360, %v361
    %v363 = vsel %vm338, %v357, 0.0
    %v364 = vadd.f32 %v362, %v363
    %v365 = vrot.slane %v364, 4
    %v366 = vadd.f32 %v364, %v365
    %v367 = vrot.slane %v366, 2
    %v368 = vadd.f32 %v366, %v367
    %v369 = vrot.slane %v368, 1
    %v370 = vadd.f32 %v368, %v369
    %371 = vst.msk [vmem:[%s5] sm:$0x1] %vm352, %v370
  $region21: #{_lambda_.13} parent=0 // pred_fallthru
    _
  // Predicated region
  $region22: #{_lambda_.13} parent=0 // pred_check
    _
  $region23: #{_lambda_.13} parent=0 // pred_check_branch
    %373 = sbr.rel (0) target = $region25
  $region24: #{_lambda_.13} parent=0 // pred_region
    _
  $region25: #{_lambda_.13} parent=0 // pred_fallthru
    _
  // Predicated region
  $region26: #{_lambda_.13} parent=0 // pred_check
    _
  $region27: #{_lambda_.13} parent=0 // pred_check_branch
    %375 = sbr.rel (0) target = $region29
  $region28: #{_lambda_.13} parent=0 // pred_region
    _
  $region29: #{_lambda_.13} parent=0 // pred_fallthru
    _
  // Predicated region
  $region30: #{_lambda_.13} parent=0 // pred_check
    _
  $region31: #{_lambda_.13} parent=0 // pred_check_branch
    %377 = sbr.rel (0) target = $region33
  $region32: #{_lambda_.13} parent=0 // pred_region
    _
  $region33: #{_lambda_.13} parent=0 // pred_fallthru
    _
  // Predicated region
  $region34: #{_lambda_.13} parent=0 // pred_check
    _
  $region35: #{_lambda_.13} parent=0 // pred_check_branch
    %379 = sbr.rel (0) target = $region37
  $region36: #{_lambda_.13} parent=0 // pred_region
    _
  $region37: #{_lambda_.13} parent=0 // pred_fallthru
    _
  // Predicated region
  $region38: #{_lambda_.13} parent=0 // pred_check
    _
  $region39: #{_lambda_.13} parent=0 // pred_check_branch
    %381 = sbr.rel (0) target = $region41
  $region40: #{_lambda_.13} parent=0 // pred_region
    _
  $region41: #{_lambda_.13} parent=0 // pred_fallthru
    _
  // Predicated region
  $region42: #{_lambda_.13} parent=0 // pred_check
    _
  $region43: #{_lambda_.13} parent=0 // pred_check_branch
    %383 = sbr.rel (0) target = $region45
  $region44: #{_lambda_.13} parent=0 // pred_region
    _
  $region45: #{_lambda_.13} parent=0 // pred_fallthru
    _

// kernel: _lambda_.14
$region0: #{_lambda_.14}
  #allocation0 [shape = 'u32[]', space=smem, size = 0x4, offset = 0x4, fixed_abs, tag = 'smem constant byte address 0x4 - core index']
  #allocation1 [shape = 'u32[72,128]{1,0:T(1,128)}', space=vmem, size = 0x9000, scoped, tag = 'internal scratch']
  %s0 = inlined_call_operand.vmem [shape: bf16[16,576], index: 0, kind: input, shape index: {}]
  %s1 = inlined_call_operand.vmem [shape: bf16[576,64], index: 1, kind: input, shape index: {}]
  %s2 = inlined_call_operand.vmem [shape: f32[1,64], index: 2, kind: input, shape index: {}]
  %s3 = inlined_call_operand.vmem [shape: bf16[16,64], index: 3, kind: output, shape index: {0}]
  %s4 = inlined_call_operand.vmem [shape: f32[1,1,64], index: 4, kind: output, shape index: {1}]
  %s5 = inlined_call_operand.vmem [shape: f32[1,1,64], index: 5, kind: output, shape index: {2}]
  %6 = xla_tuple %s3, %s4, %s5
  %s7 = sld [smem:[#allocation0]]
  $region46: #{_lambda_.14} parent=0
    _
  %s9 = ssub.s32 1, %s7
  %s10 = scalar_select 0, %s9, %s7
  // Predicated region
  $region2: #{_lambda_.14} parent=0 // pred_check
    _
  $region3: #{_lambda_.14} parent=0 // pred_check_branch
    %12 = sbr.rel (0) target = $region5
  $region4: #{_lambda_.14} parent=0 // pred_region
    _
  $region5: #{_lambda_.14} parent=0 // pred_fallthru
    _
  // Predicated region
  $region6: #{_lambda_.14} parent=0 // pred_check
    _
  $region7: #{_lambda_.14} parent=0 // pred_check_branch
    %14 = sbr.rel (0) target = $region9
  $region8: #{_lambda_.14} parent=0 // pred_region
    _
  $region9: #{_lambda_.14} parent=0 // pred_fallthru
    _
  // Predicated region
  $region10: #{_lambda_.14} parent=0 // pred_check
    _
  $region11: #{_lambda_.14} parent=0 // pred_check_branch
    %16 = sbr.rel (0) target = $region13
  $region12: #{_lambda_.14} parent=0 // pred_region
    _
  $region13: #{_lambda_.14} parent=0 // pred_fallthru
    _
  %v18 = vld [vmem:[%s0] sm:$0xff]
  %v19 = vld [vmem:[%s0 + $0x8] sm:$0xff]
  %v20 = vld [vmem:[%s0 + $0x10] sm:$0xf]
  %v21 = vld [vmem:[%s0 + $0x14] sm:$0xff]
  %v22 = vld [vmem:[%s0 + $0x1c] sm:$0xff]
  %v23 = vld [vmem:[%s0 + $0x24] sm:$0xf]
  %v24 = vld [vmem:[%s1] sm:$0xf]
  %v25 = vld [vmem:[%s1 + $0x4] sm:$0xf]
  %v26 = vld [vmem:[%s1 + $0x8] sm:$0xf]
  %v27 = vld [vmem:[%s1 + $0xc] sm:$0xf]
  %v28 = vld [vmem:[%s1 + $0x10] sm:$0xf]
  %v29 = vld [vmem:[%s1 + $0x14] sm:$0xf]
  %v30 = vld [vmem:[%s1 + $0x18] sm:$0xf]
  %v31 = vld [vmem:[%s1 + $0x1c] sm:$0xf]
  %v32 = vld [vmem:[%s1 + $0x20] sm:$0xf]
  %v33 = vld [vmem:[%s1 + $0x24] sm:$0xf]
  %v34 = vld [vmem:[%s1 + $0x28] sm:$0xf]
  %v35 = vld [vmem:[%s1 + $0x2c] sm:$0xf]
  %v36 = vld [vmem:[%s1 + $0x30] sm:$0xf]
  %v37 = vld [vmem:[%s1 + $0x34] sm:$0xf]
  %v38 = vld [vmem:[%s1 + $0x38] sm:$0xf]
  %v39 = vld [vmem:[%s1 + $0x3c] sm:$0xf]
  %v40 = vld [vmem:[%s1 + $0x40] sm:$0xf]
  %v41 = vld [vmem:[%s1 + $0x44] sm:$0xf]
  %v42 = vld [vmem:[%s1 + $0x48] sm:$0xf]
  %v43 = vld [vmem:[%s1 + $0x4c] sm:$0xf]
  %v44 = vld [vmem:[%s1 + $0x50] sm:$0xf]
  %v45 = vld [vmem:[%s1 + $0x54] sm:$0xf]
  %v46 = vld [vmem:[%s1 + $0x58] sm:$0xf]
  %v47 = vld [vmem:[%s1 + $0x5c] sm:$0xf]
  %v48 = vld [vmem:[%s1 + $0x60] sm:$0xf]
  %v49 = vld [vmem:[%s1 + $0x64] sm:$0xf]
  %v50 = vld [vmem:[%s1 + $0x68] sm:$0xf]
  %v51 = vld [vmem:[%s1 + $0x6c] sm:$0xf]
  %v52 = vld [vmem:[%s1 + $0x70] sm:$0xf]
  %v53 = vld [vmem:[%s1 + $0x74] sm:$0xf]
  %v54 = vld [vmem:[%s1 + $0x78] sm:$0xf]
  %v55 = vld [vmem:[%s1 + $0x7c] sm:$0xf]
  %v56 = vld [vmem:[%s1 + $0x80] sm:$0xf]
  %v57 = vld [vmem:[%s1 + $0x84] sm:$0xf]
  %v58 = vld [vmem:[%s1 + $0x88] sm:$0xf]
  %v59 = vld [vmem:[%s1 + $0x8c] sm:$0xf]
  %v60 = vld [vmem:[%s1 + $0x90] sm:$0xf]
  %v61 = vld [vmem:[%s1 + $0x94] sm:$0xf]
  %v62 = vld [vmem:[%s1 + $0x98] sm:$0xf]
  %v63 = vld [vmem:[%s1 + $0x9c] sm:$0xf]
  %v64 = vld [vmem:[%s1 + $0xa0] sm:$0xf]
  %v65 = vld [vmem:[%s1 + $0xa4] sm:$0xf]
  %v66 = vld [vmem:[%s1 + $0xa8] sm:$0xf]
  %v67 = vld [vmem:[%s1 + $0xac] sm:$0xf]
  %v68 = vld [vmem:[%s1 + $0xb0] sm:$0xf]
  %v69 = vld [vmem:[%s1 + $0xb4] sm:$0xf]
  %v70 = vld [vmem:[%s1 + $0xb8] sm:$0xf]
  %v71 = vld [vmem:[%s1 + $0xbc] sm:$0xf]
  %v72 = vld [vmem:[%s1 + $0xc0] sm:$0xf]
  %v73 = vld [vmem:[%s1 + $0xc4] sm:$0xf]
  %v74 = vld [vmem:[%s1 + $0xc8] sm:$0xf]
  %v75 = vld [vmem:[%s1 + $0xcc] sm:$0xf]
  %v76 = vld [vmem:[%s1 + $0xd0] sm:$0xf]
  %v77 = vld [vmem:[%s1 + $0xd4] sm:$0xf]
  %v78 = vld [vmem:[%s1 + $0xd8] sm:$0xf]
  %v79 = vld [vmem:[%s1 + $0xdc] sm:$0xf]
  %v80 = vld [vmem:[%s1 + $0xe0] sm:$0xf]
  %v81 = vld [vmem:[%s1 + $0xe4] sm:$0xf]
  %v82 = vld [vmem:[%s1 + $0xe8] sm:$0xf]
  %v83 = vld [vmem:[%s1 + $0xec] sm:$0xf]
  %v84 = vld [vmem:[%s1 + $0xf0] sm:$0xf]
  %v85 = vld [vmem:[%s1 + $0xf4] sm:$0xf]
  %v86 = vld [vmem:[%s1 + $0xf8] sm:$0xf]
  %v87 = vld [vmem:[%s1 + $0xfc] sm:$0xf]
  %v88 = vld [vmem:[%s1 + $0x100] sm:$0xf]
  %v89 = vld [vmem:[%s1 + $0x104] sm:$0xf]
  %v90 = vld [vmem:[%s1 + $0x108] sm:$0xf]
  %v91 = vld [vmem:[%s1 + $0x10c] sm:$0xf]
  %v92 = vld [vmem:[%s1 + $0x110] sm:$0xf]
  %v93 = vld [vmem:[%s1 + $0x114] sm:$0xf]
  %v94 = vld [vmem:[%s1 + $0x118] sm:$0xf]
  %v95 = vld [vmem:[%s1 + $0x11c] sm:$0xf]
  %v96 = vld [vmem:[%s2] sm:$0x1]
  %v98 = vperm.slane %v96, 0
  %v106 = vunpack.c.l.b16 %v18
  %v107 = vunpack.c.h.b16 %v18
  %v108 = vunpack.c.l.b16 %v19
  %v109 = vunpack.c.h.b16 %v19
  %v110 = vunpack.c.l.b16 %v20
  %v111 = vunpack.c.l.b16 %v21
  %v112 = vunpack.c.h.b16 %v21
  %v113 = vunpack.c.l.b16 %v22
  %v114 = vunpack.c.h.b16 %v22
  %v115 = vunpack.c.l.b16 %v23
  %v116 = vpack.c.b16 %v111, %v106
  %v117 = vpack.c.b16 %v112, %v107
  %v118 = vpack.c.b16 %v113, %v108
  %v119 = vpack.c.b16 %v114, %v109
  %v120 = vpack.c.b16 %v115, %v110
  %v197 = vunpack.c.l.b16 %v24
  %v198 = vunpack.c.l.b16 %v25
  %v199 = vunpack.c.l.b16 %v26
  %v200 = vunpack.c.l.b16 %v27
  %v201 = vunpack.c.l.b16 %v28
  %v202 = vunpack.c.l.b16 %v29
  %v203 = vunpack.c.l.b16 %v30
  %v204 = vunpack.c.l.b16 %v31
  %v205 = vunpack.c.l.b16 %v32
  %v206 = vunpack.c.l.b16 %v33
  %v207 = vunpack.c.l.b16 %v34
  %v208 = vunpack.c.l.b16 %v35
  %v209 = vunpack.c.l.b16 %v36
  %v210 = vunpack.c.l.b16 %v37
  %v211 = vunpack.c.l.b16 %v38
  %v212 = vunpack.c.l.b16 %v39
  %v213 = vunpack.c.l.b16 %v40
  %v214 = vunpack.c.l.b16 %v41
  %v215 = vunpack.c.l.b16 %v42
  %v216 = vunpack.c.l.b16 %v43
  %v217 = vunpack.c.l.b16 %v44
  %v218 = vunpack.c.l.b16 %v45
  %v219 = vunpack.c.l.b16 %v46
  %v220 = vunpack.c.l.b16 %v47
  %v221 = vunpack.c.l.b16 %v48
  %v222 = vunpack.c.l.b16 %v49
  %v223 = vunpack.c.l.b16 %v50
  %v224 = vunpack.c.l.b16 %v51
  %v225 = vunpack.c.l.b16 %v52
  %v226 = vunpack.c.l.b16 %v53
  %v227 = vunpack.c.l.b16 %v54
  %v228 = vunpack.c.l.b16 %v55
  %v229 = vunpack.c.l.b16 %v56
  %v230 = vunpack.c.l.b16 %v57
  %v231 = vunpack.c.l.b16 %v58
  %v232 = vunpack.c.l.b16 %v59
  %v233 = vunpack.c.l.b16 %v60
  %v234 = vunpack.c.l.b16 %v61
  %v235 = vunpack.c.l.b16 %v62
  %v236 = vunpack.c.l.b16 %v63
  %v237 = vunpack.c.l.b16 %v64
  %v238 = vunpack.c.l.b16 %v65
  %v239 = vunpack.c.l.b16 %v66
  %v240 = vunpack.c.l.b16 %v67
  %v241 = vunpack.c.l.b16 %v68
  %v242 = vunpack.c.l.b16 %v69
  %v243 = vunpack.c.l.b16 %v70
  %v244 = vunpack.c.l.b16 %v71
  %v245 = vunpack.c.l.b16 %v72
  %v246 = vunpack.c.l.b16 %v73
  %v247 = vunpack.c.l.b16 %v74
  %v248 = vunpack.c.l.b16 %v75
  %v249 = vunpack.c.l.b16 %v76
  %v250 = vunpack.c.l.b16 %v77
  %v251 = vunpack.c.l.b16 %v78
  %v252 = vunpack.c.l.b16 %v79
  %v253 = vunpack.c.l.b16 %v80
  %v254 = vunpack.c.l.b16 %v81
  %v255 = vunpack.c.l.b16 %v82
  %v256 = vunpack.c.l.b16 %v83
  %v257 = vunpack.c.l.b16 %v84
  %v258 = vunpack.c.l.b16 %v85
  %v259 = vunpack.c.l.b16 %v86
  %v260 = vunpack.c.l.b16 %v87
  %v261 = vunpack.c.l.b16 %v88
  %v262 = vunpack.c.l.b16 %v89
  %v263 = vunpack.c.l.b16 %v90
  %v264 = vunpack.c.l.b16 %v91
  %v265 = vunpack.c.l.b16 %v92
  %v266 = vunpack.c.l.b16 %v93
  %v267 = vunpack.c.l.b16 %v94
  %v268 = vunpack.c.l.b16 %v95
  %v269 = vpack.c.b16 %v198, %v197
  %v270 = vpack.c.b16 %v200, %v199
  %v271 = vpack.c.b16 %v202, %v201
  %v272 = vpack.c.b16 %v204, %v203
  %v273 = vpack.c.b16 %v206, %v205
  %v274 = vpack.c.b16 %v208, %v207
  %v275 = vpack.c.b16 %v210, %v209
  %v276 = vpack.c.b16 %v212, %v211
  %v277 = vpack.c.b16 %v214, %v213
  %v278 = vpack.c.b16 %v216, %v215
  %v279 = vpack.c.b16 %v218, %v217
  %v280 = vpack.c.b16 %v220, %v219
  %v281 = vpack.c.b16 %v222, %v221
  %v282 = vpack.c.b16 %v224, %v223
  %v283 = vpack.c.b16 %v226, %v225
  %v284 = vpack.c.b16 %v228, %v227
  %v285 = vpack.c.b16 %v230, %v229
  %v286 = vpack.c.b16 %v232, %v231
  %v287 = vpack.c.b16 %v234, %v233
  %v288 = vpack.c.b16 %v236, %v235
  %v289 = vpack.c.b16 %v238, %v237
  %v290 = vpack.c.b16 %v240, %v239
  %v291 = vpack.c.b16 %v242, %v241
  %v292 = vpack.c.b16 %v244, %v243
  %v293 = vpack.c.b16 %v246, %v245
  %v294 = vpack.c.b16 %v248, %v247
  %v295 = vpack.c.b16 %v250, %v249
  %v296 = vpack.c.b16 %v252, %v251
  %v297 = vpack.c.b16 %v254, %v253
  %v298 = vpack.c.b16 %v256, %v255
  %v299 = vpack.c.b16 %v258, %v257
  %v300 = vpack.c.b16 %v260, %v259
  %v301 = vpack.c.b16 %v262, %v261
  %v302 = vpack.c.b16 %v264, %v263
  %v303 = vpack.c.b16 %v266, %v265
  %v304 = vpack.c.b16 %v268, %v267
  %vm341 = vcmask 523264
  %v343 = vsel %vm341, %v120, 0
  %345 = vmatpush.bf16.msra.mxu0 %v276
  %346 = vmatpush.bf16.msra.mxu0 %v275
  %347 = vmatpush.bf16.msra.mxu0 %v274
  %348 = vmatpush.bf16.msra.mxu0 %v273
  %349 = vmatpush.bf16.msra.mxu0 %v272
  %350 = vmatpush.bf16.msra.mxu0 %v271
  %351 = vmatpush.bf16.msra.mxu0 %v270
  %352 = vmatpush.bf16.msra.mxu0 %v269
  %353 = vmatmul.bf16.gmra.mxu0 %v116
  %v354 = vpop.f32.mrf.mxu0
  %v355 = vadd.f32 %v98, %v354
  %v356 = vpop.f32.mrf.mxu0
  %v357 = vadd.f32 %v98, %v356
  %358 = vdwg.mxu0
  %359 = vmatpush.bf16.msra.mxu0 %v284
  %360 = vmatpush.bf16.msra.mxu0 %v283
  %361 = vmatpush.bf16.msra.mxu0 %v282
  %362 = vmatpush.bf16.msra.mxu0 %v281
  %363 = vmatpush.bf16.msra.mxu0 %v280
  %364 = vmatpush.bf16.msra.mxu0 %v279
  %365 = vmatpush.bf16.msra.mxu0 %v278
  %366 = vmatpush.bf16.msra.mxu0 %v277
  %367 = vmatmul.bf16.gmra.mxu0 %v117
  %v368 = vpop.f32.mrf.mxu0
  %v369 = vadd.f32 %v355, %v368
  %v370 = vpop.f32.mrf.mxu0
  %v371 = vadd.f32 %v357, %v370
  %372 = vdwg.mxu0
  %373 = vmatpush.bf16.msra.mxu0 %v292
  %374 = vmatpush.bf16.msra.mxu0 %v291
  %375 = vmatpush.bf16.msra.mxu0 %v290
  %376 = vmatpush.bf16.msra.mxu0 %v289
  %377 = vmatpush.bf16.msra.mxu0 %v288
  %378 = vmatpush.bf16.msra.mxu0 %v287
  %379 = vmatpush.bf16.msra.mxu0 %v286
  %380 = vmatpush.bf16.msra.mxu0 %v285
  %381 = vmatmul.bf16.gmra.mxu0 %v118
  %v382 = vpop.f32.mrf.mxu0
  %v383 = vadd.f32 %v369, %v382
  %v384 = vpop.f32.mrf.mxu0
  %v385 = vadd.f32 %v371, %v384
  %386 = vdwg.mxu0
  %387 = vmatpush.bf16.msra.mxu0 %v300
  %388 = vmatpush.bf16.msra.mxu0 %v299
  %389 = vmatpush.bf16.msra.mxu0 %v298
  %390 = vmatpush.bf16.msra.mxu0 %v297
  %391 = vmatpush.bf16.msra.mxu0 %v296
  %392 = vmatpush.bf16.msra.mxu0 %v295
  %393 = vmatpush.bf16.msra.mxu0 %v294
  %394 = vmatpush.bf16.msra.mxu0 %v293
  %395 = vmatmul.bf16.gmra.mxu0 %v119
  %v396 = vpop.f32.mrf.mxu0
  %v397 = vadd.f32 %v383, %v396
  %v398 = vpop.f32.mrf.mxu0
  %v399 = vadd.f32 %v385, %v398
  %400 = vdwg.mxu0
  %401 = vmatpush.bf16.msra.mxu0 0
  %402 = vmatpush.bf16.msra.mxu0 0
  %403 = vmatpush.bf16.msra.mxu0 0
  %404 = vmatpush.bf16.msra.mxu0 0
  %405 = vmatpush.bf16.msra.mxu0 %v304
  %406 = vmatpush.bf16.msra.mxu0 %v303
  %407 = vmatpush.bf16.msra.mxu0 %v302
  %408 = vmatpush.bf16.msra.mxu0 %v301
  %409 = vmatmul.bf16.gmra.mxu0 %v343
  %v410 = vpop.f32.mrf.mxu0
  %v411 = vadd.f32 %v397, %v410
  %v412 = vpop.f32.mrf.mxu0
  %v413 = vadd.f32 %v399, %v412
  %414 = vdwg.mxu0
  %v415 = vpack.c.bf16 %v411, %v411
  %v416 = vpack.c.bf16 %v413, %v413
  %vm417 = vcmask 519168
  %418 = vst.msk [vmem:[%s3] sm:$0xf] %vm417, %v415
  %419 = vst.msk [vmem:[%s3 + $0x4] sm:$0xf] %vm417, %v416
  %p420 = scmp.lt.s32.totalorder 0, 0
  // Predicated region
  $region14: #{_lambda_.14} parent=0 // pred_check
    %p421 = pneg %p420
  $region15: #{_lambda_.14} parent=0 // pred_check_branch
    %423 = sbr.rel (%p421) target = $region17
  $region16: #{_lambda_.14} parent=0 // pred_region
    %v424 = vsel %vm341, %v411, 0.0
    %v425 = vsel %vm341, %v413, 0.0
    %v426 = vadd.f32 %v424, %v425
    %v427 = vrot.slane %v426, 4
    %v428 = vadd.f32 %v426, %v427
    %v429 = vrot.slane %v428, 2
    %v430 = vadd.f32 %v428, %v429
    %v431 = vrot.slane %v430, 1
    %v432 = vadd.f32 %v430, %v431
    %vm433 = vcmask 516096
    %434 = vst.msk [vmem:[%s4] sm:$0x1] %vm433, %v432
    %v435 = vmul.f32 %v411, %v411
    %v436 = vmul.f32 %v413, %v413
    %v437 = vsel %vm341, %v435, 0.0
    %v438 = vsel %vm341, %v436, 0.0
    %v439 = vadd.f32 %v437, %v438
    %v440 = vrot.slane %v439, 4
    %v441 = vadd.f32 %v439, %v440
    %v442 = vrot.slane %v441, 2
    %v443 = vadd.f32 %v441, %v442
    %v444 = vrot.slane %v443, 1
    %v445 = vadd.f32 %v443, %v444
    %446 = vst.msk [vmem:[%s5] sm:$0x1] %vm433, %v445
  $region17: #{_lambda_.14} parent=0 // pred_fallthru
    _
  %p447 = scmp.eq.s32.totalorder 0, 0
  // Predicated region
  $region18: #{_lambda_.14} parent=0 // pred_check
    %p448 = pneg %p447
  $region19: #{_lambda_.14} parent=0 // pred_check_branch
    %450 = sbr.rel (%p448) target = $region21
  $region20: #{_lambda_.14} parent=0 // pred_region
    %s451 = smul.u32 0, 16
    %v452 = vlaneseq
    %v453 = vshrl.u32 %v452, 7
    %v454 = vadd.s32 %v453, 8
    %v455 = vstv %s451
    %v456 = vadd.s32 %v455, %v453
    %v457 = vadd.s32 %v455, %v454
    %vm458 = vcmp.lt.s32.totalorder %v456, 8
    %vm459 = vcmp.lt.s32.totalorder %v457, 8
    %v460 = vsel %vm458, %v411, 0.0
    %v461 = vsel %vm459, %v413, 0.0
    %v462 = vsel %vm341, %v460, 0.0
    %v463 = vsel %vm341, %v461, 0.0
    %v464 = vadd.f32 %v462, %v463
    %v465 = vrot.slane %v464, 4
    %v466 = vadd.f32 %v464, %v465
    %v467 = vrot.slane %v466, 2
    %v468 = vadd.f32 %v466, %v467
    %v469 = vrot.slane %v468, 1
    %v470 = vadd.f32 %v468, %v469
    %vm471 = vcmask 516096
    %472 = vst.msk [vmem:[%s4] sm:$0x1] %vm471, %v470
    %v473 = vmul.f32 %v460, %v460
    %v474 = vmul.f32 %v461, %v461
    %v475 = vsel %vm341, %v473, 0.0
    %v476 = vsel %vm341, %v474, 0.0
    %v477 = vadd.f32 %v475, %v476
    %v478 = vrot.slane %v477, 4
    %v479 = vadd.f32 %v477, %v478
    %v480 = vrot.slane %v479, 2
    %v481 = vadd.f32 %v479, %v480
    %v482 = vrot.slane %v481, 1
    %v483 = vadd.f32 %v481, %v482
    %484 = vst.msk [vmem:[%s5] sm:$0x1] %vm471, %v483
  $region21: #{_lambda_.14} parent=0 // pred_fallthru
    _
  // Predicated region
  $region22: #{_lambda_.14} parent=0 // pred_check
    _
  $region23: #{_lambda_.14} parent=0 // pred_check_branch
    %486 = sbr.rel (0) target = $region25
  $region24: #{_lambda_.14} parent=0 // pred_region
    _
  $region25: #{_lambda_.14} parent=0 // pred_fallthru
    _
  // Predicated region
  $region26: #{_lambda_.14} parent=0 // pred_check
    _
  $region27: #{_lambda_.14} parent=0 // pred_check_branch
    %488 = sbr.rel (0) target = $region29
  $region28: #{_lambda_.14} parent=0 // pred_region
    _
  $region29: #{_lambda_.14} parent=0 // pred_fallthru
    _
  // Predicated region
  $region30: #{_lambda_.14} parent=0 // pred_check
    _
  $region31: #{_lambda_.14} parent=0 // pred_check_branch
    %490 = sbr.rel (0) target = $region33
  $region32: #{_lambda_.14} parent=0 // pred_region
    _
  $region33: #{_lambda_.14} parent=0 // pred_fallthru
    _
  // Predicated region
  $region34: #{_lambda_.14} parent=0 // pred_check
    _
  $region35: #{_lambda_.14} parent=0 // pred_check_branch
    %492 = sbr.rel (0) target = $region37
  $region36: #{_lambda_.14} parent=0 // pred_region
    _
  $region37: #{_lambda_.14} parent=0 // pred_fallthru
    _
  // Predicated region
  $region38: #{_lambda_.14} parent=0 // pred_check
    _
  $region39: #{_lambda_.14} parent=0 // pred_check_branch
    %494 = sbr.rel (0) target = $region41
  $region40: #{_lambda_.14} parent=0 // pred_region
    _
  $region41: #{_lambda_.14} parent=0 // pred_fallthru
    _
  // Predicated region
  $region42: #{_lambda_.14} parent=0 // pred_check
    _
  $region43: #{_lambda_.14} parent=0 // pred_check_branch
    %496 = sbr.rel (0) target = $region45
  $region44: #{_lambda_.14} parent=0 // pred_region
    _
  $region45: #{_lambda_.14} parent=0 // pred_fallthru
    _

// kernel: _lambda_.15
$region0: #{_lambda_.15}
  #allocation0 [shape = 'u32[]', space=smem, size = 0x4, offset = 0x4, fixed_abs, tag = 'smem constant byte address 0x4 - core index']
  #allocation1 [shape = 'u32[72,128]{1,0:T(1,128)}', space=vmem, size = 0x9000, scoped, tag = 'internal scratch']
  %s0 = inlined_call_operand.vmem [shape: bf16[16,576], index: 0, kind: input, shape index: {}]
  %s1 = inlined_call_operand.vmem [shape: bf16[576,128], index: 1, kind: input, shape index: {}]
  %s2 = inlined_call_operand.vmem [shape: f32[1,128], index: 2, kind: input, shape index: {}]
  %s3 = inlined_call_operand.vmem [shape: bf16[16,128], index: 3, kind: output, shape index: {0}]
  %s4 = inlined_call_operand.vmem [shape: f32[1,1,128], index: 4, kind: output, shape index: {1}]
  %s5 = inlined_call_operand.vmem [shape: f32[1,1,128], index: 5, kind: output, shape index: {2}]
  %6 = xla_tuple %s3, %s4, %s5
  %s7 = sld [smem:[#allocation0]]
  $region46: #{_lambda_.15} parent=0
    _
  %s9 = ssub.s32 1, %s7
  %s10 = scalar_select 0, %s9, %s7
  // Predicated region
  $region2: #{_lambda_.15} parent=0 // pred_check
    _
  $region3: #{_lambda_.15} parent=0 // pred_check_branch
    %12 = sbr.rel (0) target = $region5
  $region4: #{_lambda_.15} parent=0 // pred_region
    _
  $region5: #{_lambda_.15} parent=0 // pred_fallthru
    _
  // Predicated region
  $region6: #{_lambda_.15} parent=0 // pred_check
    _
  $region7: #{_lambda_.15} parent=0 // pred_check_branch
    %14 = sbr.rel (0) target = $region9
  $region8: #{_lambda_.15} parent=0 // pred_region
    _
  $region9: #{_lambda_.15} parent=0 // pred_fallthru
    _
  // Predicated region
  $region10: #{_lambda_.15} parent=0 // pred_check
    _
  $region11: #{_lambda_.15} parent=0 // pred_check_branch
    %16 = sbr.rel (0) target = $region13
  $region12: #{_lambda_.15} parent=0 // pred_region
    _
  $region13: #{_lambda_.15} parent=0 // pred_fallthru
    _
  %v18 = vld [vmem:[%s0] sm:$0xff]
  %v19 = vld [vmem:[%s0 + $0x8] sm:$0xff]
  %v20 = vld [vmem:[%s0 + $0x10] sm:$0xf]
  %v21 = vld [vmem:[%s0 + $0x14] sm:$0xff]
  %v22 = vld [vmem:[%s0 + $0x1c] sm:$0xff]
  %v23 = vld [vmem:[%s0 + $0x24] sm:$0xf]
  %v24 = vld [vmem:[%s1] sm:$0xf]
  %v25 = vld [vmem:[%s1 + $0x4] sm:$0xf]
  %v26 = vld [vmem:[%s1 + $0x8] sm:$0xf]
  %v27 = vld [vmem:[%s1 + $0xc] sm:$0xf]
  %v28 = vld [vmem:[%s1 + $0x10] sm:$0xf]
  %v29 = vld [vmem:[%s1 + $0x14] sm:$0xf]
  %v30 = vld [vmem:[%s1 + $0x18] sm:$0xf]
  %v31 = vld [vmem:[%s1 + $0x1c] sm:$0xf]
  %v32 = vld [vmem:[%s1 + $0x20] sm:$0xf]
  %v33 = vld [vmem:[%s1 + $0x24] sm:$0xf]
  %v34 = vld [vmem:[%s1 + $0x28] sm:$0xf]
  %v35 = vld [vmem:[%s1 + $0x2c] sm:$0xf]
  %v36 = vld [vmem:[%s1 + $0x30] sm:$0xf]
  %v37 = vld [vmem:[%s1 + $0x34] sm:$0xf]
  %v38 = vld [vmem:[%s1 + $0x38] sm:$0xf]
  %v39 = vld [vmem:[%s1 + $0x3c] sm:$0xf]
  %v40 = vld [vmem:[%s1 + $0x40] sm:$0xf]
  %v41 = vld [vmem:[%s1 + $0x44] sm:$0xf]
  %v42 = vld [vmem:[%s1 + $0x48] sm:$0xf]
  %v43 = vld [vmem:[%s1 + $0x4c] sm:$0xf]
  %v44 = vld [vmem:[%s1 + $0x50] sm:$0xf]
  %v45 = vld [vmem:[%s1 + $0x54] sm:$0xf]
  %v46 = vld [vmem:[%s1 + $0x58] sm:$0xf]
  %v47 = vld [vmem:[%s1 + $0x5c] sm:$0xf]
  %v48 = vld [vmem:[%s1 + $0x60] sm:$0xf]
  %v49 = vld [vmem:[%s1 + $0x64] sm:$0xf]
  %v50 = vld [vmem:[%s1 + $0x68] sm:$0xf]
  %v51 = vld [vmem:[%s1 + $0x6c] sm:$0xf]
  %v52 = vld [vmem:[%s1 + $0x70] sm:$0xf]
  %v53 = vld [vmem:[%s1 + $0x74] sm:$0xf]
  %v54 = vld [vmem:[%s1 + $0x78] sm:$0xf]
  %v55 = vld [vmem:[%s1 + $0x7c] sm:$0xf]
  %v56 = vld [vmem:[%s1 + $0x80] sm:$0xf]
  %v57 = vld [vmem:[%s1 + $0x84] sm:$0xf]
  %v58 = vld [vmem:[%s1 + $0x88] sm:$0xf]
  %v59 = vld [vmem:[%s1 + $0x8c] sm:$0xf]
  %v60 = vld [vmem:[%s1 + $0x90] sm:$0xf]
  %v61 = vld [vmem:[%s1 + $0x94] sm:$0xf]
  %v62 = vld [vmem:[%s1 + $0x98] sm:$0xf]
  %v63 = vld [vmem:[%s1 + $0x9c] sm:$0xf]
  %v64 = vld [vmem:[%s1 + $0xa0] sm:$0xf]
  %v65 = vld [vmem:[%s1 + $0xa4] sm:$0xf]
  %v66 = vld [vmem:[%s1 + $0xa8] sm:$0xf]
  %v67 = vld [vmem:[%s1 + $0xac] sm:$0xf]
  %v68 = vld [vmem:[%s1 + $0xb0] sm:$0xf]
  %v69 = vld [vmem:[%s1 + $0xb4] sm:$0xf]
  %v70 = vld [vmem:[%s1 + $0xb8] sm:$0xf]
  %v71 = vld [vmem:[%s1 + $0xbc] sm:$0xf]
  %v72 = vld [vmem:[%s1 + $0xc0] sm:$0xf]
  %v73 = vld [vmem:[%s1 + $0xc4] sm:$0xf]
  %v74 = vld [vmem:[%s1 + $0xc8] sm:$0xf]
  %v75 = vld [vmem:[%s1 + $0xcc] sm:$0xf]
  %v76 = vld [vmem:[%s1 + $0xd0] sm:$0xf]
  %v77 = vld [vmem:[%s1 + $0xd4] sm:$0xf]
  %v78 = vld [vmem:[%s1 + $0xd8] sm:$0xf]
  %v79 = vld [vmem:[%s1 + $0xdc] sm:$0xf]
  %v80 = vld [vmem:[%s1 + $0xe0] sm:$0xf]
  %v81 = vld [vmem:[%s1 + $0xe4] sm:$0xf]
  %v82 = vld [vmem:[%s1 + $0xe8] sm:$0xf]
  %v83 = vld [vmem:[%s1 + $0xec] sm:$0xf]
  %v84 = vld [vmem:[%s1 + $0xf0] sm:$0xf]
  %v85 = vld [vmem:[%s1 + $0xf4] sm:$0xf]
  %v86 = vld [vmem:[%s1 + $0xf8] sm:$0xf]
  %v87 = vld [vmem:[%s1 + $0xfc] sm:$0xf]
  %v88 = vld [vmem:[%s1 + $0x100] sm:$0xf]
  %v89 = vld [vmem:[%s1 + $0x104] sm:$0xf]
  %v90 = vld [vmem:[%s1 + $0x108] sm:$0xf]
  %v91 = vld [vmem:[%s1 + $0x10c] sm:$0xf]
  %v92 = vld [vmem:[%s1 + $0x110] sm:$0xf]
  %v93 = vld [vmem:[%s1 + $0x114] sm:$0xf]
  %v94 = vld [vmem:[%s1 + $0x118] sm:$0xf]
  %v95 = vld [vmem:[%s1 + $0x11c] sm:$0xf]
  %v96 = vld [vmem:[%s2] sm:$0x1]
  %v98 = vperm.slane %v96, 0
  %v106 = vunpack.c.l.b16 %v18
  %v107 = vunpack.c.h.b16 %v18
  %v108 = vunpack.c.l.b16 %v19
  %v109 = vunpack.c.h.b16 %v19
  %v110 = vunpack.c.l.b16 %v20
  %v111 = vunpack.c.l.b16 %v21
  %v112 = vunpack.c.h.b16 %v21
  %v113 = vunpack.c.l.b16 %v22
  %v114 = vunpack.c.h.b16 %v22
  %v115 = vunpack.c.l.b16 %v23
  %v116 = vpack.c.b16 %v111, %v106
  %v117 = vpack.c.b16 %v112, %v107
  %v118 = vpack.c.b16 %v113, %v108
  %v119 = vpack.c.b16 %v114, %v109
  %v120 = vpack.c.b16 %v115, %v110
  %v197 = vunpack.c.l.b16 %v24
  %v198 = vunpack.c.l.b16 %v25
  %v199 = vunpack.c.l.b16 %v26
  %v200 = vunpack.c.l.b16 %v27
  %v201 = vunpack.c.l.b16 %v28
  %v202 = vunpack.c.l.b16 %v29
  %v203 = vunpack.c.l.b16 %v30
  %v204 = vunpack.c.l.b16 %v31
  %v205 = vunpack.c.l.b16 %v32
  %v206 = vunpack.c.l.b16 %v33
  %v207 = vunpack.c.l.b16 %v34
  %v208 = vunpack.c.l.b16 %v35
  %v209 = vunpack.c.l.b16 %v36
  %v210 = vunpack.c.l.b16 %v37
  %v211 = vunpack.c.l.b16 %v38
  %v212 = vunpack.c.l.b16 %v39
  %v213 = vunpack.c.l.b16 %v40
  %v214 = vunpack.c.l.b16 %v41
  %v215 = vunpack.c.l.b16 %v42
  %v216 = vunpack.c.l.b16 %v43
  %v217 = vunpack.c.l.b16 %v44
  %v218 = vunpack.c.l.b16 %v45
  %v219 = vunpack.c.l.b16 %v46
  %v220 = vunpack.c.l.b16 %v47
  %v221 = vunpack.c.l.b16 %v48
  %v222 = vunpack.c.l.b16 %v49
  %v223 = vunpack.c.l.b16 %v50
  %v224 = vunpack.c.l.b16 %v51
  %v225 = vunpack.c.l.b16 %v52
  %v226 = vunpack.c.l.b16 %v53
  %v227 = vunpack.c.l.b16 %v54
  %v228 = vunpack.c.l.b16 %v55
  %v229 = vunpack.c.l.b16 %v56
  %v230 = vunpack.c.l.b16 %v57
  %v231 = vunpack.c.l.b16 %v58
  %v232 = vunpack.c.l.b16 %v59
  %v233 = vunpack.c.l.b16 %v60
  %v234 = vunpack.c.l.b16 %v61
  %v235 = vunpack.c.l.b16 %v62
  %v236 = vunpack.c.l.b16 %v63
  %v237 = vunpack.c.l.b16 %v64
  %v238 = vunpack.c.l.b16 %v65
  %v239 = vunpack.c.l.b16 %v66
  %v240 = vunpack.c.l.b16 %v67
  %v241 = vunpack.c.l.b16 %v68
  %v242 = vunpack.c.l.b16 %v69
  %v243 = vunpack.c.l.b16 %v70
  %v244 = vunpack.c.l.b16 %v71
  %v245 = vunpack.c.l.b16 %v72
  %v246 = vunpack.c.l.b16 %v73
  %v247 = vunpack.c.l.b16 %v74
  %v248 = vunpack.c.l.b16 %v75
  %v249 = vunpack.c.l.b16 %v76
  %v250 = vunpack.c.l.b16 %v77
  %v251 = vunpack.c.l.b16 %v78
  %v252 = vunpack.c.l.b16 %v79
  %v253 = vunpack.c.l.b16 %v80
  %v254 = vunpack.c.l.b16 %v81
  %v255 = vunpack.c.l.b16 %v82
  %v256 = vunpack.c.l.b16 %v83
  %v257 = vunpack.c.l.b16 %v84
  %v258 = vunpack.c.l.b16 %v85
  %v259 = vunpack.c.l.b16 %v86
  %v260 = vunpack.c.l.b16 %v87
  %v261 = vunpack.c.l.b16 %v88
  %v262 = vunpack.c.l.b16 %v89
  %v263 = vunpack.c.l.b16 %v90
  %v264 = vunpack.c.l.b16 %v91
  %v265 = vunpack.c.l.b16 %v92
  %v266 = vunpack.c.l.b16 %v93
  %v267 = vunpack.c.l.b16 %v94
  %v268 = vunpack.c.l.b16 %v95
  %v269 = vpack.c.b16 %v198, %v197
  %v270 = vpack.c.b16 %v200, %v199
  %v271 = vpack.c.b16 %v202, %v201
  %v272 = vpack.c.b16 %v204, %v203
  %v273 = vpack.c.b16 %v206, %v205
  %v274 = vpack.c.b16 %v208, %v207
  %v275 = vpack.c.b16 %v210, %v209
  %v276 = vpack.c.b16 %v212, %v211
  %v277 = vpack.c.b16 %v214, %v213
  %v278 = vpack.c.b16 %v216, %v215
  %v279 = vpack.c.b16 %v218, %v217
  %v280 = vpack.c.b16 %v220, %v219
  %v281 = vpack.c.b16 %v222, %v221
  %v282 = vpack.c.b16 %v224, %v223
  %v283 = vpack.c.b16 %v226, %v225
  %v284 = vpack.c.b16 %v228, %v227
  %v285 = vpack.c.b16 %v230, %v229
  %v286 = vpack.c.b16 %v232, %v231
  %v287 = vpack.c.b16 %v234, %v233
  %v288 = vpack.c.b16 %v236, %v235
  %v289 = vpack.c.b16 %v238, %v237
  %v290 = vpack.c.b16 %v240, %v239
  %v291 = vpack.c.b16 %v242, %v241
  %v292 = vpack.c.b16 %v244, %v243
  %v293 = vpack.c.b16 %v246, %v245
  %v294 = vpack.c.b16 %v248, %v247
  %v295 = vpack.c.b16 %v250, %v249
  %v296 = vpack.c.b16 %v252, %v251
  %v297 = vpack.c.b16 %v254, %v253
  %v298 = vpack.c.b16 %v256, %v255
  %v299 = vpack.c.b16 %v258, %v257
  %v300 = vpack.c.b16 %v260, %v259
  %v301 = vpack.c.b16 %v262, %v261
  %v302 = vpack.c.b16 %v264, %v263
  %v303 = vpack.c.b16 %v266, %v265
  %v304 = vpack.c.b16 %v268, %v267
  %vm341 = vcmask 523264
  %v343 = vsel %vm341, %v120, 0
  %345 = vmatpush.bf16.msra.mxu0 %v276
  %346 = vmatpush.bf16.msra.mxu0 %v275
  %347 = vmatpush.bf16.msra.mxu0 %v274
  %348 = vmatpush.bf16.msra.mxu0 %v273
  %349 = vmatpush.bf16.msra.mxu0 %v272
  %350 = vmatpush.bf16.msra.mxu0 %v271
  %351 = vmatpush.bf16.msra.mxu0 %v270
  %352 = vmatpush.bf16.msra.mxu0 %v269
  %353 = vmatmul.bf16.gmra.mxu0 %v116
  %v354 = vpop.f32.mrf.mxu0
  %v355 = vadd.f32 %v98, %v354
  %v356 = vpop.f32.mrf.mxu0
  %v357 = vadd.f32 %v98, %v356
  %358 = vdwg.mxu0
  %359 = vmatpush.bf16.msra.mxu0 %v284
  %360 = vmatpush.bf16.msra.mxu0 %v283
  %361 = vmatpush.bf16.msra.mxu0 %v282
  %362 = vmatpush.bf16.msra.mxu0 %v281
  %363 = vmatpush.bf16.msra.mxu0 %v280
  %364 = vmatpush.bf16.msra.mxu0 %v279
  %365 = vmatpush.bf16.msra.mxu0 %v278
  %366 = vmatpush.bf16.msra.mxu0 %v277
  %367 = vmatmul.bf16.gmra.mxu0 %v117
  %v368 = vpop.f32.mrf.mxu0
  %v369 = vadd.f32 %v355, %v368
  %v370 = vpop.f32.mrf.mxu0
  %v371 = vadd.f32 %v357, %v370
  %372 = vdwg.mxu0
  %373 = vmatpush.bf16.msra.mxu0 %v292
  %374 = vmatpush.bf16.msra.mxu0 %v291
  %375 = vmatpush.bf16.msra.mxu0 %v290
  %376 = vmatpush.bf16.msra.mxu0 %v289
  %377 = vmatpush.bf16.msra.mxu0 %v288
  %378 = vmatpush.bf16.msra.mxu0 %v287
  %379 = vmatpush.bf16.msra.mxu0 %v286
  %380 = vmatpush.bf16.msra.mxu0 %v285
  %381 = vmatmul.bf16.gmra.mxu0 %v118
  %v382 = vpop.f32.mrf.mxu0
  %v383 = vadd.f32 %v369, %v382
  %v384 = vpop.f32.mrf.mxu0
  %v385 = vadd.f32 %v371, %v384
  %386 = vdwg.mxu0
  %387 = vmatpush.bf16.msra.mxu0 %v300
  %388 = vmatpush.bf16.msra.mxu0 %v299
  %389 = vmatpush.bf16.msra.mxu0 %v298
  %390 = vmatpush.bf16.msra.mxu0 %v297
  %391 = vmatpush.bf16.msra.mxu0 %v296
  %392 = vmatpush.bf16.msra.mxu0 %v295
  %393 = vmatpush.bf16.msra.mxu0 %v294
  %394 = vmatpush.bf16.msra.mxu0 %v293
  %395 = vmatmul.bf16.gmra.mxu0 %v119
  %v396 = vpop.f32.mrf.mxu0
  %v397 = vadd.f32 %v383, %v396
  %v398 = vpop.f32.mrf.mxu0
  %v399 = vadd.f32 %v385, %v398
  %400 = vdwg.mxu0
  %401 = vmatpush.bf16.msra.mxu0 0
  %402 = vmatpush.bf16.msra.mxu0 0
  %403 = vmatpush.bf16.msra.mxu0 0
  %404 = vmatpush.bf16.msra.mxu0 0
  %405 = vmatpush.bf16.msra.mxu0 %v304
  %406 = vmatpush.bf16.msra.mxu0 %v303
  %407 = vmatpush.bf16.msra.mxu0 %v302
  %408 = vmatpush.bf16.msra.mxu0 %v301
  %409 = vmatmul.bf16.gmra.mxu0 %v343
  %v410 = vpop.f32.mrf.mxu0
  %v411 = vadd.f32 %v397, %v410
  %v412 = vpop.f32.mrf.mxu0
  %v413 = vadd.f32 %v399, %v412
  %414 = vdwg.mxu0
  %v415 = vpack.c.bf16 %v411, %v411
  %v416 = vpack.c.bf16 %v413, %v413
  %417 = vst [vmem:[%s3] sm:$0xf] %v415
  %418 = vst [vmem:[%s3 + $0x4] sm:$0xf] %v416
  %p419 = scmp.lt.s32.totalorder 0, 0
  // Predicated region
  $region14: #{_lambda_.15} parent=0 // pred_check
    %p420 = pneg %p419
  $region15: #{_lambda_.15} parent=0 // pred_check_branch
    %422 = sbr.rel (%p420) target = $region17
  $region16: #{_lambda_.15} parent=0 // pred_region
    %v423 = vadd.f32 %v411, %v413
    %v424 = vrot.slane %v423, 4
    %v425 = vadd.f32 %v423, %v424
    %v426 = vrot.slane %v425, 2
    %v427 = vadd.f32 %v425, %v426
    %v428 = vrot.slane %v427, 1
    %v429 = vadd.f32 %v427, %v428
    %430 = vst [vmem:[%s4] sm:$0x1] %v429
    %v431 = vmul.f32 %v411, %v411
    %v432 = vmul.f32 %v413, %v413
    %v433 = vadd.f32 %v431, %v432
    %v434 = vrot.slane %v433, 4
    %v435 = vadd.f32 %v433, %v434
    %v436 = vrot.slane %v435, 2
    %v437 = vadd.f32 %v435, %v436
    %v438 = vrot.slane %v437, 1
    %v439 = vadd.f32 %v437, %v438
    %440 = vst [vmem:[%s5] sm:$0x1] %v439
  $region17: #{_lambda_.15} parent=0 // pred_fallthru
    _
  %p441 = scmp.eq.s32.totalorder 0, 0
  // Predicated region
  $region18: #{_lambda_.15} parent=0 // pred_check
    %p442 = pneg %p441
  $region19: #{_lambda_.15} parent=0 // pred_check_branch
    %444 = sbr.rel (%p442) target = $region21
  $region20: #{_lambda_.15} parent=0 // pred_region
    %s445 = smul.u32 0, 16
    %v446 = vlaneseq
    %v447 = vshrl.u32 %v446, 7
    %v448 = vadd.s32 %v447, 8
    %v449 = vstv %s445
    %v450 = vadd.s32 %v449, %v447
    %v451 = vadd.s32 %v449, %v448
    %vm452 = vcmp.lt.s32.totalorder %v450, 8
    %vm453 = vcmp.lt.s32.totalorder %v451, 8
    %v454 = vsel %vm452, %v411, 0.0
    %v455 = vsel %vm453, %v413, 0.0
    %v456 = vadd.f32 %v454, %v455
    %v457 = vrot.slane %v456, 4
    %v458 = vadd.f32 %v456, %v457
    %v459 = vrot.slane %v458, 2
    %v460 = vadd.f32 %v458, %v459
    %v461 = vrot.slane %v460, 1
    %v462 = vadd.f32 %v460, %v461
    %463 = vst [vmem:[%s4] sm:$0x1] %v462
    %v464 = vmul.f32 %v454, %v454
    %v465 = vmul.f32 %v455, %v455
    %v466 = vadd.f32 %v464, %v465
    %v467 = vrot.slane %v466, 4
    %v468 = vadd.f32 %v466, %v467
    %v469 = vrot.slane %v468, 2
    %v470 = vadd.f32 %v468, %v469
    %v471 = vrot.slane %v470, 1
    %v472 = vadd.f32 %v470, %v471
    %473 = vst [vmem:[%s5] sm:$0x1] %v472
  $region21: #{_lambda_.15} parent=0 // pred_fallthru
    _
  // Predicated region
  $region22: #{_lambda_.15} parent=0 // pred_check
    _
  $region23: #{_lambda_.15} parent=0 // pred_check_branch
    %475 = sbr.rel (0) target = $region25
  $region24: #{_lambda_.15} parent=0 // pred_region
    _
  $region25: #{_lambda_.15} parent=0 // pred_fallthru
    _
  // Predicated region
  $region26: #{_lambda_.15} parent=0 // pred_check
    _
  $region27: #{_lambda_.15} parent=0 // pred_check_branch
    %477 = sbr.rel (0) target = $region29
  $region28: #{_lambda_.15} parent=0 // pred_region
    _
  $region29: #{_lambda_.15} parent=0 // pred_fallthru
    _
  // Predicated region
  $region30: #{_lambda_.15} parent=0 // pred_check
    _
  $region31: #{_lambda_.15} parent=0 // pred_check_branch
    %479 = sbr.rel (0) target = $region33
  $region32: #{_lambda_.15} parent=0 // pred_region
    _
  $region33: #{_lambda_.15} parent=0 // pred_fallthru
    _
  // Predicated region
  $region34: #{_lambda_.15} parent=0 // pred_check
    _
  $region35: #{_lambda_.15} parent=0 // pred_check_branch
    %481 = sbr.rel (0) target = $region37
  $region36: #{_lambda_.15} parent=0 // pred_region
    _
  $region37: #{_lambda_.15} parent=0 // pred_fallthru
    _
  // Predicated region
  $region38: #{_lambda_.15} parent=0 // pred_check
    _
  $region39: #{_lambda_.15} parent=0 // pred_check_branch
    %483 = sbr.rel (0) target = $region41
  $region40: #{_lambda_.15} parent=0 // pred_region
    _
  $region41: #{_lambda_.15} parent=0 // pred_fallthru
    _
  // Predicated region
  $region42: #{_lambda_.15} parent=0 // pred_check
    _
  $region43: #{_lambda_.15} parent=0 // pred_check_branch
    %485 = sbr.rel (0) target = $region45
  $region44: #{_lambda_.15} parent=0 // pred_region
    _
  $region45: #{_lambda_.15} parent=0 // pred_fallthru
    _

// kernel: _lambda_.17
$region0: #{_lambda_.17}
  #allocation0 [shape = 'u32[]', space=smem, size = 0x4, offset = 0x4, fixed_abs, tag = 'smem constant byte address 0x4 - core index']
  #allocation1 [shape = 'u32[72,128]{1,0:T(1,128)}', space=vmem, size = 0x9000, scoped, tag = 'internal scratch']
  #allocation2 [shape = 'f32[1,1]{1,0:T(1,128)S(1)}', space=vmem, size = 0x200, scoped, tag = 'scoped memory for _lambda_.17']
  %s0 = inlined_call_operand.vmem [shape: f32[2,8,128], index: 0, kind: input, shape index: {}]
  %s1 = inlined_call_operand.vmem [shape: bf16[128,256], index: 1, kind: input, shape index: {}]
  %s2 = inlined_call_operand.vmem [shape: f32[1,256], index: 2, kind: input, shape index: {}]
  %s3 = inlined_call_operand.vmem [shape: f32[1,256], index: 3, kind: input, shape index: {}]
  %s4 = inlined_call_operand.<no memory space> [shape: f32[1,1], index: 4, kind: input, shape index: {}]
  %s5 = inlined_call_operand.vmem [shape: f32[2,1,1], index: 5, kind: output, shape index: {}]
  %s6 = sld [smem:[#allocation0]]
  $region53: #{_lambda_.17} parent=0
    _
  %s8 = ssub.s32 1, %s6
  %s9 = scalar_select 0, %s8, %s6
  %v10 = vstv %s4
  %11 = vst [vmem:[#allocation2] sm:$0x1] %v10
  loop: start=0, step=1, limit=4
  $region2: #{_lambda_.17} parent=0 // loop_pre_header
    _
  $region3: #{_lambda_.17} parent=0 // loop_header
    %s13 = sphi 0, %s17
    %p14 = scmp.ge.s32.totalorder %s13, 4
    %s23 = sphi 0, %s25
    %s26 = sphi 0, %s23
    %s27 = sphi 0, %s26
    %s43 = sphi 0, %s27
    %s47 = sphi 0, %s47
    %s49 = sphi 0, %s47
    %s50 = sphi 0, %s49
    %s64 = sphi 0, %s50
    %s68 = sphi 0, %s68
    %s70 = sphi 0, %s68
    %s71 = sphi 0, %s70
    %s85 = sphi 0, %s71
    %s89 = sphi 0, %s89
    %s91 = sphi 0, %s89
    %s92 = sphi 0, %s91
    %s106 = sphi 0, %s92
    %s110 = sphi 0, %s110
    %s112 = sphi 0, %s110
    %s113 = sphi 0, %s112
    %s127 = sphi 0, %s113
    %s133 = sphi 0, %s135
    %s136 = sphi 0, %s133
    %s137 = sphi 0, %s136
    %s153 = sphi 0, %s137
  $region4: #{_lambda_.17} parent=0 // loop_header_branch
    %16 = sbr.rel (%p14) target = $region8
  $region5: #{_lambda_.17} parent=0 // loop_body
    %s18 = ssub.s32 %s13, 1
    %s19 = ssub.s32 %s13, 2
    %s20 = sadd.s32 %s13, 1
    %s21 = ssub.s32 %s13, %s20
    %p22 = scmp.eq.s32.totalorder %s21, 0
    %s24 = sadd.s32 %s23, 1
    %s25 = scalar_select %p22, %s23, %s24
    %p28 = pneg %p22
    %p29 = scmp.eq.s32.totalorder %s13, 1
    %p30 = por %p28, %p29
    %p31 = scmp.ne.s32.totalorder %s23, %s26
    %p32 = scmp.eq.s32.totalorder %s13, 0
    %p33 = por %p31, %p32
    %p34 = scmp.ne.s32.totalorder %s23, %s26
    %p35 = scmp.eq.s32.totalorder %s18, 1
    %p36 = por %p34, %p35
    %p37 = scmp.ne.s32.totalorder %s26, %s27
    %p38 = scmp.eq.s32.totalorder %s18, 0
    %p39 = por %p37, %p38
    %p40 = scmp.ne.s32.totalorder %s26, %s27
    %p41 = scmp.eq.s32.totalorder %s19, 1
    %p42 = por %p40, %p41
    %p44 = scmp.ne.s32.totalorder %s27, %s43
    %p45 = scmp.eq.s32.totalorder %s19, 0
    %p46 = por %p44, %p45
    %s48 = sadd.s32 %s47, 1
    %p51 = scmp.eq.s32.totalorder %s13, 1
    %p52 = scmp.ne.s32.totalorder %s47, %s49
    %p53 = scmp.eq.s32.totalorder %s13, 0
    %p54 = por %p52, %p53
    %p55 = scmp.ne.s32.totalorder %s47, %s49
    %p56 = scmp.eq.s32.totalorder %s18, 1
    %p57 = por %p55, %p56
    %p58 = scmp.ne.s32.totalorder %s49, %s50
    %p59 = scmp.eq.s32.totalorder %s18, 0
    %p60 = por %p58, %p59
    %p61 = scmp.ne.s32.totalorder %s49, %s50
    %p62 = scmp.eq.s32.totalorder %s19, 1
    %p63 = por %p61, %p62
    %p65 = scmp.ne.s32.totalorder %s50, %s64
    %p66 = scmp.eq.s32.totalorder %s19, 0
    %p67 = por %p65, %p66
    %s69 = sadd.s32 %s68, 1
    %p72 = scmp.eq.s32.totalorder %s13, 1
    %p73 = scmp.ne.s32.totalorder %s68, %s70
    %p74 = scmp.eq.s32.totalorder %s13, 0
    %p75 = por %p73, %p74
    %p76 = scmp.ne.s32.totalorder %s68, %s70
    %p77 = scmp.eq.s32.totalorder %s18, 1
    %p78 = por %p76, %p77
    %p79 = scmp.ne.s32.totalorder %s70, %s71
    %p80 = scmp.eq.s32.totalorder %s18, 0
    %p81 = por %p79, %p80
    %p82 = scmp.ne.s32.totalorder %s70, %s71
    %p83 = scmp.eq.s32.totalorder %s19, 1
    %p84 = por %p82, %p83
    %p86 = scmp.ne.s32.totalorder %s71, %s85
    %p87 = scmp.eq.s32.totalorder %s19, 0
    %p88 = por %p86, %p87
    %s90 = sadd.s32 %s89, 1
    %p93 = scmp.eq.s32.totalorder %s13, 1
    %p94 = scmp.ne.s32.totalorder %s89, %s91
    %p95 = scmp.eq.s32.totalorder %s13, 0
    %p96 = por %p94, %p95
    %p97 = scmp.ne.s32.totalorder %s89, %s91
    %p98 = scmp.eq.s32.totalorder %s18, 1
    %p99 = por %p97, %p98
    %p100 = scmp.ne.s32.totalorder %s91, %s92
    %p101 = scmp.eq.s32.totalorder %s18, 0
    %p102 = por %p100, %p101
    %p103 = scmp.ne.s32.totalorder %s91, %s92
    %p104 = scmp.eq.s32.totalorder %s19, 1
    %p105 = por %p103, %p104
    %p107 = scmp.ne.s32.totalorder %s92, %s106
    %p108 = scmp.eq.s32.totalorder %s19, 0
    %p109 = por %p107, %p108
    %s111 = sadd.s32 %s110, 1
    %p114 = scmp.eq.s32.totalorder %s13, 1
    %p115 = scmp.ne.s32.totalorder %s110, %s112
    %p116 = scmp.eq.s32.totalorder %s13, 0
    %p117 = por %p115, %p116
    %p118 = scmp.ne.s32.totalorder %s110, %s112
    %p119 = scmp.eq.s32.totalorder %s18, 1
    %p120 = por %p118, %p119
    %p121 = scmp.ne.s32.totalorder %s112, %s113
    %p122 = scmp.eq.s32.totalorder %s18, 0
    %p123 = por %p121, %p122
    %p124 = scmp.ne.s32.totalorder %s112, %s113
    %p125 = scmp.eq.s32.totalorder %s19, 1
    %p126 = por %p124, %p125
    %p128 = scmp.ne.s32.totalorder %s113, %s127
    %p129 = scmp.eq.s32.totalorder %s19, 0
    %p130 = por %p128, %p129
    %s131 = ssub.s32 %s13, %s20
    %p132 = scmp.eq.s32.totalorder %s131, 0
    %s134 = sadd.s32 %s133, 1
    %s135 = scalar_select %p132, %s133, %s134
    %p138 = pneg %p132
    %p139 = scmp.eq.s32.totalorder %s13, 1
    %p140 = por %p138, %p139
    %p141 = scmp.ne.s32.totalorder %s133, %s136
    %p142 = scmp.eq.s32.totalorder %s13, 0
    %p143 = por %p141, %p142
    %p144 = scmp.ne.s32.totalorder %s133, %s136
    %p145 = scmp.eq.s32.totalorder %s18, 1
    %p146 = por %p144, %p145
    %p147 = scmp.ne.s32.totalorder %s136, %s137
    %p148 = scmp.eq.s32.totalorder %s18, 0
    %p149 = por %p147, %p148
    %p150 = scmp.ne.s32.totalorder %s136, %s137
    %p151 = scmp.eq.s32.totalorder %s19, 1
    %p152 = por %p150, %p151
    %p154 = scmp.ne.s32.totalorder %s137, %s153
    %p155 = scmp.eq.s32.totalorder %s19, 0
    %p156 = por %p154, %p155
    %p157 = scmp.le.s32.totalorder 1, %s13
    %p158 = scmp.lt.s32.totalorder %s13, 3
    %p159 = pnand %p157, %p158
    %p160 = pneg %p159
    // Predicated region
    $region9: #{_lambda_.17} parent=5 // pred_check
      _
    $region10: #{_lambda_.17} parent=5 // pred_check_branch
      %162 = sbr.rel (%p159) target = $region12
    $region11: #{_lambda_.17} parent=5 // pred_region
      %s163 = ssub.s32 %s13, 1
      // Predicated region
      $region13: #{_lambda_.17} parent=11 // pred_check
        %p164 = pneg %p60
      $region14: #{_lambda_.17} parent=11 // pred_check_branch
        %166 = sbr.rel (%p164) target = $region16
      $region15: #{_lambda_.17} parent=11 // pred_region
        _
      $region16: #{_lambda_.17} parent=11 // pred_fallthru
        _
      // Predicated region
      $region17: #{_lambda_.17} parent=11 // pred_check
        %p167 = pneg %p81
      $region18: #{_lambda_.17} parent=11 // pred_check_branch
        %169 = sbr.rel (%p167) target = $region20
      $region19: #{_lambda_.17} parent=11 // pred_region
        _
      $region20: #{_lambda_.17} parent=11 // pred_fallthru
        _
      // Predicated region
      $region21: #{_lambda_.17} parent=11 // pred_check
        %p170 = pneg %p102
      $region22: #{_lambda_.17} parent=11 // pred_check_branch
        %172 = sbr.rel (%p170) target = $region24
      $region23: #{_lambda_.17} parent=11 // pred_region
        _
      $region24: #{_lambda_.17} parent=11 // pred_fallthru
        _
      // Predicated region
      $region25: #{_lambda_.17} parent=11 // pred_check
        %p173 = pneg %p123
      $region26: #{_lambda_.17} parent=11 // pred_check_branch
        %175 = sbr.rel (%p173) target = $region28
      $region27: #{_lambda_.17} parent=11 // pred_region
        _
      $region28: #{_lambda_.17} parent=11 // pred_fallthru
        _
    $region12: #{_lambda_.17} parent=5 // pred_fallthru
      _
    %p176 = scmp.lt.s32.totalorder %s13, 2
    // Predicated region
    $region29: #{_lambda_.17} parent=5 // pred_check
      %p177 = pneg %p176
    $region30: #{_lambda_.17} parent=5 // pred_check_branch
      %179 = sbr.rel (%p177) target = $region32
    $region31: #{_lambda_.17} parent=5 // pred_region
      // Predicated region
      $region33: #{_lambda_.17} parent=31 // pred_check
        %p180 = pneg %p33
      $region34: #{_lambda_.17} parent=31 // pred_check_branch
        %182 = sbr.rel (%p180) target = $region36
      $region35: #{_lambda_.17} parent=31 // pred_region
        %p183 = scmp.lt.s32.totalorder %s13, 1
        %s184 = scalar_select %p183, %s13, 1
        %s185 = smul.addr %s184, 8
        %s186 = scalar_lea.vmem %s0, %s185
      $region36: #{_lambda_.17} parent=31 // pred_fallthru
        _
    $region32: #{_lambda_.17} parent=5 // pred_fallthru
      _
    %p187 = scmp.le.s32.totalorder 1, %s13
    %p188 = scmp.lt.s32.totalorder %s13, 3
    %p189 = pnand %p187, %p188
    %p190 = pneg %p189
    // Predicated region
    $region37: #{_lambda_.17} parent=5 // pred_check
      _
    $region38: #{_lambda_.17} parent=5 // pred_check_branch
      %192 = sbr.rel (%p189) target = $region40
    $region39: #{_lambda_.17} parent=5 // pred_region
      %s193 = ssub.s32 %s13, 1
      %p194 = scmp.lt.s32.totalorder %s18, 1
      %s195 = scalar_select %p194, %s18, 1
      %s196 = smul.addr %s195, 8
      %s197 = scalar_lea.vmem %s0, %s196
      %p198 = pneg %p39
      %p199 = pneg %p36
      %p200 = pneg %p60
      %p201 = pneg %p57
      %p202 = pneg %p81
      %p203 = pneg %p78
      %p204 = pneg %p102
      %p205 = pneg %p99
      %p206 = pneg %p123
      %p207 = pneg %p120
      %p208 = pneg %p149
      %p209 = pneg %p146
      %p210 = scmp.lt.s32.totalorder %s18, 1
      %s211 = scalar_select %p210, %s18, 1
      %s212 = scalar_lea.vmem %s5, %s211
      %p213 = scmp.lt.s32.totalorder %s18, 1
      %s214 = scalar_select %p213, %s18, 1
      %s215 = smul.addr %s214, 8
      %s216 = scalar_lea.vmem %s0, %s215
      %p217 = scmp.lt.s32.totalorder %s18, 1
      %s218 = scalar_select %p217, %s18, 1
      %s219 = scalar_lea.vmem %s5, %s218
      %v220 = vld [vmem:[%s216] sm:$0xff]
      %v221 = vrot.slane %v220, 4
      %v222 = vadd.f32 %v220, %v221
      %v223 = vrot.slane %v222, 2
      %v224 = vadd.f32 %v222, %v223
      %v225 = vrot.slane %v224, 1
      %v226 = vadd.f32 %v224, %v225
      %v227 = vpack.c.bf16 %v226, %v226
      %v228 = vld [vmem:[%s1] sm:$0xff]
      %v229 = vld [vmem:[%s1 + $0x8] sm:$0xff]
      %v230 = vld [vmem:[%s1 + $0x10] sm:$0xff]
      %v231 = vld [vmem:[%s1 + $0x18] sm:$0xff]
      %v232 = vld [vmem:[%s1 + $0x20] sm:$0xff]
      %v233 = vld [vmem:[%s1 + $0x28] sm:$0xff]
      %v234 = vld [vmem:[%s1 + $0x30] sm:$0xff]
      %v235 = vld [vmem:[%s1 + $0x38] sm:$0xff]
      %v236 = vld [vmem:[%s1 + $0x40] sm:$0xff]
      %v237 = vld [vmem:[%s1 + $0x48] sm:$0xff]
      %v238 = vld [vmem:[%s1 + $0x50] sm:$0xff]
      %v239 = vld [vmem:[%s1 + $0x58] sm:$0xff]
      %v240 = vld [vmem:[%s1 + $0x60] sm:$0xff]
      %v241 = vld [vmem:[%s1 + $0x68] sm:$0xff]
      %v242 = vld [vmem:[%s1 + $0x70] sm:$0xff]
      %v243 = vld [vmem:[%s1 + $0x78] sm:$0xff]
      %v244 = vld [vmem:[%s2] sm:$0x3]
      %v246 = vperm.slane %v244, 0
      %v247 = vperm.slane %v244, 1
      %v266 = vunpack.c.l.b16 %v228
      %v267 = vunpack.c.h.b16 %v228
      %v268 = vunpack.c.l.b16 %v229
      %v269 = vunpack.c.h.b16 %v229
      %v270 = vunpack.c.l.b16 %v230
      %v271 = vunpack.c.h.b16 %v230
      %v272 = vunpack.c.l.b16 %v231
      %v273 = vunpack.c.h.b16 %v231
      %v274 = vunpack.c.l.b16 %v232
      %v275 = vunpack.c.h.b16 %v232
      %v276 = vunpack.c.l.b16 %v233
      %v277 = vunpack.c.h.b16 %v233
      %v278 = vunpack.c.l.b16 %v234
      %v279 = vunpack.c.h.b16 %v234
      %v280 = vunpack.c.l.b16 %v235
      %v281 = vunpack.c.h.b16 %v235
      %v282 = vunpack.c.l.b16 %v236
      %v283 = vunpack.c.h.b16 %v236
      %v284 = vunpack.c.l.b16 %v237
      %v285 = vunpack.c.h.b16 %v237
      %v286 = vunpack.c.l.b16 %v238
      %v287 = vunpack.c.h.b16 %v238
      %v288 = vunpack.c.l.b16 %v239
      %v289 = vunpack.c.h.b16 %v239
      %v290 = vunpack.c.l.b16 %v240
      %v291 = vunpack.c.h.b16 %v240
      %v292 = vunpack.c.l.b16 %v241
      %v293 = vunpack.c.h.b16 %v241
      %v294 = vunpack.c.l.b16 %v242
      %v295 = vunpack.c.h.b16 %v242
      %v296 = vunpack.c.l.b16 %v243
      %v297 = vunpack.c.h.b16 %v243
      %v298 = vpack.c.b16 %v268, %v266
      %v299 = vpack.c.b16 %v269, %v267
      %v300 = vpack.c.b16 %v272, %v270
      %v301 = vpack.c.b16 %v273, %v271
      %v302 = vpack.c.b16 %v276, %v274
      %v303 = vpack.c.b16 %v277, %v275
      %v304 = vpack.c.b16 %v280, %v278
      %v305 = vpack.c.b16 %v281, %v279
      %v306 = vpack.c.b16 %v284, %v282
      %v307 = vpack.c.b16 %v285, %v283
      %v308 = vpack.c.b16 %v288, %v286
      %v309 = vpack.c.b16 %v289, %v287
      %v310 = vpack.c.b16 %v292, %v290
      %v311 = vpack.c.b16 %v293, %v291
      %v312 = vpack.c.b16 %v296, %v294
      %v313 = vpack.c.b16 %v297, %v295
      %330 = vmatpush.bf16.msra.mxu0 %v312
      %331 = vmatpush.bf16.msra.mxu0 %v310
      %332 = vmatpush.bf16.msra.mxu0 %v308
      %333 = vmatpush.bf16.msra.mxu0 %v306
      %334 = vmatpush.bf16.msra.mxu0 %v304
      %335 = vmatpush.bf16.msra.mxu0 %v302
      %336 = vmatpush.bf16.msra.mxu0 %v300
      %337 = vmatpush.bf16.msra.mxu0 %v298
      %338 = vmatmul.bf16.gmra.mxu0 %v227
      %v339 = vpop.f32.mrf.mxu0
      %v340 = vadd.f32 %v246, %v339
      %v341 = vpop.f32.mrf.mxu0
      %342 = vdwg.mxu0
      %343 = vmatpush.bf16.msra.mxu0 %v313
      %344 = vmatpush.bf16.msra.mxu0 %v311
      %345 = vmatpush.bf16.msra.mxu0 %v309
      %346 = vmatpush.bf16.msra.mxu0 %v307
      %347 = vmatpush.bf16.msra.mxu0 %v305
      %348 = vmatpush.bf16.msra.mxu0 %v303
      %349 = vmatpush.bf16.msra.mxu0 %v301
      %350 = vmatpush.bf16.msra.mxu0 %v299
      %351 = vmatmul.bf16.gmra.mxu0 %v227
      %v352 = vpop.f32.mrf.mxu0
      %v353 = vadd.f32 %v247, %v352
      %v354 = vpop.f32.mrf.mxu0
      %355 = vdwg.mxu0
      %vm356 = vcmp.ge.f32.partialorder %v340, 0.0
      %vm357 = vcmp.ge.f32.partialorder %v353, 0.0
      %v358 = vmul.f32 %v340, 0.2
      %v359 = vmul.f32 %v353, 0.2
      %v360 = vsel %vm356, %v340, %v358
      %v361 = vsel %vm357, %v353, %v359
      %v362 = vld [vmem:[%s3] sm:$0x3]
      %v364 = vperm.slane %v362, 0
      %v365 = vperm.slane %v362, 1
      %v368 = vmul.f32 %v360, %v364
      %v369 = vmul.f32 %v361, %v365
      %v370 = vadd.f32 %v368, %v369
      %371 = vadd.xlane.f32.xlu0 %v370
      %v372 = vpop.xlane.xlu0 %371
      %v373 = vld [vmem:[#allocation2] sm:$0x1]
      %v375 = vperm.slane %v373, 0
      %v377 = vadd.f32 %v372, %v375
      %vm378 = vcmask 0
      %379 = vst.msk [vmem:[%s219] sm:$0x1] %vm378, %v377
      %p380 = scmp.lt.s32.totalorder %s18, 1
      %s381 = scalar_select %p380, %s18, 1
      %s382 = scalar_lea.vmem %s5, %s381
      // Predicated region
      $region41: #{_lambda_.17} parent=39 // pred_check
        %p383 = pneg %p146
      $region42: #{_lambda_.17} parent=39 // pred_check_branch
        %385 = sbr.rel (%p383) target = $region44
      $region43: #{_lambda_.17} parent=39 // pred_region
        _
      $region44: #{_lambda_.17} parent=39 // pred_fallthru
        _
    $region40: #{_lambda_.17} parent=5 // pred_fallthru
      _
    %p386 = scmp.le.s32.totalorder 2, %s13
    // Predicated region
    $region45: #{_lambda_.17} parent=5 // pred_check
      %p387 = pneg %p386
    $region46: #{_lambda_.17} parent=5 // pred_check_branch
      %389 = sbr.rel (%p387) target = $region48
    $region47: #{_lambda_.17} parent=5 // pred_region
      %s390 = ssub.s32 %s13, 2
      // Predicated region
      $region49: #{_lambda_.17} parent=47 // pred_check
        %p391 = pneg %p152
      $region50: #{_lambda_.17} parent=47 // pred_check_branch
        %393 = sbr.rel (%p391) target = $region52
      $region51: #{_lambda_.17} parent=47 // pred_region
        %p394 = scmp.lt.s32.totalorder %s19, 1
        %s395 = scalar_select %p394, %s19, 1
        %s396 = scalar_lea.vmem %s5, %s395
      $region52: #{_lambda_.17} parent=47 // pred_fallthru
        _
    $region48: #{_lambda_.17} parent=5 // pred_fallthru
      _
  $region6: #{_lambda_.17} parent=0 // loop_footer
    %s17 = sadd.s32 1, %s13
  $region7: #{_lambda_.17} parent=0 // loop_footer_branch
    %12 = sbr.rel target = $region3
  $region8: #{_lambda_.17} parent=0 // loop_exit
    _

// kernel: _lambda_.16
$region0: #{_lambda_.16}
  #allocation0 [shape = 'u32[]', space=smem, size = 0x4, offset = 0x4, fixed_abs, tag = 'smem constant byte address 0x4 - core index']
  #allocation1 [shape = 'u32[72,128]{1,0:T(1,128)}', space=vmem, size = 0x9000, scoped, tag = 'internal scratch']
  %s0 = inlined_call_operand.vmem [shape: bf16[16,1152], index: 0, kind: input, shape index: {}]
  %s1 = inlined_call_operand.vmem [shape: bf16[1152,128], index: 1, kind: input, shape index: {}]
  %s2 = inlined_call_operand.vmem [shape: f32[1,128], index: 2, kind: input, shape index: {}]
  %s3 = inlined_call_operand.vmem [shape: bf16[16,128], index: 3, kind: output, shape index: {0}]
  %s4 = inlined_call_operand.vmem [shape: f32[1,1,128], index: 4, kind: output, shape index: {1}]
  %s5 = inlined_call_operand.vmem [shape: f32[1,1,128], index: 5, kind: output, shape index: {2}]
  %6 = xla_tuple %s3, %s4, %s5
  %s7 = sld [smem:[#allocation0]]
  $region46: #{_lambda_.16} parent=0
    _
  %s9 = ssub.s32 1, %s7
  %s10 = scalar_select 0, %s9, %s7
  // Predicated region
  $region2: #{_lambda_.16} parent=0 // pred_check
    _
  $region3: #{_lambda_.16} parent=0 // pred_check_branch
    %12 = sbr.rel (0) target = $region5
  $region4: #{_lambda_.16} parent=0 // pred_region
    _
  $region5: #{_lambda_.16} parent=0 // pred_fallthru
    _
  // Predicated region
  $region6: #{_lambda_.16} parent=0 // pred_check
    _
  $region7: #{_lambda_.16} parent=0 // pred_check_branch
    %14 = sbr.rel (0) target = $region9
  $region8: #{_lambda_.16} parent=0 // pred_region
    _
  $region9: #{_lambda_.16} parent=0 // pred_fallthru
    _
  // Predicated region
  $region10: #{_lambda_.16} parent=0 // pred_check
    _
  $region11: #{_lambda_.16} parent=0 // pred_check_branch
    %16 = sbr.rel (0) target = $region13
  $region12: #{_lambda_.16} parent=0 // pred_region
    _
  $region13: #{_lambda_.16} parent=0 // pred_fallthru
    _
  %v17 = vld [vmem:[%s0] sm:$0xff]
  %v18 = vld [vmem:[%s0 + $0x8] sm:$0xff]
  %v19 = vld [vmem:[%s0 + $0x10] sm:$0xff]
  %v20 = vld [vmem:[%s0 + $0x18] sm:$0xff]
  %v21 = vld [vmem:[%s0 + $0x20] sm:$0xf]
  %v22 = vld [vmem:[%s0 + $0x24] sm:$0xff]
  %v23 = vld [vmem:[%s0 + $0x2c] sm:$0xff]
  %v24 = vld [vmem:[%s0 + $0x34] sm:$0xff]
  %v25 = vld [vmem:[%s0 + $0x3c] sm:$0xff]
  %v26 = vld [vmem:[%s0 + $0x44] sm:$0xf]
  %v27 = vld [vmem:[%s1] sm:$0xf]
  %v28 = vld [vmem:[%s1 + $0x4] sm:$0xf]
  %v29 = vld [vmem:[%s1 + $0x8] sm:$0xf]
  %v30 = vld [vmem:[%s1 + $0xc] sm:$0xf]
  %v31 = vld [vmem:[%s1 + $0x10] sm:$0xf]
  %v32 = vld [vmem:[%s1 + $0x14] sm:$0xf]
  %v33 = vld [vmem:[%s1 + $0x18] sm:$0xf]
  %v34 = vld [vmem:[%s1 + $0x1c] sm:$0xf]
  %v35 = vld [vmem:[%s1 + $0x20] sm:$0xf]
  %v36 = vld [vmem:[%s1 + $0x24] sm:$0xf]
  %v37 = vld [vmem:[%s1 + $0x28] sm:$0xf]
  %v38 = vld [vmem:[%s1 + $0x2c] sm:$0xf]
  %v39 = vld [vmem:[%s1 + $0x30] sm:$0xf]
  %v40 = vld [vmem:[%s1 + $0x34] sm:$0xf]
  %v41 = vld [vmem:[%s1 + $0x38] sm:$0xf]
  %v42 = vld [vmem:[%s1 + $0x3c] sm:$0xf]
  %v43 = vld [vmem:[%s1 + $0x40] sm:$0xf]
  %v44 = vld [vmem:[%s1 + $0x44] sm:$0xf]
  %v45 = vld [vmem:[%s1 + $0x48] sm:$0xf]
  %v46 = vld [vmem:[%s1 + $0x4c] sm:$0xf]
  %v47 = vld [vmem:[%s1 + $0x50] sm:$0xf]
  %v48 = vld [vmem:[%s1 + $0x54] sm:$0xf]
  %v49 = vld [vmem:[%s1 + $0x58] sm:$0xf]
  %v50 = vld [vmem:[%s1 + $0x5c] sm:$0xf]
  %v51 = vld [vmem:[%s1 + $0x60] sm:$0xf]
  %v52 = vld [vmem:[%s1 + $0x64] sm:$0xf]
  %v53 = vld [vmem:[%s1 + $0x68] sm:$0xf]
  %v54 = vld [vmem:[%s1 + $0x6c] sm:$0xf]
  %v55 = vld [vmem:[%s1 + $0x70] sm:$0xf]
  %v56 = vld [vmem:[%s1 + $0x74] sm:$0xf]
  %v57 = vld [vmem:[%s1 + $0x78] sm:$0xf]
  %v58 = vld [vmem:[%s1 + $0x7c] sm:$0xf]
  %v59 = vld [vmem:[%s1 + $0x80] sm:$0xf]
  %v60 = vld [vmem:[%s1 + $0x84] sm:$0xf]
  %v61 = vld [vmem:[%s1 + $0x88] sm:$0xf]
  %v62 = vld [vmem:[%s1 + $0x8c] sm:$0xf]
  %v63 = vld [vmem:[%s1 + $0x90] sm:$0xf]
  %v64 = vld [vmem:[%s1 + $0x94] sm:$0xf]
  %v65 = vld [vmem:[%s1 + $0x98] sm:$0xf]
  %v66 = vld [vmem:[%s1 + $0x9c] sm:$0xf]
  %v67 = vld [vmem:[%s1 + $0xa0] sm:$0xf]
  %v68 = vld [vmem:[%s1 + $0xa4] sm:$0xf]
  %v69 = vld [vmem:[%s1 + $0xa8] sm:$0xf]
  %v70 = vld [vmem:[%s1 + $0xac] sm:$0xf]
  %v71 = vld [vmem:[%s1 + $0xb0] sm:$0xf]
  %v72 = vld [vmem:[%s1 + $0xb4] sm:$0xf]
  %v73 = vld [vmem:[%s1 + $0xb8] sm:$0xf]
  %v74 = vld [vmem:[%s1 + $0xbc] sm:$0xf]
  %v75 = vld [vmem:[%s1 + $0xc0] sm:$0xf]
  %v76 = vld [vmem:[%s1 + $0xc4] sm:$0xf]
  %v77 = vld [vmem:[%s1 + $0xc8] sm:$0xf]
  %v78 = vld [vmem:[%s1 + $0xcc] sm:$0xf]
  %v79 = vld [vmem:[%s1 + $0xd0] sm:$0xf]
  %v80 = vld [vmem:[%s1 + $0xd4] sm:$0xf]
  %v81 = vld [vmem:[%s1 + $0xd8] sm:$0xf]
  %v82 = vld [vmem:[%s1 + $0xdc] sm:$0xf]
  %v83 = vld [vmem:[%s1 + $0xe0] sm:$0xf]
  %v84 = vld [vmem:[%s1 + $0xe4] sm:$0xf]
  %v85 = vld [vmem:[%s1 + $0xe8] sm:$0xf]
  %v86 = vld [vmem:[%s1 + $0xec] sm:$0xf]
  %v87 = vld [vmem:[%s1 + $0xf0] sm:$0xf]
  %v88 = vld [vmem:[%s1 + $0xf4] sm:$0xf]
  %v89 = vld [vmem:[%s1 + $0xf8] sm:$0xf]
  %v90 = vld [vmem:[%s1 + $0xfc] sm:$0xf]
  %v91 = vld [vmem:[%s1 + $0x100] sm:$0xf]
  %v92 = vld [vmem:[%s1 + $0x104] sm:$0xf]
  %v93 = vld [vmem:[%s1 + $0x108] sm:$0xf]
  %v94 = vld [vmem:[%s1 + $0x10c] sm:$0xf]
  %v95 = vld [vmem:[%s1 + $0x110] sm:$0xf]
  %v96 = vld [vmem:[%s1 + $0x114] sm:$0xf]
  %v97 = vld [vmem:[%s1 + $0x118] sm:$0xf]
  %v98 = vld [vmem:[%s1 + $0x11c] sm:$0xf]
  %v99 = vld [vmem:[%s1 + $0x120] sm:$0xf]
  %v100 = vld [vmem:[%s1 + $0x124] sm:$0xf]
  %v101 = vld [vmem:[%s1 + $0x128] sm:$0xf]
  %v102 = vld [vmem:[%s1 + $0x12c] sm:$0xf]
  %v103 = vld [vmem:[%s1 + $0x130] sm:$0xf]
  %v104 = vld [vmem:[%s1 + $0x134] sm:$0xf]
  %v105 = vld [vmem:[%s1 + $0x138] sm:$0xf]
  %v106 = vld [vmem:[%s1 + $0x13c] sm:$0xf]
  %v107 = vld [vmem:[%s1 + $0x140] sm:$0xf]
  %v108 = vld [vmem:[%s1 + $0x144] sm:$0xf]
  %v109 = vld [vmem:[%s1 + $0x148] sm:$0xf]
  %v110 = vld [vmem:[%s1 + $0x14c] sm:$0xf]
  %v111 = vld [vmem:[%s1 + $0x150] sm:$0xf]
  %v112 = vld [vmem:[%s1 + $0x154] sm:$0xf]
  %v113 = vld [vmem:[%s1 + $0x158] sm:$0xf]
  %v114 = vld [vmem:[%s1 + $0x15c] sm:$0xf]
  %v115 = vld [vmem:[%s1 + $0x160] sm:$0xf]
  %v116 = vld [vmem:[%s1 + $0x164] sm:$0xf]
  %v117 = vld [vmem:[%s1 + $0x168] sm:$0xf]
  %v118 = vld [vmem:[%s1 + $0x16c] sm:$0xf]
  %v119 = vld [vmem:[%s1 + $0x170] sm:$0xf]
  %v120 = vld [vmem:[%s1 + $0x174] sm:$0xf]
  %v121 = vld [vmem:[%s1 + $0x178] sm:$0xf]
  %v122 = vld [vmem:[%s1 + $0x17c] sm:$0xf]
  %v123 = vld [vmem:[%s1 + $0x180] sm:$0xf]
  %v124 = vld [vmem:[%s1 + $0x184] sm:$0xf]
  %v125 = vld [vmem:[%s1 + $0x188] sm:$0xf]
  %v126 = vld [vmem:[%s1 + $0x18c] sm:$0xf]
  %v127 = vld [vmem:[%s1 + $0x190] sm:$0xf]
  %v128 = vld [vmem:[%s1 + $0x194] sm:$0xf]
  %v129 = vld [vmem:[%s1 + $0x198] sm:$0xf]
  %v130 = vld [vmem:[%s1 + $0x19c] sm:$0xf]
  %v131 = vld [vmem:[%s1 + $0x1a0] sm:$0xf]
  %v132 = vld [vmem:[%s1 + $0x1a4] sm:$0xf]
  %v133 = vld [vmem:[%s1 + $0x1a8] sm:$0xf]
  %v134 = vld [vmem:[%s1 + $0x1ac] sm:$0xf]
  %v135 = vld [vmem:[%s1 + $0x1b0] sm:$0xf]
  %v136 = vld [vmem:[%s1 + $0x1b4] sm:$0xf]
  %v137 = vld [vmem:[%s1 + $0x1b8] sm:$0xf]
  %v138 = vld [vmem:[%s1 + $0x1bc] sm:$0xf]
  %v139 = vld [vmem:[%s1 + $0x1c0] sm:$0xf]
  %v140 = vld [vmem:[%s1 + $0x1c4] sm:$0xf]
  %v141 = vld [vmem:[%s1 + $0x1c8] sm:$0xf]
  %v142 = vld [vmem:[%s1 + $0x1cc] sm:$0xf]
  %v143 = vld [vmem:[%s1 + $0x1d0] sm:$0xf]
  %v144 = vld [vmem:[%s1 + $0x1d4] sm:$0xf]
  %v145 = vld [vmem:[%s1 + $0x1d8] sm:$0xf]
  %v146 = vld [vmem:[%s1 + $0x1dc] sm:$0xf]
  %v147 = vld [vmem:[%s1 + $0x1e0] sm:$0xf]
  %v148 = vld [vmem:[%s1 + $0x1e4] sm:$0xf]
  %v149 = vld [vmem:[%s1 + $0x1e8] sm:$0xf]
  %v150 = vld [vmem:[%s1 + $0x1ec] sm:$0xf]
  %v151 = vld [vmem:[%s1 + $0x1f0] sm:$0xf]
  %v152 = vld [vmem:[%s1 + $0x1f4] sm:$0xf]
  %v153 = vld [vmem:[%s1 + $0x1f8] sm:$0xf]
  %v154 = vld [vmem:[%s1 + $0x1fc] sm:$0xf]
  %v155 = vld [vmem:[%s1 + $0x200] sm:$0xf]
  %v156 = vld [vmem:[%s1 + $0x204] sm:$0xf]
  %v157 = vld [vmem:[%s1 + $0x208] sm:$0xf]
  %v158 = vld [vmem:[%s1 + $0x20c] sm:$0xf]
  %v159 = vld [vmem:[%s1 + $0x210] sm:$0xf]
  %v160 = vld [vmem:[%s1 + $0x214] sm:$0xf]
  %v161 = vld [vmem:[%s1 + $0x218] sm:$0xf]
  %v162 = vld [vmem:[%s1 + $0x21c] sm:$0xf]
  %v163 = vld [vmem:[%s1 + $0x220] sm:$0xf]
  %v164 = vld [vmem:[%s1 + $0x224] sm:$0xf]
  %v165 = vld [vmem:[%s1 + $0x228] sm:$0xf]
  %v166 = vld [vmem:[%s1 + $0x22c] sm:$0xf]
  %v167 = vld [vmem:[%s1 + $0x230] sm:$0xf]
  %v168 = vld [vmem:[%s1 + $0x234] sm:$0xf]
  %v169 = vld [vmem:[%s1 + $0x238] sm:$0xf]
  %v170 = vld [vmem:[%s1 + $0x23c] sm:$0xf]
  %v171 = vld [vmem:[%s2] sm:$0x1]
  %v173 = vperm.slane %v171, 0
  %v185 = vunpack.c.l.b16 %v17
  %v186 = vunpack.c.h.b16 %v17
  %v187 = vunpack.c.l.b16 %v18
  %v188 = vunpack.c.h.b16 %v18
  %v189 = vunpack.c.l.b16 %v19
  %v190 = vunpack.c.h.b16 %v19
  %v191 = vunpack.c.l.b16 %v20
  %v192 = vunpack.c.h.b16 %v20
  %v193 = vunpack.c.l.b16 %v21
  %v194 = vunpack.c.l.b16 %v22
  %v195 = vunpack.c.h.b16 %v22
  %v196 = vunpack.c.l.b16 %v23
  %v197 = vunpack.c.h.b16 %v23
  %v198 = vunpack.c.l.b16 %v24
  %v199 = vunpack.c.h.b16 %v24
  %v200 = vunpack.c.l.b16 %v25
  %v201 = vunpack.c.h.b16 %v25
  %v202 = vunpack.c.l.b16 %v26
  %v203 = vpack.c.b16 %v194, %v185
  %v204 = vpack.c.b16 %v195, %v186
  %v205 = vpack.c.b16 %v196, %v187
  %v206 = vpack.c.b16 %v197, %v188
  %v207 = vpack.c.b16 %v198, %v189
  %v208 = vpack.c.b16 %v199, %v190
  %v209 = vpack.c.b16 %v200, %v191
  %v210 = vpack.c.b16 %v201, %v192
  %v211 = vpack.c.b16 %v202, %v193
  %v365 = vunpack.c.l.b16 %v27
  %v366 = vunpack.c.l.b16 %v28
  %v367 = vunpack.c.l.b16 %v29
  %v368 = vunpack.c.l.b16 %v30
  %v369 = vunpack.c.l.b16 %v31
  %v370 = vunpack.c.l.b16 %v32
  %v371 = vunpack.c.l.b16 %v33
  %v372 = vunpack.c.l.b16 %v34
  %v373 = vunpack.c.l.b16 %v35
  %v374 = vunpack.c.l.b16 %v36
  %v375 = vunpack.c.l.b16 %v37
  %v376 = vunpack.c.l.b16 %v38
  %v377 = vunpack.c.l.b16 %v39
  %v378 = vunpack.c.l.b16 %v40
  %v379 = vunpack.c.l.b16 %v41
  %v380 = vunpack.c.l.b16 %v42
  %v381 = vunpack.c.l.b16 %v43
  %v382 = vunpack.c.l.b16 %v44
  %v383 = vunpack.c.l.b16 %v45
  %v384 = vunpack.c.l.b16 %v46
  %v385 = vunpack.c.l.b16 %v47
  %v386 = vunpack.c.l.b16 %v48
  %v387 = vunpack.c.l.b16 %v49
  %v388 = vunpack.c.l.b16 %v50
  %v389 = vunpack.c.l.b16 %v51
  %v390 = vunpack.c.l.b16 %v52
  %v391 = vunpack.c.l.b16 %v53
  %v392 = vunpack.c.l.b16 %v54
  %v393 = vunpack.c.l.b16 %v55
  %v394 = vunpack.c.l.b16 %v56
  %v395 = vunpack.c.l.b16 %v57
  %v396 = vunpack.c.l.b16 %v58
  %v397 = vunpack.c.l.b16 %v59
  %v398 = vunpack.c.l.b16 %v60
  %v399 = vunpack.c.l.b16 %v61
  %v400 = vunpack.c.l.b16 %v62
  %v401 = vunpack.c.l.b16 %v63
  %v402 = vunpack.c.l.b16 %v64
  %v403 = vunpack.c.l.b16 %v65
  %v404 = vunpack.c.l.b16 %v66
  %v405 = vunpack.c.l.b16 %v67
  %v406 = vunpack.c.l.b16 %v68
  %v407 = vunpack.c.l.b16 %v69
  %v408 = vunpack.c.l.b16 %v70
  %v409 = vunpack.c.l.b16 %v71
  %v410 = vunpack.c.l.b16 %v72
  %v411 = vunpack.c.l.b16 %v73
  %v412 = vunpack.c.l.b16 %v74
  %v413 = vunpack.c.l.b16 %v75
  %v414 = vunpack.c.l.b16 %v76
  %v415 = vunpack.c.l.b16 %v77
  %v416 = vunpack.c.l.b16 %v78
  %v417 = vunpack.c.l.b16 %v79
  %v418 = vunpack.c.l.b16 %v80
  %v419 = vunpack.c.l.b16 %v81
  %v420 = vunpack.c.l.b16 %v82
  %v421 = vunpack.c.l.b16 %v83
  %v422 = vunpack.c.l.b16 %v84
  %v423 = vunpack.c.l.b16 %v85
  %v424 = vunpack.c.l.b16 %v86
  %v425 = vunpack.c.l.b16 %v87
  %v426 = vunpack.c.l.b16 %v88
  %v427 = vunpack.c.l.b16 %v89
  %v428 = vunpack.c.l.b16 %v90
  %v429 = vunpack.c.l.b16 %v91
  %v430 = vunpack.c.l.b16 %v92
  %v431 = vunpack.c.l.b16 %v93
  %v432 = vunpack.c.l.b16 %v94
  %v433 = vunpack.c.l.b16 %v95
  %v434 = vunpack.c.l.b16 %v96
  %v435 = vunpack.c.l.b16 %v97
  %v436 = vunpack.c.l.b16 %v98
  %v437 = vunpack.c.l.b16 %v99
  %v438 = vunpack.c.l.b16 %v100
  %v439 = vunpack.c.l.b16 %v101
  %v440 = vunpack.c.l.b16 %v102
  %v441 = vunpack.c.l.b16 %v103
  %v442 = vunpack.c.l.b16 %v104
  %v443 = vunpack.c.l.b16 %v105
  %v444 = vunpack.c.l.b16 %v106
  %v445 = vunpack.c.l.b16 %v107
  %v446 = vunpack.c.l.b16 %v108
  %v447 = vunpack.c.l.b16 %v109
  %v448 = vunpack.c.l.b16 %v110
  %v449 = vunpack.c.l.b16 %v111
  %v450 = vunpack.c.l.b16 %v112
  %v451 = vunpack.c.l.b16 %v113
  %v452 = vunpack.c.l.b16 %v114
  %v453 = vunpack.c.l.b16 %v115
  %v454 = vunpack.c.l.b16 %v116
  %v455 = vunpack.c.l.b16 %v117
  %v456 = vunpack.c.l.b16 %v118
  %v457 = vunpack.c.l.b16 %v119
  %v458 = vunpack.c.l.b16 %v120
  %v459 = vunpack.c.l.b16 %v121
  %v460 = vunpack.c.l.b16 %v122
  %v461 = vunpack.c.l.b16 %v123
  %v462 = vunpack.c.l.b16 %v124
  %v463 = vunpack.c.l.b16 %v125
  %v464 = vunpack.c.l.b16 %v126
  %v465 = vunpack.c.l.b16 %v127
  %v466 = vunpack.c.l.b16 %v128
  %v467 = vunpack.c.l.b16 %v129
  %v468 = vunpack.c.l.b16 %v130
  %v469 = vunpack.c.l.b16 %v131
  %v470 = vunpack.c.l.b16 %v132
  %v471 = vunpack.c.l.b16 %v133
  %v472 = vunpack.c.l.b16 %v134
  %v473 = vunpack.c.l.b16 %v135
  %v474 = vunpack.c.l.b16 %v136
  %v475 = vunpack.c.l.b16 %v137
  %v476 = vunpack.c.l.b16 %v138
  %v477 = vunpack.c.l.b16 %v139
  %v478 = vunpack.c.l.b16 %v140
  %v479 = vunpack.c.l.b16 %v141
  %v480 = vunpack.c.l.b16 %v142
  %v481 = vunpack.c.l.b16 %v143
  %v482 = vunpack.c.l.b16 %v144
  %v483 = vunpack.c.l.b16 %v145
  %v484 = vunpack.c.l.b16 %v146
  %v485 = vunpack.c.l.b16 %v147
  %v486 = vunpack.c.l.b16 %v148
  %v487 = vunpack.c.l.b16 %v149
  %v488 = vunpack.c.l.b16 %v150
  %v489 = vunpack.c.l.b16 %v151
  %v490 = vunpack.c.l.b16 %v152
  %v491 = vunpack.c.l.b16 %v153
  %v492 = vunpack.c.l.b16 %v154
  %v493 = vunpack.c.l.b16 %v155
  %v494 = vunpack.c.l.b16 %v156
  %v495 = vunpack.c.l.b16 %v157
  %v496 = vunpack.c.l.b16 %v158
  %v497 = vunpack.c.l.b16 %v159
  %v498 = vunpack.c.l.b16 %v160
  %v499 = vunpack.c.l.b16 %v161
  %v500 = vunpack.c.l.b16 %v162
  %v501 = vunpack.c.l.b16 %v163
  %v502 = vunpack.c.l.b16 %v164
  %v503 = vunpack.c.l.b16 %v165
  %v504 = vunpack.c.l.b16 %v166
  %v505 = vunpack.c.l.b16 %v167
  %v506 = vunpack.c.l.b16 %v168
  %v507 = vunpack.c.l.b16 %v169
  %v508 = vunpack.c.l.b16 %v170
  %v509 = vpack.c.b16 %v366, %v365
  %v510 = vpack.c.b16 %v368, %v367
  %v511 = vpack.c.b16 %v370, %v369
  %v512 = vpack.c.b16 %v372, %v371
  %v513 = vpack.c.b16 %v374, %v373
  %v514 = vpack.c.b16 %v376, %v375
  %v515 = vpack.c.b16 %v378, %v377
  %v516 = vpack.c.b16 %v380, %v379
  %v517 = vpack.c.b16 %v382, %v381
  %v518 = vpack.c.b16 %v384, %v383
  %v519 = vpack.c.b16 %v386, %v385
  %v520 = vpack.c.b16 %v388, %v387
  %v521 = vpack.c.b16 %v390, %v389
  %v522 = vpack.c.b16 %v392, %v391
  %v523 = vpack.c.b16 %v394, %v393
  %v524 = vpack.c.b16 %v396, %v395
  %v525 = vpack.c.b16 %v398, %v397
  %v526 = vpack.c.b16 %v400, %v399
  %v527 = vpack.c.b16 %v402, %v401
  %v528 = vpack.c.b16 %v404, %v403
  %v529 = vpack.c.b16 %v406, %v405
  %v530 = vpack.c.b16 %v408, %v407
  %v531 = vpack.c.b16 %v410, %v409
  %v532 = vpack.c.b16 %v412, %v411
  %v533 = vpack.c.b16 %v414, %v413
  %v534 = vpack.c.b16 %v416, %v415
  %v535 = vpack.c.b16 %v418, %v417
  %v536 = vpack.c.b16 %v420, %v419
  %v537 = vpack.c.b16 %v422, %v421
  %v538 = vpack.c.b16 %v424, %v423
  %v539 = vpack.c.b16 %v426, %v425
  %v540 = vpack.c.b16 %v428, %v427
  %v541 = vpack.c.b16 %v430, %v429
  %v542 = vpack.c.b16 %v432, %v431
  %v543 = vpack.c.b16 %v434, %v433
  %v544 = vpack.c.b16 %v436, %v435
  %v545 = vpack.c.b16 %v438, %v437
  %v546 = vpack.c.b16 %v440, %v439
  %v547 = vpack.c.b16 %v442, %v441
  %v548 = vpack.c.b16 %v444, %v443
  %v549 = vpack.c.b16 %v446, %v445
  %v550 = vpack.c.b16 %v448, %v447
  %v551 = vpack.c.b16 %v450, %v449
  %v552 = vpack.c.b16 %v452, %v451
  %v553 = vpack.c.b16 %v454, %v453
  %v554 = vpack.c.b16 %v456, %v455
  %v555 = vpack.c.b16 %v458, %v457
  %v556 = vpack.c.b16 %v460, %v459
  %v557 = vpack.c.b16 %v462, %v461
  %v558 = vpack.c.b16 %v464, %v463
  %v559 = vpack.c.b16 %v466, %v465
  %v560 = vpack.c.b16 %v468, %v467
  %v561 = vpack.c.b16 %v470, %v469
  %v562 = vpack.c.b16 %v472, %v471
  %v563 = vpack.c.b16 %v474, %v473
  %v564 = vpack.c.b16 %v476, %v475
  %v565 = vpack.c.b16 %v478, %v477
  %v566 = vpack.c.b16 %v480, %v479
  %v567 = vpack.c.b16 %v482, %v481
  %v568 = vpack.c.b16 %v484, %v483
  %v569 = vpack.c.b16 %v486, %v485
  %v570 = vpack.c.b16 %v488, %v487
  %v571 = vpack.c.b16 %v490, %v489
  %v572 = vpack.c.b16 %v492, %v491
  %v573 = vpack.c.b16 %v494, %v493
  %v574 = vpack.c.b16 %v496, %v495
  %v575 = vpack.c.b16 %v498, %v497
  %v576 = vpack.c.b16 %v500, %v499
  %v577 = vpack.c.b16 %v502, %v501
  %v578 = vpack.c.b16 %v504, %v503
  %v579 = vpack.c.b16 %v506, %v505
  %v580 = vpack.c.b16 %v508, %v507
  %653 = vmatpush.bf16.msra.mxu0 %v516
  %654 = vmatpush.bf16.msra.mxu0 %v515
  %655 = vmatpush.bf16.msra.mxu0 %v514
  %656 = vmatpush.bf16.msra.mxu0 %v513
  %657 = vmatpush.bf16.msra.mxu0 %v512
  %658 = vmatpush.bf16.msra.mxu0 %v511
  %659 = vmatpush.bf16.msra.mxu0 %v510
  %660 = vmatpush.bf16.msra.mxu0 %v509
  %661 = vmatmul.bf16.gmra.mxu0 %v203
  %v662 = vpop.f32.mrf.mxu0
  %v663 = vadd.f32 %v173, %v662
  %v664 = vpop.f32.mrf.mxu0
  %v665 = vadd.f32 %v173, %v664
  %666 = vdwg.mxu0
  %667 = vmatpush.bf16.msra.mxu0 %v524
  %668 = vmatpush.bf16.msra.mxu0 %v523
  %669 = vmatpush.bf16.msra.mxu0 %v522
  %670 = vmatpush.bf16.msra.mxu0 %v521
  %671 = vmatpush.bf16.msra.mxu0 %v520
  %672 = vmatpush.bf16.msra.mxu0 %v519
  %673 = vmatpush.bf16.msra.mxu0 %v518
  %674 = vmatpush.bf16.msra.mxu0 %v517
  %675 = vmatmul.bf16.gmra.mxu0 %v204
  %v676 = vpop.f32.mrf.mxu0
  %v677 = vadd.f32 %v663, %v676
  %v678 = vpop.f32.mrf.mxu0
  %v679 = vadd.f32 %v665, %v678
  %680 = vdwg.mxu0
  %681 = vmatpush.bf16.msra.mxu0 %v532
  %682 = vmatpush.bf16.msra.mxu0 %v531
  %683 = vmatpush.bf16.msra.mxu0 %v530
  %684 = vmatpush.bf16.msra.mxu0 %v529
  %685 = vmatpush.bf16.msra.mxu0 %v528
  %686 = vmatpush.bf16.msra.mxu0 %v527
  %687 = vmatpush.bf16.msra.mxu0 %v526
  %688 = vmatpush.bf16.msra.mxu0 %v525
  %689 = vmatmul.bf16.gmra.mxu0 %v205
  %v690 = vpop.f32.mrf.mxu0
  %v691 = vadd.f32 %v677, %v690
  %v692 = vpop.f32.mrf.mxu0
  %v693 = vadd.f32 %v679, %v692
  %694 = vdwg.mxu0
  %695 = vmatpush.bf16.msra.mxu0 %v540
  %696 = vmatpush.bf16.msra.mxu0 %v539
  %697 = vmatpush.bf16.msra.mxu0 %v538
  %698 = vmatpush.bf16.msra.mxu0 %v537
  %699 = vmatpush.bf16.msra.mxu0 %v536
  %700 = vmatpush.bf16.msra.mxu0 %v535
  %701 = vmatpush.bf16.msra.mxu0 %v534
  %702 = vmatpush.bf16.msra.mxu0 %v533
  %703 = vmatmul.bf16.gmra.mxu0 %v206
  %v704 = vpop.f32.mrf.mxu0
  %v705 = vadd.f32 %v691, %v704
  %v706 = vpop.f32.mrf.mxu0
  %v707 = vadd.f32 %v693, %v706
  %708 = vdwg.mxu0
  %709 = vmatpush.bf16.msra.mxu0 %v548
  %710 = vmatpush.bf16.msra.mxu0 %v547
  %711 = vmatpush.bf16.msra.mxu0 %v546
  %712 = vmatpush.bf16.msra.mxu0 %v545
  %713 = vmatpush.bf16.msra.mxu0 %v544
  %714 = vmatpush.bf16.msra.mxu0 %v543
  %715 = vmatpush.bf16.msra.mxu0 %v542
  %716 = vmatpush.bf16.msra.mxu0 %v541
  %717 = vmatmul.bf16.gmra.mxu0 %v207
  %v718 = vpop.f32.mrf.mxu0
  %v719 = vadd.f32 %v705, %v718
  %v720 = vpop.f32.mrf.mxu0
  %v721 = vadd.f32 %v707, %v720
  %722 = vdwg.mxu0
  %723 = vmatpush.bf16.msra.mxu0 %v556
  %724 = vmatpush.bf16.msra.mxu0 %v555
  %725 = vmatpush.bf16.msra.mxu0 %v554
  %726 = vmatpush.bf16.msra.mxu0 %v553
  %727 = vmatpush.bf16.msra.mxu0 %v552
  %728 = vmatpush.bf16.msra.mxu0 %v551
  %729 = vmatpush.bf16.msra.mxu0 %v550
  %730 = vmatpush.bf16.msra.mxu0 %v549
  %731 = vmatmul.bf16.gmra.mxu0 %v208
  %v732 = vpop.f32.mrf.mxu0
  %v733 = vadd.f32 %v719, %v732
  %v734 = vpop.f32.mrf.mxu0
  %v735 = vadd.f32 %v721, %v734
  %736 = vdwg.mxu0
  %737 = vmatpush.bf16.msra.mxu0 %v564
  %738 = vmatpush.bf16.msra.mxu0 %v563
  %739 = vmatpush.bf16.msra.mxu0 %v562
  %740 = vmatpush.bf16.msra.mxu0 %v561
  %741 = vmatpush.bf16.msra.mxu0 %v560
  %742 = vmatpush.bf16.msra.mxu0 %v559
  %743 = vmatpush.bf16.msra.mxu0 %v558
  %744 = vmatpush.bf16.msra.mxu0 %v557
  %745 = vmatmul.bf16.gmra.mxu0 %v209
  %v746 = vpop.f32.mrf.mxu0
  %v747 = vadd.f32 %v733, %v746
  %v748 = vpop.f32.mrf.mxu0
  %v749 = vadd.f32 %v735, %v748
  %750 = vdwg.mxu0
  %751 = vmatpush.bf16.msra.mxu0 %v572
  %752 = vmatpush.bf16.msra.mxu0 %v571
  %753 = vmatpush.bf16.msra.mxu0 %v570
  %754 = vmatpush.bf16.msra.mxu0 %v569
  %755 = vmatpush.bf16.msra.mxu0 %v568
  %756 = vmatpush.bf16.msra.mxu0 %v567
  %757 = vmatpush.bf16.msra.mxu0 %v566
  %758 = vmatpush.bf16.msra.mxu0 %v565
  %759 = vmatmul.bf16.gmra.mxu0 %v210
  %v760 = vpop.f32.mrf.mxu0
  %v761 = vadd.f32 %v747, %v760
  %v762 = vpop.f32.mrf.mxu0
  %v763 = vadd.f32 %v749, %v762
  %764 = vdwg.mxu0
  %765 = vmatpush.bf16.msra.mxu0 %v580
  %766 = vmatpush.bf16.msra.mxu0 %v579
  %767 = vmatpush.bf16.msra.mxu0 %v578
  %768 = vmatpush.bf16.msra.mxu0 %v577
  %769 = vmatpush.bf16.msra.mxu0 %v576
  %770 = vmatpush.bf16.msra.mxu0 %v575
  %771 = vmatpush.bf16.msra.mxu0 %v574
  %772 = vmatpush.bf16.msra.mxu0 %v573
  %773 = vmatmul.bf16.gmra.mxu0 %v211
  %v774 = vpop.f32.mrf.mxu0
  %v775 = vadd.f32 %v761, %v774
  %v776 = vpop.f32.mrf.mxu0
  %v777 = vadd.f32 %v763, %v776
  %778 = vdwg.mxu0
  %v779 = vpack.c.bf16 %v775, %v775
  %v780 = vpack.c.bf16 %v777, %v777
  %781 = vst [vmem:[%s3] sm:$0xf] %v779
  %782 = vst [vmem:[%s3 + $0x4] sm:$0xf] %v780
  %p783 = scmp.lt.s32.totalorder 0, 0
  // Predicated region
  $region14: #{_lambda_.16} parent=0 // pred_check
    %p784 = pneg %p783
  $region15: #{_lambda_.16} parent=0 // pred_check_branch
    %786 = sbr.rel (%p784) target = $region17
  $region16: #{_lambda_.16} parent=0 // pred_region
    %v787 = vadd.f32 %v775, %v777
    %v788 = vrot.slane %v787, 4
    %v789 = vadd.f32 %v787, %v788
    %v790 = vrot.slane %v789, 2
    %v791 = vadd.f32 %v789, %v790
    %v792 = vrot.slane %v791, 1
    %v793 = vadd.f32 %v791, %v792
    %794 = vst [vmem:[%s4] sm:$0x1] %v793
    %v795 = vmul.f32 %v775, %v775
    %v796 = vmul.f32 %v777, %v777
    %v797 = vadd.f32 %v795, %v796
    %v798 = vrot.slane %v797, 4
    %v799 = vadd.f32 %v797, %v798
    %v800 = vrot.slane %v799, 2
    %v801 = vadd.f32 %v799, %v800
    %v802 = vrot.slane %v801, 1
    %v803 = vadd.f32 %v801, %v802
    %804 = vst [vmem:[%s5] sm:$0x1] %v803
  $region17: #{_lambda_.16} parent=0 // pred_fallthru
    _
  %p805 = scmp.eq.s32.totalorder 0, 0
  // Predicated region
  $region18: #{_lambda_.16} parent=0 // pred_check
    %p806 = pneg %p805
  $region19: #{_lambda_.16} parent=0 // pred_check_branch
    %808 = sbr.rel (%p806) target = $region21
  $region20: #{_lambda_.16} parent=0 // pred_region
    %s809 = smul.u32 0, 16
    %v810 = vlaneseq
    %v811 = vshrl.u32 %v810, 7
    %v812 = vadd.s32 %v811, 8
    %v813 = vstv %s809
    %v814 = vadd.s32 %v813, %v811
    %v815 = vadd.s32 %v813, %v812
    %vm816 = vcmp.lt.s32.totalorder %v814, 2
    %vm817 = vcmp.lt.s32.totalorder %v815, 2
    %v818 = vsel %vm816, %v775, 0.0
    %v819 = vsel %vm817, %v777, 0.0
    %v820 = vadd.f32 %v818, %v819
    %v821 = vrot.slane %v820, 4
    %v822 = vadd.f32 %v820, %v821
    %v823 = vrot.slane %v822, 2
    %v824 = vadd.f32 %v822, %v823
    %v825 = vrot.slane %v824, 1
    %v826 = vadd.f32 %v824, %v825
    %827 = vst [vmem:[%s4] sm:$0x1] %v826
    %v828 = vmul.f32 %v818, %v818
    %v829 = vmul.f32 %v819, %v819
    %v830 = vadd.f32 %v828, %v829
    %v831 = vrot.slane %v830, 4
    %v832 = vadd.f32 %v830, %v831
    %v833 = vrot.slane %v832, 2
    %v834 = vadd.f32 %v832, %v833
    %v835 = vrot.slane %v834, 1
    %v836 = vadd.f32 %v834, %v835
    %837 = vst [vmem:[%s5] sm:$0x1] %v836
  $region21: #{_lambda_.16} parent=0 // pred_fallthru
    _
  // Predicated region
  $region22: #{_lambda_.16} parent=0 // pred_check
    _
  $region23: #{_lambda_.16} parent=0 // pred_check_branch
    %839 = sbr.rel (0) target = $region25
  $region24: #{_lambda_.16} parent=0 // pred_region
    _
  $region25: #{_lambda_.16} parent=0 // pred_fallthru
    _
  // Predicated region
  $region26: #{_lambda_.16} parent=0 // pred_check
    _
  $region27: #{_lambda_.16} parent=0 // pred_check_branch
    %841 = sbr.rel (0) target = $region29
  $region28: #{_lambda_.16} parent=0 // pred_region
    _
  $region29: #{_lambda_.16} parent=0 // pred_fallthru
    _
  // Predicated region
  $region30: #{_lambda_.16} parent=0 // pred_check
    _
  $region31: #{_lambda_.16} parent=0 // pred_check_branch
    %843 = sbr.rel (0) target = $region33
  $region32: #{_lambda_.16} parent=0 // pred_region
    _
  $region33: #{_lambda_.16} parent=0 // pred_fallthru
    _
  // Predicated region
  $region34: #{_lambda_.16} parent=0 // pred_check
    _
  $region35: #{_lambda_.16} parent=0 // pred_check_branch
    %845 = sbr.rel (0) target = $region37
  $region36: #{_lambda_.16} parent=0 // pred_region
    _
  $region37: #{_lambda_.16} parent=0 // pred_fallthru
    _
  // Predicated region
  $region38: #{_lambda_.16} parent=0 // pred_check
    _
  $region39: #{_lambda_.16} parent=0 // pred_check_branch
    %847 = sbr.rel (0) target = $region41
  $region40: #{_lambda_.16} parent=0 // pred_region
    _
  $region41: #{_lambda_.16} parent=0 // pred_fallthru
    _
  // Predicated region
  $region42: #{_lambda_.16} parent=0 // pred_check
    _
  $region43: #{_lambda_.16} parent=0 // pred_check_branch
    %849 = sbr.rel (0) target = $region45
  $region44: #{_lambda_.16} parent=0 // pred_region
    _
  $region45: #{_lambda_.16} parent=0 // pred_fallthru
    _

</llo_original>
